<compile_context>
chip_gen: v5e
topology: v5e:2x2
jax: 0.10.0
libtpu: 0.0.40
codegen_flags: <defaults>
</compile_context>

<pallas_src>
import math

import jax
import jax.numpy as jnp
from jax.experimental import pallas as pl
from jax.experimental.pallas import tpu as pltpu


def _jca_kernel(f_ref, fv_ref, fa_ref,
                wja_ref, bja_ref, wjv_ref, bjv_ref,
                wa_ref, wca_ref, bac_ref,
                wv_ref, wcv_ref, bvc_ref,
                wha_ref, bha_ref, whv_ref, bhv_ref,
                out_ref):
    f32 = jnp.float32
    cd = wja_ref.dtype                      # MXU compute dtype (f32 or bf16)
    T, BB, Df = f_ref.shape
    Dv = fv_ref.shape[2]
    Da = fa_ref.shape[2]

    # f: one lane-aware relayout [T, BB, Df] -> [BB, T, Df], shared by both
    # branches as the batched-bilinear RHS.  Cast to the MXU dtype once.
    f_btf = pltpu.einshape("tbf->btf", f_ref[...]).astype(cd)

    def branch(x_ref, d, wj_ref, bj_ref, wx_ref, wcx_ref, bxc_ref,
               wh_ref, bh_ref, out_off):
        # ONE relayout per input: [T, BB, d] -> [BB, d, T] -> rows [BB*d, T].
        # Keep the f32 copy for the residual; cast to the MXU dtype for GEMMs.
        x_rows_f32 = pltpu.einshape("tbd->bdt", x_ref[...]).reshape(BB * d, T)
        x_rows = x_rows_f32.astype(cd)

        # j(x): one big [BB*d, T] @ [T, T] matmul (norm_fact / bias pre-folded).
        j = (jnp.dot(x_rows, wj_ref[...], preferred_element_type=f32)
             + bj_ref[...]).astype(cd)                               # [BB*d, T]

        # Bilinear with f as a single batched contraction; the result stays a
        # value (no VMEM scratch round-trip).  tanh in f32.
        c = jnp.tanh(
            jnp.einsum("bdt,btf->bdf", j.reshape(BB, d, T), f_btf,
                       preferred_element_type=f32)
        ).reshape(BB * d, Df).astype(cd)                             # [BB*d, Df]

        # h = relu(x @ Wx + c @ Wc + (bx + bc)) -- two big 2-D matmuls.
        h = jnp.maximum(
            jnp.dot(x_rows, wx_ref[...], preferred_element_type=f32)
            + jnp.dot(c, wcx_ref[...], preferred_element_type=f32)
            + bxc_ref[...], 0.0).astype(cd)                          # [BB*d, hid]

        # Residual on the full-precision (f32) input copy.
        o_rows = (x_rows_f32
                  + jnp.dot(h, wh_ref[...], preferred_element_type=f32)
                  + bh_ref[...])                                     # [BB*d, T]

        # ONE relayout + ONE store for the whole branch slice (full T x BB
        # extent, lane-dense across d -- no per-batch masked stores).
        o_tbd = pltpu.einshape("bdt->tbd", o_rows.reshape(BB, d, T))
        out_ref[:, :, out_off:out_off + d] = o_tbd.astype(out_ref.dtype)

    # v branch first and written back immediately: its result is never live
    # across the a-branch matmuls (bounds vreg pressure) and its writeback can
    # overlap the a-branch MXU work.
    branch(fv_ref, Dv, wjv_ref, bjv_ref, wv_ref, wcv_ref, bvc_ref,
           whv_ref, bhv_ref, 0)
    branch(fa_ref, Da, wja_ref, bja_ref, wa_ref, wca_ref, bac_ref,
           wha_ref, bha_ref, Dv)


def _pick_block_b(B, Da, Dv):
    """Batch block size: must divide B and be B itself or a multiple of 8
    (TPU (8,128) rule on the second-to-last dim of native [T, B, D] blocks).
    Target BB*min(Da,Dv) >= 128 rows per GEMM (saturates the MXU M dim on
    v5e and keeps DMA segments >= 512 B) while preferring >=2 grid steps."""
    if B % 8 != 0:
        return B                                   # tiny / odd batch: one step
    candidates = [d for d in range(8, B, 8) if B % d == 0]   # proper divisors
    if not candidates:
        return B
    rows = max(1, min(Da, Dv))
    for d in candidates:
        if d * rows >= 128:
            return d
    return candidates[-1]


def _vmem_cap_bytes():
    """VMEM cap with ~20% headroom below physical (never the whole 64 MiB of a
    v7x TensorCore); generous fallback when the query is unavailable."""
    try:
        return int(pltpu.get_tpu_info().vmem_capacity_bytes * 0.8)
    except Exception:
        return 48 * 2 ** 20


def _prep_weights(params, Df, compute_dtype):
    """Host-side weight prep: transpose to [in, out], fold norm_fact into the
    ja/jv linears, fold the paired biases.  Biases stay f32 (post-matmul adds)."""
    cd = compute_dtype
    f32 = jnp.float32
    norm = 1.0 / math.sqrt(Df)

    def row(b):
        return jnp.asarray(b, f32).reshape(1, -1)

    def mat(w):
        return jnp.asarray(w, f32).T.astype(cd)

    return [
        (norm * jnp.asarray(params["W_ja"], f32)).T.astype(cd), norm * row(params["b_ja"]),
        (norm * jnp.asarray(params["W_jv"], f32)).T.astype(cd), norm * row(params["b_jv"]),
        mat(params["W_a"]), mat(params["W_ca"]),
        row(params["b_a"]) + row(params["b_ca"]),
        mat(params["W_v"]), mat(params["W_cv"]),
        row(params["b_v"]) + row(params["b_cv"]),
        mat(params["W_ha"]), row(params["b_ha"]),
        mat(params["W_hv"]), row(params["b_hv"]),
    ]


def joint_cross_attention(f, f_v, f_a, params, *, block_b=None,
                          compute_dtype=jnp.float32):
    """Pallas implementation of JointCrossAttention.forward.

    f: [T, B, Df], f_v: [T, B, Dv], f_a: [T, B, Da]  ->  [T, B, Dv + Da]

    compute_dtype=jnp.bfloat16 runs the MXU matmul operands in bf16 (f32
    accumulation, f32 tanh/relu/residual); recommended on v5e, v6e and v7x.
    Inputs are kept in f32 in HBM and cast in-kernel, so the residual add
    always uses the full-precision input.
    """
    T, B, Df = f.shape
    Dv = f_v.shape[2]
    Da = f_a.shape[2]
    hid = params["W_a"].shape[0]
    cd = compute_dtype

    BB = block_b if block_b is not None else _pick_block_b(B, Da, Dv)
    if B % BB != 0 or (BB != B and BB % 8 != 0):
        raise ValueError(f"block_b={BB} must divide B={B} and be B or a multiple of 8")

    weights = _prep_weights(params, Df, cd)

    grid = (B // BB,)

    def act_spec(D):
        return pl.BlockSpec((T, BB, D), lambda i: (0, i, 0))

    def w_spec(w):
        # Constant index_map: the weight block never changes across the grid,
        # so it is only DMA'd into VMEM once.  (Single-buffering the constant
        # weights would halve their VMEM footprint on v7x; left at the default
        # for portability since they are small.)
        return pl.BlockSpec(w.shape, lambda i: (0, 0))

    in_specs = [act_spec(Df), act_spec(Dv), act_spec(Da)] + [w_spec(w) for w in weights]
    out_specs = pl.BlockSpec((T, BB, Dv + Da), lambda i: (0, i, 0))

    # Explicit scoped-VMEM budget (heuristic, 2x safety factor, capped below
    # physical VMEM with headroom).
    isz = jnp.dtype(cd).itemsize
    wbytes = sum(math.prod(w.shape) * jnp.dtype(w.dtype).itemsize for w in weights)
    rows = BB * (Dv + Da)
    est = (2 * T * BB * (Df + Dv + Da) * 4          # double-buffered f32 inputs
           + 2 * T * BB * (Dv + Da) * 4             # double-buffered f32 output
           + 2 * wbytes                             # double-buffered weights
           + BB * T * Df * (4 + isz)                # f tile + batch-major copy
           + rows * (2 * T + Df + hid) * 4          # live f32 values (x, o, c, h)
           + rows * (T + Df + hid) * isz)           # live compute-dtype values
    vmem_limit = int(min(max(2 * est, 32 * 2 ** 20), _vmem_cap_bytes()))

    # TODO(synk): on v7x, when B is too small to split (grid == 1), a second
    # parallel grid axis over the independent {v, a} branches would feed the
    # second TensorCore; not implemented here (branch weights differ in shape).
    out = pl.pallas_call(
        _jca_kernel,
        out_shape=jax.ShapeDtypeStruct((T, B, Dv + Da), jnp.float32),
        grid=grid,
        in_specs=in_specs,
        out_specs=out_specs,
        compiler_params=pltpu.CompilerParams(
            dimension_semantics=("parallel",),
            vmem_limit_bytes=vmem_limit,
        ),
    )(jnp.asarray(f, jnp.float32), jnp.asarray(f_v, jnp.float32),
      jnp.asarray(f_a, jnp.float32), *weights)
    return out


def joint_cross_attention_ref(f, f_v, f_a, params):
    """Pure-JAX reference mirroring the PyTorch forward exactly."""
    Df = f.shape[2]
    norm_fact = 1.0 / math.sqrt(Df)

    def lin(x, W, b):
        return jnp.matmul(x, W.T) + b

    f_p = jnp.transpose(f, (1, 0, 2))      # [B, T, Df]
    fa_p = jnp.transpose(f_a, (1, 2, 0))   # [B, Da, T]
    fv_p = jnp.transpose(f_v, (1, 2, 0))   # [B, Dv, T]

    c_a = jnp.tanh(jnp.matmul(lin(fa_p, params["W_ja"], params["b_ja"]), f_p) * norm_fact)
    c_v = jnp.tanh(jnp.matmul(lin(fv_p, params["W_jv"], params["b_jv"]), f_p) * norm_fact)

    h_a = jax.nn.relu(lin(fa_p, params["W_a"], params["b_a"])
                      + lin(c_a, params["W_ca"], params["b_ca"]))
    h_v = jax.nn.relu(lin(fv_p, params["W_v"], params["b_v"])
                      + lin(c_v, params["W_cv"], params["b_cv"]))

    o_a = f_a + jnp.transpose(lin(h_a, params["W_ha"], params["b_ha"]), (2, 0, 1))
    o_v = f_v + jnp.transpose(lin(h_v, params["W_hv"], params["b_hv"]), (2, 0, 1))
    return jnp.concatenate([o_v, o_a], axis=2)


def init_params(key, T, Df, hid_dim):
    """Deterministic PyTorch-Linear-style init: U(-1/sqrt(fan_in), 1/sqrt(fan_in))."""
    def linear(k, out_dim, in_dim):
        kw, kb = jax.random.split(k)
        bound = 1.0 / math.sqrt(in_dim)
        W = jax.random.uniform(kw, (out_dim, in_dim), jnp.float32, -bound, bound)
        b = jax.random.uniform(kb, (out_dim,), jnp.float32, -bound, bound)
        return W, b

    keys = jax.random.split(key, 8)
    p = {}
    p["W_ja"], p["b_ja"] = linear(keys[0], T, T)
    p["W_jv"], p["b_jv"] = linear(keys[1], T, T)
    p["W_ca"], p["b_ca"] = linear(keys[2], hid_dim, Df)
    p["W_a"], p["b_a"] = linear(keys[3], hid_dim, T)
    p["W_cv"], p["b_cv"] = linear(keys[4], hid_dim, Df)
    p["W_v"], p["b_v"] = linear(keys[5], hid_dim, T)
    p["W_ha"], p["b_ha"] = linear(keys[6], T, hid_dim)
    p["W_hv"], p["b_hv"] = linear(keys[7], T, hid_dim)
    return p


if __name__ == "__main__":
    # Small shapes consistent with the forward: f:[T,B,Df], f_v:[T,B,Dv], f_a:[T,B,Da]
    T, B, Df, Dv, Da, hid = 8, 2, 16, 16, 16, 32

    key = jax.random.PRNGKey(0)
    kf, kv, ka, kp = jax.random.split(key, 4)
    f = jax.random.normal(kf, (T, B, Df), jnp.float32)
    f_v = jax.random.normal(kv, (T, B, Dv), jnp.float32)
    f_a = jax.random.normal(ka, (T, B, Da), jnp.float32)
    params = init_params(kp, T, Df, hid)

    ref = joint_cross_attention_ref(f, f_v, f_a, params)

    # 1) f32 path: exact parity with the PyTorch module.
    out = jax.block_until_ready(joint_cross_attention(f, f_v, f_a, params))
    assert out.shape == (T, B, Dv + Da), out.shape
    assert jnp.allclose(out, ref, rtol=1e-4, atol=1e-4), "f32 kernel mismatch vs reference"

    # 2) bf16-MXU path (matmul operands bf16, f32 accumulation / activations /
    #    residual) -> loose check only.
    out_bf16 = jax.block_until_ready(
        joint_cross_attention(f, f_v, f_a, params, compute_dtype=jnp.bfloat16))
    assert out_bf16.shape == (T, B, Dv + Da)
    assert bool(jnp.all(jnp.isfinite(out_bf16)))
    assert float(jnp.max(jnp.abs(out_bf16 - ref))) < 1.0, "bf16 kernel diverged"

    # 3) Larger batch: exercises the batch-blocked, multi-step grid path
    #    (BB=8 -> 128-row GEMMs, grid of 2 parallel steps).
    B2 = 16
    kf2, kv2, ka2 = jax.random.split(jax.random.PRNGKey(1), 3)
    f2 = jax.random.normal(kf2, (T, B2, Df), jnp.float32)
    fv2 = jax.random.normal(kv2, (T, B2, Dv), jnp.float32)
    fa2 = jax.random.normal(ka2, (T, B2, Da), jnp.float32)
    out2 = jax.block_until_ready(joint_cross_attention(f2, fv2, fa2, params))
    ref2 = joint_cross_attention_ref(f2, fv2, fa2, params)
    assert jnp.allclose(out2, ref2, rtol=1e-4, atol=1e-4), "batch-blocked kernel mismatch"

    print("KERNEL_OK")
</pallas_src>

<mosaic_0001>
module attributes {stable_mosaic.version = 11 : i64} {
  func.func @_jca_kernel(%arg0: i32, %arg1: memref<8x2x16xf32, #tpu.memory_space<vmem>>, %arg2: memref<8x2x16xf32, #tpu.memory_space<vmem>>, %arg3: memref<8x2x16xf32, #tpu.memory_space<vmem>>, %arg4: memref<8x8xf32, #tpu.memory_space<vmem>>, %arg5: memref<1x8xf32, #tpu.memory_space<vmem>>, %arg6: memref<8x8xf32, #tpu.memory_space<vmem>>, %arg7: memref<1x8xf32, #tpu.memory_space<vmem>>, %arg8: memref<8x32xf32, #tpu.memory_space<vmem>>, %arg9: memref<16x32xf32, #tpu.memory_space<vmem>>, %arg10: memref<1x32xf32, #tpu.memory_space<vmem>>, %arg11: memref<8x32xf32, #tpu.memory_space<vmem>>, %arg12: memref<16x32xf32, #tpu.memory_space<vmem>>, %arg13: memref<1x32xf32, #tpu.memory_space<vmem>>, %arg14: memref<32x8xf32, #tpu.memory_space<vmem>>, %arg15: memref<1x8xf32, #tpu.memory_space<vmem>>, %arg16: memref<32x8xf32, #tpu.memory_space<vmem>>, %arg17: memref<1x8xf32, #tpu.memory_space<vmem>>, %arg18: memref<8x2x32xf32, #tpu.memory_space<vmem>>) attributes {dimension_semantics = [#tpu.dimension_semantics<parallel>], iteration_bounds = array<i64: 1>, scalar_prefetch = 0 : i64, scratch_operands = 0 : i64, tpu.core_type = #tpu.core_type<tc>, window_params = [{transform_indices = @transform_0, window_bounds = array<i64: 8, 2, 16>}, {transform_indices = @transform_1, window_bounds = array<i64: 8, 2, 16>}, {transform_indices = @transform_2, window_bounds = array<i64: 8, 2, 16>}, {pipeline_mode = #tpu.pipeline_mode<synchronous>, transform_indices = @transform_3, window_bounds = array<i64: 8, 8>}, {pipeline_mode = #tpu.pipeline_mode<synchronous>, transform_indices = @transform_4, window_bounds = array<i64: 1, 8>}, {pipeline_mode = #tpu.pipeline_mode<synchronous>, transform_indices = @transform_5, window_bounds = array<i64: 8, 8>}, {pipeline_mode = #tpu.pipeline_mode<synchronous>, transform_indices = @transform_6, window_bounds = array<i64: 1, 8>}, {pipeline_mode = #tpu.pipeline_mode<synchronous>, transform_indices = @transform_7, window_bounds = array<i64: 8, 32>}, {pipeline_mode = #tpu.pipeline_mode<synchronous>, transform_indices = @transform_8, window_bounds = array<i64: 16, 32>}, {pipeline_mode = #tpu.pipeline_mode<synchronous>, transform_indices = @transform_9, window_bounds = array<i64: 1, 32>}, {pipeline_mode = #tpu.pipeline_mode<synchronous>, transform_indices = @transform_10, window_bounds = array<i64: 8, 32>}, {pipeline_mode = #tpu.pipeline_mode<synchronous>, transform_indices = @transform_11, window_bounds = array<i64: 16, 32>}, {pipeline_mode = #tpu.pipeline_mode<synchronous>, transform_indices = @transform_12, window_bounds = array<i64: 1, 32>}, {pipeline_mode = #tpu.pipeline_mode<synchronous>, transform_indices = @transform_13, window_bounds = array<i64: 32, 8>}, {pipeline_mode = #tpu.pipeline_mode<synchronous>, transform_indices = @transform_14, window_bounds = array<i64: 1, 8>}, {pipeline_mode = #tpu.pipeline_mode<synchronous>, transform_indices = @transform_15, window_bounds = array<i64: 32, 8>}, {pipeline_mode = #tpu.pipeline_mode<synchronous>, transform_indices = @transform_16, window_bounds = array<i64: 1, 8>}, {transform_indices = @transform_17, window_bounds = array<i64: 8, 2, 32>}]} {
    %c0 = arith.constant 0 : index
    %c0_0 = arith.constant 0 : index
    %c0_1 = arith.constant 0 : index
    %0 = vector.load %arg1[%c0, %c0_0, %c0_1] : memref<8x2x16xf32, #tpu.memory_space<vmem>>, vector<8x2x16xf32>
    %1 = tpu.transpose %0, [1, 0, 2] : vector<8x2x16xf32> -> vector<2x8x16xf32>
    %c0_2 = arith.constant 0 : index
    %c0_3 = arith.constant 0 : index
    %c0_4 = arith.constant 0 : index
    %2 = vector.load %arg2[%c0_2, %c0_3, %c0_4] : memref<8x2x16xf32, #tpu.memory_space<vmem>>, vector<8x2x16xf32>
    %3 = tpu.transpose %2, [1, 2, 0] : vector<8x2x16xf32> -> vector<2x16x8xf32>
    %4 = vector.shape_cast %3 : vector<2x16x8xf32> to vector<32x8xf32>
    %c0_5 = arith.constant 0 : index
    %c0_6 = arith.constant 0 : index
    %5 = vector.load %arg6[%c0_5, %c0_6] : memref<8x8xf32, #tpu.memory_space<vmem>>, vector<8x8xf32>
    %cst = arith.constant dense<0.000000e+00> : vector<32x8xf32>
    %6 = tpu.matmul %4, %5, %cst {dimension_numbers = #tpu.dot_dimension_numbers<[1], [0], [0], [1], [0, 0, 1, 1], [], []>} : vector<32x8xf32>, vector<8x8xf32>, vector<32x8xf32> -> vector<32x8xf32>
    %c0_7 = arith.constant 0 : index
    %c0_8 = arith.constant 0 : index
    %7 = vector.load %arg7[%c0_7, %c0_8] : memref<1x8xf32, #tpu.memory_space<vmem>>, vector<1x8xf32>
    %8 = vector.broadcast %7 : vector<1x8xf32> to vector<32x8xf32>
    %9 = arith.addf %6, %8 : vector<32x8xf32>
    %10 = vector.shape_cast %9 : vector<32x8xf32> to vector<2x16x8xf32>
    "tpu.trace_start"() <{level = 10 : i32, message = "bdt,btf->bdf"}> : () -> ()
    %cst_9 = arith.constant dense<0.000000e+00> : vector<2x16x16xf32>
    %11 = tpu.matmul %10, %1, %cst_9 {dimension_numbers = #tpu.dot_dimension_numbers<[2], [1], [1], [2], [0, 0, 0, 1, 1, 2], [0], [0]>} : vector<2x16x8xf32>, vector<2x8x16xf32>, vector<2x16x16xf32> -> vector<2x16x16xf32>
    "tpu.trace_stop"() : () -> ()
    %12 = math.tanh %11 : vector<2x16x16xf32>
    %13 = vector.shape_cast %12 : vector<2x16x16xf32> to vector<32x16xf32>
    %c0_10 = arith.constant 0 : index
    %c0_11 = arith.constant 0 : index
    %14 = vector.load %arg11[%c0_10, %c0_11] : memref<8x32xf32, #tpu.memory_space<vmem>>, vector<8x32xf32>
    %cst_12 = arith.constant dense<0.000000e+00> : vector<32x32xf32>
    %15 = tpu.matmul %4, %14, %cst_12 {dimension_numbers = #tpu.dot_dimension_numbers<[1], [0], [0], [1], [0, 0, 1, 1], [], []>} : vector<32x8xf32>, vector<8x32xf32>, vector<32x32xf32> -> vector<32x32xf32>
    %c0_13 = arith.constant 0 : index
    %c0_14 = arith.constant 0 : index
    %16 = vector.load %arg12[%c0_13, %c0_14] : memref<16x32xf32, #tpu.memory_space<vmem>>, vector<16x32xf32>
    %cst_15 = arith.constant dense<0.000000e+00> : vector<32x32xf32>
    %17 = tpu.matmul %13, %16, %cst_15 {dimension_numbers = #tpu.dot_dimension_numbers<[1], [0], [0], [1], [0, 0, 1, 1], [], []>} : vector<32x16xf32>, vector<16x32xf32>, vector<32x32xf32> -> vector<32x32xf32>
    %18 = arith.addf %15, %17 : vector<32x32xf32>
    %c0_16 = arith.constant 0 : index
    %c0_17 = arith.constant 0 : index
    %19 = vector.load %arg13[%c0_16, %c0_17] : memref<1x32xf32, #tpu.memory_space<vmem>>, vector<1x32xf32>
    %20 = vector.broadcast %19 : vector<1x32xf32> to vector<32x32xf32>
    %21 = arith.addf %18, %20 : vector<32x32xf32>
    %cst_18 = arith.constant 0.000000e+00 : f32
    %22 = vector.broadcast %cst_18 : f32 to vector<32x32xf32>
    %23 = arith.maximumf %21, %22 : vector<32x32xf32>
    %c0_19 = arith.constant 0 : index
    %c0_20 = arith.constant 0 : index
    %24 = vector.load %arg16[%c0_19, %c0_20] : memref<32x8xf32, #tpu.memory_space<vmem>>, vector<32x8xf32>
    %cst_21 = arith.constant dense<0.000000e+00> : vector<32x8xf32>
    %25 = tpu.matmul %23, %24, %cst_21 {dimension_numbers = #tpu.dot_dimension_numbers<[1], [0], [0], [1], [0, 0, 1, 1], [], []>} : vector<32x32xf32>, vector<32x8xf32>, vector<32x8xf32> -> vector<32x8xf32>
    %26 = arith.addf %4, %25 : vector<32x8xf32>
    %c0_22 = arith.constant 0 : index
    %c0_23 = arith.constant 0 : index
    %27 = vector.load %arg17[%c0_22, %c0_23] : memref<1x8xf32, #tpu.memory_space<vmem>>, vector<1x8xf32>
    %28 = vector.broadcast %27 : vector<1x8xf32> to vector<32x8xf32>
    %29 = arith.addf %26, %28 : vector<32x8xf32>
    %30 = vector.shape_cast %29 : vector<32x8xf32> to vector<2x16x8xf32>
    %31 = tpu.transpose %30, [2, 0, 1] : vector<2x16x8xf32> -> vector<8x2x16xf32>
    %c0_24 = arith.constant 0 : index
    %c0_25 = arith.constant 0 : index
    %c0_26 = arith.constant 0 : index
    %32 = vector.load %arg18[%c0_24, %c0_25, %c0_26] : memref<8x2x32xf32, #tpu.memory_space<vmem>>, vector<8x2x16xf32>
    tpu.vector_store %arg18[%c0_24, %c0_25, %c0_26], %31 {strides = array<i32>} : memref<8x2x32xf32, #tpu.memory_space<vmem>>, vector<8x2x16xf32>,
    %c0_27 = arith.constant 0 : index
    %c0_28 = arith.constant 0 : index
    %c0_29 = arith.constant 0 : index
    %33 = vector.load %arg3[%c0_27, %c0_28, %c0_29] : memref<8x2x16xf32, #tpu.memory_space<vmem>>, vector<8x2x16xf32>
    %34 = tpu.transpose %33, [1, 2, 0] : vector<8x2x16xf32> -> vector<2x16x8xf32>
    %35 = vector.shape_cast %34 : vector<2x16x8xf32> to vector<32x8xf32>
    %c0_30 = arith.constant 0 : index
    %c0_31 = arith.constant 0 : index
    %36 = vector.load %arg4[%c0_30, %c0_31] : memref<8x8xf32, #tpu.memory_space<vmem>>, vector<8x8xf32>
    %cst_32 = arith.constant dense<0.000000e+00> : vector<32x8xf32>
    %37 = tpu.matmul %35, %36, %cst_32 {dimension_numbers = #tpu.dot_dimension_numbers<[1], [0], [0], [1], [0, 0, 1, 1], [], []>} : vector<32x8xf32>, vector<8x8xf32>, vector<32x8xf32> -> vector<32x8xf32>
    %c0_33 = arith.constant 0 : index
    %c0_34 = arith.constant 0 : index
    %38 = vector.load %arg5[%c0_33, %c0_34] : memref<1x8xf32, #tpu.memory_space<vmem>>, vector<1x8xf32>
    %39 = vector.broadcast %38 : vector<1x8xf32> to vector<32x8xf32>
    %40 = arith.addf %37, %39 : vector<32x8xf32>
    %41 = vector.shape_cast %40 : vector<32x8xf32> to vector<2x16x8xf32>
    "tpu.trace_start"() <{level = 10 : i32, message = "bdt,btf->bdf"}> : () -> ()
    %cst_35 = arith.constant dense<0.000000e+00> : vector<2x16x16xf32>
    %42 = tpu.matmul %41, %1, %cst_35 {dimension_numbers = #tpu.dot_dimension_numbers<[2], [1], [1], [2], [0, 0, 0, 1, 1, 2], [0], [0]>} : vector<2x16x8xf32>, vector<2x8x16xf32>, vector<2x16x16xf32> -> vector<2x16x16xf32>
    "tpu.trace_stop"() : () -> ()
    %43 = math.tanh %42 : vector<2x16x16xf32>
    %44 = vector.shape_cast %43 : vector<2x16x16xf32> to vector<32x16xf32>
    %c0_36 = arith.constant 0 : index
    %c0_37 = arith.constant 0 : index
    %45 = vector.load %arg8[%c0_36, %c0_37] : memref<8x32xf32, #tpu.memory_space<vmem>>, vector<8x32xf32>
    %cst_38 = arith.constant dense<0.000000e+00> : vector<32x32xf32>
    %46 = tpu.matmul %35, %45, %cst_38 {dimension_numbers = #tpu.dot_dimension_numbers<[1], [0], [0], [1], [0, 0, 1, 1], [], []>} : vector<32x8xf32>, vector<8x32xf32>, vector<32x32xf32> -> vector<32x32xf32>
    %c0_39 = arith.constant 0 : index
    %c0_40 = arith.constant 0 : index
    %47 = vector.load %arg9[%c0_39, %c0_40] : memref<16x32xf32, #tpu.memory_space<vmem>>, vector<16x32xf32>
    %cst_41 = arith.constant dense<0.000000e+00> : vector<32x32xf32>
    %48 = tpu.matmul %44, %47, %cst_41 {dimension_numbers = #tpu.dot_dimension_numbers<[1], [0], [0], [1], [0, 0, 1, 1], [], []>} : vector<32x16xf32>, vector<16x32xf32>, vector<32x32xf32> -> vector<32x32xf32>
    %49 = arith.addf %46, %48 : vector<32x32xf32>
    %c0_42 = arith.constant 0 : index
    %c0_43 = arith.constant 0 : index
    %50 = vector.load %arg10[%c0_42, %c0_43] : memref<1x32xf32, #tpu.memory_space<vmem>>, vector<1x32xf32>
    %51 = vector.broadcast %50 : vector<1x32xf32> to vector<32x32xf32>
    %52 = arith.addf %49, %51 : vector<32x32xf32>
    %cst_44 = arith.constant 0.000000e+00 : f32
    %53 = vector.broadcast %cst_44 : f32 to vector<32x32xf32>
    %54 = arith.maximumf %52, %53 : vector<32x32xf32>
    %c0_45 = arith.constant 0 : index
    %c0_46 = arith.constant 0 : index
    %55 = vector.load %arg14[%c0_45, %c0_46] : memref<32x8xf32, #tpu.memory_space<vmem>>, vector<32x8xf32>
    %cst_47 = arith.constant dense<0.000000e+00> : vector<32x8xf32>
    %56 = tpu.matmul %54, %55, %cst_47 {dimension_numbers = #tpu.dot_dimension_numbers<[1], [0], [0], [1], [0, 0, 1, 1], [], []>} : vector<32x32xf32>, vector<32x8xf32>, vector<32x8xf32> -> vector<32x8xf32>
    %57 = arith.addf %35, %56 : vector<32x8xf32>
    %c0_48 = arith.constant 0 : index
    %c0_49 = arith.constant 0 : index
    %58 = vector.load %arg15[%c0_48, %c0_49] : memref<1x8xf32, #tpu.memory_space<vmem>>, vector<1x8xf32>
    %59 = vector.broadcast %58 : vector<1x8xf32> to vector<32x8xf32>
    %60 = arith.addf %57, %59 : vector<32x8xf32>
    %61 = vector.shape_cast %60 : vector<32x8xf32> to vector<2x16x8xf32>
    %62 = tpu.transpose %61, [2, 0, 1] : vector<2x16x8xf32> -> vector<8x2x16xf32>
    %c0_50 = arith.constant 0 : index
    %c0_51 = arith.constant 0 : index
    %c16 = arith.constant 16 : index
    %63 = vector.load %arg18[%c0_50, %c0_51, %c16] : memref<8x2x32xf32, #tpu.memory_space<vmem>>, vector<8x2x16xf32>
    tpu.vector_store %arg18[%c0_50, %c0_51, %c16], %62 {strides = array<i32>} : memref<8x2x32xf32, #tpu.memory_space<vmem>>, vector<8x2x16xf32>,
    return
  }
  func.func @transform_0(%arg0: i32) -> (i32, i32, i32) {
    %c0_i32 = arith.constant 0 : i32
    %c0_i32_0 = arith.constant 0 : i32
    %c0_i32_1 = arith.constant 0 : i32
    return %c0_i32, %arg0, %c0_i32_0 : i32, i32, i32
  }
  func.func @transform_1(%arg0: i32) -> (i32, i32, i32) {
    %c0_i32 = arith.constant 0 : i32
    %c0_i32_0 = arith.constant 0 : i32
    %c0_i32_1 = arith.constant 0 : i32
    return %c0_i32, %arg0, %c0_i32_0 : i32, i32, i32
  }
  func.func @transform_2(%arg0: i32) -> (i32, i32, i32) {
    %c0_i32 = arith.constant 0 : i32
    %c0_i32_0 = arith.constant 0 : i32
    %c0_i32_1 = arith.constant 0 : i32
    return %c0_i32, %arg0, %c0_i32_0 : i32, i32, i32
  }
  func.func @transform_3(%arg0: i32) -> (i32, i32) {
    %c0_i32 = arith.constant 0 : i32
    %c0_i32_0 = arith.constant 0 : i32
    %c0_i32_1 = arith.constant 0 : i32
    return %c0_i32, %c0_i32_0 : i32, i32
  }
  func.func @transform_4(%arg0: i32) -> (i32, i32) {
    %c0_i32 = arith.constant 0 : i32
    %c0_i32_0 = arith.constant 0 : i32
    %c0_i32_1 = arith.constant 0 : i32
    return %c0_i32, %c0_i32_0 : i32, i32
  }
  func.func @transform_5(%arg0: i32) -> (i32, i32) {
    %c0_i32 = arith.constant 0 : i32
    %c0_i32_0 = arith.constant 0 : i32
    %c0_i32_1 = arith.constant 0 : i32
    return %c0_i32, %c0_i32_0 : i32, i32
  }
  func.func @transform_6(%arg0: i32) -> (i32, i32) {
    %c0_i32 = arith.constant 0 : i32
    %c0_i32_0 = arith.constant 0 : i32
    %c0_i32_1 = arith.constant 0 : i32
    return %c0_i32, %c0_i32_0 : i32, i32
  }
  func.func @transform_7(%arg0: i32) -> (i32, i32) {
    %c0_i32 = arith.constant 0 : i32
    %c0_i32_0 = arith.constant 0 : i32
    %c0_i32_1 = arith.constant 0 : i32
    return %c0_i32, %c0_i32_0 : i32, i32
  }
  func.func @transform_8(%arg0: i32) -> (i32, i32) {
    %c0_i32 = arith.constant 0 : i32
    %c0_i32_0 = arith.constant 0 : i32
    %c0_i32_1 = arith.constant 0 : i32
    return %c0_i32, %c0_i32_0 : i32, i32
  }
  func.func @transform_9(%arg0: i32) -> (i32, i32) {
    %c0_i32 = arith.constant 0 : i32
    %c0_i32_0 = arith.constant 0 : i32
    %c0_i32_1 = arith.constant 0 : i32
    return %c0_i32, %c0_i32_0 : i32, i32
  }
  func.func @transform_10(%arg0: i32) -> (i32, i32) {
    %c0_i32 = arith.constant 0 : i32
    %c0_i32_0 = arith.constant 0 : i32
    %c0_i32_1 = arith.constant 0 : i32
    return %c0_i32, %c0_i32_0 : i32, i32
  }
  func.func @transform_11(%arg0: i32) -> (i32, i32) {
    %c0_i32 = arith.constant 0 : i32
    %c0_i32_0 = arith.constant 0 : i32
    %c0_i32_1 = arith.constant 0 : i32
    return %c0_i32, %c0_i32_0 : i32, i32
  }
  func.func @transform_12(%arg0: i32) -> (i32, i32) {
    %c0_i32 = arith.constant 0 : i32
    %c0_i32_0 = arith.constant 0 : i32
    %c0_i32_1 = arith.constant 0 : i32
    return %c0_i32, %c0_i32_0 : i32, i32
  }
  func.func @transform_13(%arg0: i32) -> (i32, i32) {
    %c0_i32 = arith.constant 0 : i32
    %c0_i32_0 = arith.constant 0 : i32
    %c0_i32_1 = arith.constant 0 : i32
    return %c0_i32, %c0_i32_0 : i32, i32
  }
  func.func @transform_14(%arg0: i32) -> (i32, i32) {
    %c0_i32 = arith.constant 0 : i32
    %c0_i32_0 = arith.constant 0 : i32
    %c0_i32_1 = arith.constant 0 : i32
    return %c0_i32, %c0_i32_0 : i32, i32
  }
  func.func @transform_15(%arg0: i32) -> (i32, i32) {
    %c0_i32 = arith.constant 0 : i32
    %c0_i32_0 = arith.constant 0 : i32
    %c0_i32_1 = arith.constant 0 : i32
    return %c0_i32, %c0_i32_0 : i32, i32
  }
  func.func @transform_16(%arg0: i32) -> (i32, i32) {
    %c0_i32 = arith.constant 0 : i32
    %c0_i32_0 = arith.constant 0 : i32
    %c0_i32_1 = arith.constant 0 : i32
    return %c0_i32, %c0_i32_0 : i32, i32
  }
  func.func @transform_17(%arg0: i32) -> (i32, i32, i32) {
    %c0_i32 = arith.constant 0 : i32
    %c0_i32_0 = arith.constant 0 : i32
    %c0_i32_1 = arith.constant 0 : i32
    return %c0_i32, %arg0, %c0_i32_0 : i32, i32, i32
  }
}

</mosaic_0001>

<llo_original>
// kernel: tpu_custom_call.1
$region0: #{tpu_custom_call.1}
  #allocation0 [shape = 'u32[]', space=smem, size = 0x4, offset = 0x4, fixed_abs, tag = 'smem constant byte address 0x4 - core index']
  #allocation1 [shape = 'u32[72,128]{1,0:T(1,128)}', space=vmem, size = 0x9000, scoped, tag = 'internal scratch']
  %s0 = inlined_call_operand.vmem [shape: f32[8,2,16], index: 0, kind: input, shape index: {}]
  %s1 = inlined_call_operand.vmem [shape: f32[8,2,16], index: 1, kind: input, shape index: {}]
  %s2 = inlined_call_operand.vmem [shape: f32[8,2,16], index: 2, kind: input, shape index: {}]
  %s3 = inlined_call_operand.vmem [shape: f32[8,8], index: 3, kind: input, shape index: {}]
  %s4 = inlined_call_operand.vmem [shape: f32[1,8], index: 4, kind: input, shape index: {}]
  %s5 = inlined_call_operand.hbm [shape: f32[8,8], index: 5, kind: input, shape index: {}]
  %s6 = inlined_call_operand.vmem [shape: f32[1,8], index: 6, kind: input, shape index: {}]
  %s7 = inlined_call_operand.hbm [shape: f32[8,32], index: 7, kind: input, shape index: {}]
  %s8 = inlined_call_operand.vmem [shape: f32[16,32], index: 8, kind: input, shape index: {}]
  %s9 = inlined_call_operand.vmem [shape: f32[1,32], index: 9, kind: input, shape index: {}]
  %s10 = inlined_call_operand.hbm [shape: f32[8,32], index: 10, kind: input, shape index: {}]
  %s11 = inlined_call_operand.hbm [shape: f32[16,32], index: 11, kind: input, shape index: {}]
  %s12 = inlined_call_operand.vmem [shape: f32[1,32], index: 12, kind: input, shape index: {}]
  %s13 = inlined_call_operand.vmem [shape: f32[32,8], index: 13, kind: input, shape index: {}]
  %s14 = inlined_call_operand.vmem [shape: f32[1,8], index: 14, kind: input, shape index: {}]
  %s15 = inlined_call_operand.vmem [shape: f32[32,8], index: 15, kind: input, shape index: {}]
  %s16 = inlined_call_operand.vmem [shape: f32[1,8], index: 16, kind: input, shape index: {}]
  %s17 = inlined_call_operand.hbm [shape: f32[8,2,32], index: 17, kind: output, shape index: {}]
  %s18 = sld [smem:[#allocation0]]
  $region94: #{tpu_custom_call.1} parent=0
    _
  %s20 = ssub.s32 1, %s18
  %s21 = scalar_select 0, %s20, %s18
  $region1: #{tpu_custom_call.1} parent=0
    #allocation2 [shape = 'u8[4096]{0}', space=vmem, size = 0x1000, scoped, tag = 'input window, operand 5, single buffered']
    #allocation3 [shape = 's32[1]{0}', space=sflag, size = 0x4, scoped, tag = 'scoped memory for tpu_custom_call.1']
    #allocation4 [shape = 's32[1]{0}', space=sflag, size = 0x4, scoped, tag = 'scoped memory for tpu_custom_call.1']
    #allocation5 [shape = 'u8[4096]{0}', space=vmem, size = 0x1000, scoped, tag = 'input window, operand 7, single buffered']
    #allocation6 [shape = 's32[1]{0}', space=sflag, size = 0x4, scoped, tag = 'scoped memory for tpu_custom_call.1']
    #allocation7 [shape = 'u8[4096]{0}', space=vmem, size = 0x1000, scoped, tag = 'input window, operand 10, single buffered']
    #allocation8 [shape = 'u8[8192]{0}', space=vmem, size = 0x2000, scoped, tag = 'input window, operand 11, single buffered']
    #allocation9 [shape = 's32[1]{0}', space=sflag, size = 0x4, scoped, tag = 'scoped memory for tpu_custom_call.1']
    #allocation10 [shape = 'u8[8192]{0}', space=vmem, size = 0x2000, scoped, tag = 'output window, operand 0, single buffered']
    %22 = vsyncpa [#allocation3], 0
    %23 = vsyncpa [#allocation6], 0
    %24 = vsyncpa [#allocation9], 0
    %25 = vsyncpa [#allocation4], 0
    // Predicated region
    $region2: #{tpu_custom_call.1} parent=1 // pred_check
      _
    $region3: #{tpu_custom_call.1} parent=1 // pred_check_branch
      %27 = sbr.rel (0) target = $region5
    $region4: #{tpu_custom_call.1} parent=1 // pred_region
      _
    $region5: #{tpu_custom_call.1} parent=1 // pred_fallthru
      _
    // Predicated region
    $region6: #{tpu_custom_call.1} parent=1 // pred_check
      _
    $region7: #{tpu_custom_call.1} parent=1 // pred_check_branch
      %29 = sbr.rel (0) target = $region9
    $region8: #{tpu_custom_call.1} parent=1 // pred_region
      _
    $region9: #{tpu_custom_call.1} parent=1 // pred_fallthru
      _
    // Predicated region
    $region10: #{tpu_custom_call.1} parent=1 // pred_check
      _
    $region11: #{tpu_custom_call.1} parent=1 // pred_check_branch
      %31 = sbr.rel (0) target = $region13
    $region12: #{tpu_custom_call.1} parent=1 // pred_region
      _
    $region13: #{tpu_custom_call.1} parent=1 // pred_fallthru
      _
    // Predicated region
    $region14: #{tpu_custom_call.1} parent=1 // pred_check
      _
    $region15: #{tpu_custom_call.1} parent=1 // pred_check_branch
      %33 = sbr.rel (0) target = $region17
    $region16: #{tpu_custom_call.1} parent=1 // pred_region
      _
    $region17: #{tpu_custom_call.1} parent=1 // pred_fallthru
      _
    // Predicated region
    $region18: #{tpu_custom_call.1} parent=1 // pred_check
      _
    $region19: #{tpu_custom_call.1} parent=1 // pred_check_branch
      %35 = sbr.rel (0) target = $region21
    $region20: #{tpu_custom_call.1} parent=1 // pred_region
      _
    $region21: #{tpu_custom_call.1} parent=1 // pred_fallthru
      _
    // Predicated region
    $region22: #{tpu_custom_call.1} parent=1 // pred_check
      _
    $region23: #{tpu_custom_call.1} parent=1 // pred_check_branch
      %37 = sbr.rel (0) target = $region25
    $region24: #{tpu_custom_call.1} parent=1 // pred_region
      %39 = vsyncadd [#allocation3], 0
      %s41 = sshll.u32 %s5, 4
      %s42 = int_to_ptr.hbm [resolvable:$true] %s41
      %s43 = sshll.u32 [#allocation2], 4
      %s44 = int_to_ptr.vmem [resolvable:$true] %s43
      %46 = dma.hbm_to_vmem [thread:$0]  %s42, 128, %s44, [#allocation3]
    $region25: #{tpu_custom_call.1} parent=1 // pred_fallthru
      _
    // Predicated region
    $region26: #{tpu_custom_call.1} parent=1 // pred_check
      _
    $region27: #{tpu_custom_call.1} parent=1 // pred_check_branch
      %48 = sbr.rel (0) target = $region29
    $region28: #{tpu_custom_call.1} parent=1 // pred_region
      _
    $region29: #{tpu_custom_call.1} parent=1 // pred_fallthru
      _
    // Predicated region
    $region30: #{tpu_custom_call.1} parent=1 // pred_check
      _
    $region31: #{tpu_custom_call.1} parent=1 // pred_check_branch
      %50 = sbr.rel (0) target = $region33
    $region32: #{tpu_custom_call.1} parent=1 // pred_region
      %52 = vsyncadd [#allocation6], 0
      %s54 = sshll.u32 %s7, 4
      %s55 = int_to_ptr.hbm [resolvable:$true] %s54
      %s56 = sshll.u32 [#allocation5], 4
      %s57 = int_to_ptr.vmem [resolvable:$true] %s56
      %59 = dma.hbm_to_vmem [thread:$0]  %s55, 128, %s57, [#allocation6]
    $region33: #{tpu_custom_call.1} parent=1 // pred_fallthru
      _
    // Predicated region
    $region34: #{tpu_custom_call.1} parent=1 // pred_check
      _
    $region35: #{tpu_custom_call.1} parent=1 // pred_check_branch
      %61 = sbr.rel (0) target = $region37
    $region36: #{tpu_custom_call.1} parent=1 // pred_region
      _
    $region37: #{tpu_custom_call.1} parent=1 // pred_fallthru
      _
    // Predicated region
    $region38: #{tpu_custom_call.1} parent=1 // pred_check
      _
    $region39: #{tpu_custom_call.1} parent=1 // pred_check_branch
      %63 = sbr.rel (0) target = $region41
    $region40: #{tpu_custom_call.1} parent=1 // pred_region
      _
    $region41: #{tpu_custom_call.1} parent=1 // pred_fallthru
      _
    // Predicated region
    $region42: #{tpu_custom_call.1} parent=1 // pred_check
      _
    $region43: #{tpu_custom_call.1} parent=1 // pred_check_branch
      %65 = sbr.rel (0) target = $region45
    $region44: #{tpu_custom_call.1} parent=1 // pred_region
      %67 = vsyncadd [#allocation6], 0
      %s69 = sshll.u32 %s10, 4
      %s70 = int_to_ptr.hbm [resolvable:$true] %s69
      %s71 = sshll.u32 [#allocation7], 4
      %s72 = int_to_ptr.vmem [resolvable:$true] %s71
      %74 = dma.hbm_to_vmem [thread:$0]  %s70, 128, %s72, [#allocation6]
    $region45: #{tpu_custom_call.1} parent=1 // pred_fallthru
      _
    // Predicated region
    $region46: #{tpu_custom_call.1} parent=1 // pred_check
      _
    $region47: #{tpu_custom_call.1} parent=1 // pred_check_branch
      %76 = sbr.rel (0) target = $region49
    $region48: #{tpu_custom_call.1} parent=1 // pred_region
      %78 = vsyncadd [#allocation9], 0
      %s79 = sshll.u32 %s11, 4
      %s80 = int_to_ptr.hbm [resolvable:$true] %s79
      %s81 = sshll.u32 [#allocation8], 4
      %s82 = int_to_ptr.vmem [resolvable:$true] %s81
      %87 = dma.hbm_to_vmem [thread:$0]  %s80, 256, %s82, [#allocation9], 128, 128, 8
    $region49: #{tpu_custom_call.1} parent=1 // pred_fallthru
      _
    // Predicated region
    $region50: #{tpu_custom_call.1} parent=1 // pred_check
      _
    $region51: #{tpu_custom_call.1} parent=1 // pred_check_branch
      %89 = sbr.rel (0) target = $region53
    $region52: #{tpu_custom_call.1} parent=1 // pred_region
      _
    $region53: #{tpu_custom_call.1} parent=1 // pred_fallthru
      _
    // Predicated region
    $region54: #{tpu_custom_call.1} parent=1 // pred_check
      _
    $region55: #{tpu_custom_call.1} parent=1 // pred_check_branch
      %91 = sbr.rel (0) target = $region57
    $region56: #{tpu_custom_call.1} parent=1 // pred_region
      _
    $region57: #{tpu_custom_call.1} parent=1 // pred_fallthru
      _
    // Predicated region
    $region58: #{tpu_custom_call.1} parent=1 // pred_check
      _
    $region59: #{tpu_custom_call.1} parent=1 // pred_check_branch
      %93 = sbr.rel (0) target = $region61
    $region60: #{tpu_custom_call.1} parent=1 // pred_region
      _
    $region61: #{tpu_custom_call.1} parent=1 // pred_fallthru
      _
    // Predicated region
    $region62: #{tpu_custom_call.1} parent=1 // pred_check
      _
    $region63: #{tpu_custom_call.1} parent=1 // pred_check_branch
      %95 = sbr.rel (0) target = $region65
    $region64: #{tpu_custom_call.1} parent=1 // pred_region
      _
    $region65: #{tpu_custom_call.1} parent=1 // pred_fallthru
      _
    // Predicated region
    $region66: #{tpu_custom_call.1} parent=1 // pred_check
      _
    $region67: #{tpu_custom_call.1} parent=1 // pred_check_branch
      %97 = sbr.rel (0) target = $region69
    $region68: #{tpu_custom_call.1} parent=1 // pred_region
      _
    $region69: #{tpu_custom_call.1} parent=1 // pred_fallthru
      _
    // Predicated region
    $region70: #{tpu_custom_call.1} parent=1 // pred_check
      _
    $region71: #{tpu_custom_call.1} parent=1 // pred_check_branch
      %99 = sbr.rel (0) target = $region73
    $region72: #{tpu_custom_call.1} parent=1 // pred_region
      %101 = dma.done [#allocation3], 128
    $region73: #{tpu_custom_call.1} parent=1 // pred_fallthru
      _
    // Predicated region
    $region74: #{tpu_custom_call.1} parent=1 // pred_check
      _
    $region75: #{tpu_custom_call.1} parent=1 // pred_check_branch
      %103 = sbr.rel (0) target = $region77
    $region76: #{tpu_custom_call.1} parent=1 // pred_region
      %105 = dma.done [#allocation6], 128
    $region77: #{tpu_custom_call.1} parent=1 // pred_fallthru
      _
    // Predicated region
    $region78: #{tpu_custom_call.1} parent=1 // pred_check
      _
    $region79: #{tpu_custom_call.1} parent=1 // pred_check_branch
      %107 = sbr.rel (0) target = $region81
    $region80: #{tpu_custom_call.1} parent=1 // pred_region
      %109 = dma.done [#allocation6], 128
    $region81: #{tpu_custom_call.1} parent=1 // pred_fallthru
      _
    // Predicated region
    $region82: #{tpu_custom_call.1} parent=1 // pred_check
      _
    $region83: #{tpu_custom_call.1} parent=1 // pred_check_branch
      %111 = sbr.rel (0) target = $region85
    $region84: #{tpu_custom_call.1} parent=1 // pred_region
      %113 = dma.done [#allocation9], 256
    $region85: #{tpu_custom_call.1} parent=1 // pred_fallthru
      _
    %v114 = vld [vmem:[%s0] sm:$0x3]
    %v115 = vld [vmem:[%s0 + $0x2] sm:$0x3]
    %v116 = vld [vmem:[%s0 + $0x4] sm:$0x3]
    %v117 = vld [vmem:[%s0 + $0x6] sm:$0x3]
    %v118 = vld [vmem:[%s0 + $0x8] sm:$0x3]
    %v119 = vld [vmem:[%s0 + $0xa] sm:$0x3]
    %v120 = vld [vmem:[%s0 + $0xc] sm:$0x3]
    %v121 = vld [vmem:[%s0 + $0xe] sm:$0x3]
    %v122 = vrot.slane %v116, 4
    %vm123 = vcmask 1047556
    %v124 = vsel %vm123, %v122, %v114
    %v126 = vunpack.c.l.s4 1983009808
    %v127 = vunpack.c.0.s8 %v126
    %v128 = vperm.slane %v124, %v127
    %v129 = vrot.slane %v117, 4
    %v130 = vsel %vm123, %v129, %v115
    %v132 = vunpack.c.l.s4 1983009808
    %v133 = vunpack.c.0.s8 %v132
    %v134 = vperm.slane %v130, %v133
    %v135 = vrot.slane %v120, 4
    %v136 = vsel %vm123, %v135, %v118
    %v138 = vunpack.c.l.s4 1983009808
    %v139 = vunpack.c.0.s8 %v138
    %v140 = vperm.slane %v136, %v139
    %v141 = vrot.slane %v121, 4
    %v142 = vsel %vm123, %v141, %v119
    %v144 = vunpack.c.l.s4 1983009808
    %v145 = vunpack.c.0.s8 %v144
    %v146 = vperm.slane %v142, %v145
    %v147 = vrot.slane %v134, 4
    %v148 = vsel %vm123, %v147, %v128
    %v150 = vunpack.c.l.s4 1934713408
    %v151 = vunpack.c.0.s8 %v150
    %v152 = vperm.slane %v148, %v151
    %v153 = vrot.slane %v146, 4
    %v154 = vsel %vm123, %v153, %v140
    %v156 = vunpack.c.l.s4 1934713408
    %v157 = vunpack.c.0.s8 %v156
    %v158 = vperm.slane %v154, %v157
    %v159 = vrot.slane %v158, 4
    %v160 = vsel %vm123, %v159, %v152
    %v161 = vrot.slane %v152, 4
    %v162 = vsel %vm123, %v158, %v161
    %v163 = vld [vmem:[%s1] sm:$0x3]
    %v164 = vld [vmem:[%s1 + $0x2] sm:$0x3]
    %v165 = vld [vmem:[%s1 + $0x4] sm:$0x3]
    %v166 = vld [vmem:[%s1 + $0x6] sm:$0x3]
    %v167 = vld [vmem:[%s1 + $0x8] sm:$0x3]
    %v168 = vld [vmem:[%s1 + $0xa] sm:$0x3]
    %v169 = vld [vmem:[%s1 + $0xc] sm:$0x3]
    %v170 = vld [vmem:[%s1 + $0xe] sm:$0x3]
    %171 = vxpose.xlu0.b32.start [1/16] %v163, 128
    %172 = vxpose.xlu0.b32.cont [2/16] 0.0, 128
    %173 = vxpose.xlu0.b32.cont [3/16] 0.0, 128
    %174 = vxpose.xlu0.b32.cont [4/16] 0.0, 128
    %175 = vxpose.xlu0.b32.cont [5/16] 0.0, 128
    %176 = vxpose.xlu0.b32.cont [6/16] 0.0, 128
    %177 = vxpose.xlu0.b32.cont [7/16] 0.0, 128
    %178 = vxpose.xlu0.b32.cont [8/16] 0.0, 128
    %179 = vxpose.xlu0.b32.cont [9/16] 0.0, 128
    %180 = vxpose.xlu0.b32.cont [10/16] 0.0, 128
    %181 = vxpose.xlu0.b32.cont [11/16] 0.0, 128
    %182 = vxpose.xlu0.b32.cont [12/16] 0.0, 128
    %183 = vxpose.xlu0.b32.cont [13/16] 0.0, 128
    %184 = vxpose.xlu0.b32.cont [14/16] 0.0, 128
    %185 = vxpose.xlu0.b32.cont [15/16] 0.0, 128
    %186 = vxpose.xlu0.b32.end [16/16] 0.0, 128
    %v187 = vpop.trf.xlu0
    %v188 = vpop.trf.xlu0
    %v189 = vpop.trf.xlu0
    %v190 = vpop.trf.xlu0
    %v191 = vpop.trf.xlu0
    %v192 = vpop.trf.xlu0
    %v193 = vpop.trf.xlu0
    %v194 = vpop.trf.xlu0
    %v195 = vpop.trf.xlu0
    %v196 = vpop.trf.xlu0
    %v197 = vpop.trf.xlu0
    %v198 = vpop.trf.xlu0
    %v199 = vpop.trf.xlu0
    %v200 = vpop.trf.xlu0
    %v201 = vpop.trf.xlu0
    %v202 = vpop.trf.xlu0
    %203 = vxpose.xlu0.b32.start [1/16] %v164, 128
    %204 = vxpose.xlu0.b32.cont [2/16] 0.0, 128
    %205 = vxpose.xlu0.b32.cont [3/16] 0.0, 128
    %206 = vxpose.xlu0.b32.cont [4/16] 0.0, 128
    %207 = vxpose.xlu0.b32.cont [5/16] 0.0, 128
    %208 = vxpose.xlu0.b32.cont [6/16] 0.0, 128
    %209 = vxpose.xlu0.b32.cont [7/16] 0.0, 128
    %210 = vxpose.xlu0.b32.cont [8/16] 0.0, 128
    %211 = vxpose.xlu0.b32.cont [9/16] 0.0, 128
    %212 = vxpose.xlu0.b32.cont [10/16] 0.0, 128
    %213 = vxpose.xlu0.b32.cont [11/16] 0.0, 128
    %214 = vxpose.xlu0.b32.cont [12/16] 0.0, 128
    %215 = vxpose.xlu0.b32.cont [13/16] 0.0, 128
    %216 = vxpose.xlu0.b32.cont [14/16] 0.0, 128
    %217 = vxpose.xlu0.b32.cont [15/16] 0.0, 128
    %218 = vxpose.xlu0.b32.end [16/16] 0.0, 128
    %v219 = vpop.trf.xlu0
    %v220 = vpop.trf.xlu0
    %v221 = vpop.trf.xlu0
    %v222 = vpop.trf.xlu0
    %v223 = vpop.trf.xlu0
    %v224 = vpop.trf.xlu0
    %v225 = vpop.trf.xlu0
    %v226 = vpop.trf.xlu0
    %v227 = vpop.trf.xlu0
    %v228 = vpop.trf.xlu0
    %v229 = vpop.trf.xlu0
    %v230 = vpop.trf.xlu0
    %v231 = vpop.trf.xlu0
    %v232 = vpop.trf.xlu0
    %v233 = vpop.trf.xlu0
    %v234 = vpop.trf.xlu0
    %235 = vxpose.xlu0.b32.start [1/16] %v165, 128
    %236 = vxpose.xlu0.b32.cont [2/16] 0.0, 128
    %237 = vxpose.xlu0.b32.cont [3/16] 0.0, 128
    %238 = vxpose.xlu0.b32.cont [4/16] 0.0, 128
    %239 = vxpose.xlu0.b32.cont [5/16] 0.0, 128
    %240 = vxpose.xlu0.b32.cont [6/16] 0.0, 128
    %241 = vxpose.xlu0.b32.cont [7/16] 0.0, 128
    %242 = vxpose.xlu0.b32.cont [8/16] 0.0, 128
    %243 = vxpose.xlu0.b32.cont [9/16] 0.0, 128
    %244 = vxpose.xlu0.b32.cont [10/16] 0.0, 128
    %245 = vxpose.xlu0.b32.cont [11/16] 0.0, 128
    %246 = vxpose.xlu0.b32.cont [12/16] 0.0, 128
    %247 = vxpose.xlu0.b32.cont [13/16] 0.0, 128
    %248 = vxpose.xlu0.b32.cont [14/16] 0.0, 128
    %249 = vxpose.xlu0.b32.cont [15/16] 0.0, 128
    %250 = vxpose.xlu0.b32.end [16/16] 0.0, 128
    %v251 = vpop.trf.xlu0
    %v252 = vpop.trf.xlu0
    %v253 = vpop.trf.xlu0
    %v254 = vpop.trf.xlu0
    %v255 = vpop.trf.xlu0
    %v256 = vpop.trf.xlu0
    %v257 = vpop.trf.xlu0
    %v258 = vpop.trf.xlu0
    %v259 = vpop.trf.xlu0
    %v260 = vpop.trf.xlu0
    %v261 = vpop.trf.xlu0
    %v262 = vpop.trf.xlu0
    %v263 = vpop.trf.xlu0
    %v264 = vpop.trf.xlu0
    %v265 = vpop.trf.xlu0
    %v266 = vpop.trf.xlu0
    %267 = vxpose.xlu0.b32.start [1/16] %v166, 128
    %268 = vxpose.xlu0.b32.cont [2/16] 0.0, 128
    %269 = vxpose.xlu0.b32.cont [3/16] 0.0, 128
    %270 = vxpose.xlu0.b32.cont [4/16] 0.0, 128
    %271 = vxpose.xlu0.b32.cont [5/16] 0.0, 128
    %272 = vxpose.xlu0.b32.cont [6/16] 0.0, 128
    %273 = vxpose.xlu0.b32.cont [7/16] 0.0, 128
    %274 = vxpose.xlu0.b32.cont [8/16] 0.0, 128
    %275 = vxpose.xlu0.b32.cont [9/16] 0.0, 128
    %276 = vxpose.xlu0.b32.cont [10/16] 0.0, 128
    %277 = vxpose.xlu0.b32.cont [11/16] 0.0, 128
    %278 = vxpose.xlu0.b32.cont [12/16] 0.0, 128
    %279 = vxpose.xlu0.b32.cont [13/16] 0.0, 128
    %280 = vxpose.xlu0.b32.cont [14/16] 0.0, 128
    %281 = vxpose.xlu0.b32.cont [15/16] 0.0, 128
    %282 = vxpose.xlu0.b32.end [16/16] 0.0, 128
    %v283 = vpop.trf.xlu0
    %v284 = vpop.trf.xlu0
    %v285 = vpop.trf.xlu0
    %v286 = vpop.trf.xlu0
    %v287 = vpop.trf.xlu0
    %v288 = vpop.trf.xlu0
    %v289 = vpop.trf.xlu0
    %v290 = vpop.trf.xlu0
    %v291 = vpop.trf.xlu0
    %v292 = vpop.trf.xlu0
    %v293 = vpop.trf.xlu0
    %v294 = vpop.trf.xlu0
    %v295 = vpop.trf.xlu0
    %v296 = vpop.trf.xlu0
    %v297 = vpop.trf.xlu0
    %v298 = vpop.trf.xlu0
    %299 = vxpose.xlu0.b32.start [1/16] %v167, 128
    %300 = vxpose.xlu0.b32.cont [2/16] 0.0, 128
    %301 = vxpose.xlu0.b32.cont [3/16] 0.0, 128
    %302 = vxpose.xlu0.b32.cont [4/16] 0.0, 128
    %303 = vxpose.xlu0.b32.cont [5/16] 0.0, 128
    %304 = vxpose.xlu0.b32.cont [6/16] 0.0, 128
    %305 = vxpose.xlu0.b32.cont [7/16] 0.0, 128
    %306 = vxpose.xlu0.b32.cont [8/16] 0.0, 128
    %307 = vxpose.xlu0.b32.cont [9/16] 0.0, 128
    %308 = vxpose.xlu0.b32.cont [10/16] 0.0, 128
    %309 = vxpose.xlu0.b32.cont [11/16] 0.0, 128
    %310 = vxpose.xlu0.b32.cont [12/16] 0.0, 128
    %311 = vxpose.xlu0.b32.cont [13/16] 0.0, 128
    %312 = vxpose.xlu0.b32.cont [14/16] 0.0, 128
    %313 = vxpose.xlu0.b32.cont [15/16] 0.0, 128
    %314 = vxpose.xlu0.b32.end [16/16] 0.0, 128
    %v315 = vpop.trf.xlu0
    %v316 = vpop.trf.xlu0
    %v317 = vpop.trf.xlu0
    %v318 = vpop.trf.xlu0
    %v319 = vpop.trf.xlu0
    %v320 = vpop.trf.xlu0
    %v321 = vpop.trf.xlu0
    %v322 = vpop.trf.xlu0
    %v323 = vpop.trf.xlu0
    %v324 = vpop.trf.xlu0
    %v325 = vpop.trf.xlu0
    %v326 = vpop.trf.xlu0
    %v327 = vpop.trf.xlu0
    %v328 = vpop.trf.xlu0
    %v329 = vpop.trf.xlu0
    %v330 = vpop.trf.xlu0
    %331 = vxpose.xlu0.b32.start [1/16] %v168, 128
    %332 = vxpose.xlu0.b32.cont [2/16] 0.0, 128
    %333 = vxpose.xlu0.b32.cont [3/16] 0.0, 128
    %334 = vxpose.xlu0.b32.cont [4/16] 0.0, 128
    %335 = vxpose.xlu0.b32.cont [5/16] 0.0, 128
    %336 = vxpose.xlu0.b32.cont [6/16] 0.0, 128
    %337 = vxpose.xlu0.b32.cont [7/16] 0.0, 128
    %338 = vxpose.xlu0.b32.cont [8/16] 0.0, 128
    %339 = vxpose.xlu0.b32.cont [9/16] 0.0, 128
    %340 = vxpose.xlu0.b32.cont [10/16] 0.0, 128
    %341 = vxpose.xlu0.b32.cont [11/16] 0.0, 128
    %342 = vxpose.xlu0.b32.cont [12/16] 0.0, 128
    %343 = vxpose.xlu0.b32.cont [13/16] 0.0, 128
    %344 = vxpose.xlu0.b32.cont [14/16] 0.0, 128
    %345 = vxpose.xlu0.b32.cont [15/16] 0.0, 128
    %346 = vxpose.xlu0.b32.end [16/16] 0.0, 128
    %v347 = vpop.trf.xlu0
    %v348 = vpop.trf.xlu0
    %v349 = vpop.trf.xlu0
    %v350 = vpop.trf.xlu0
    %v351 = vpop.trf.xlu0
    %v352 = vpop.trf.xlu0
    %v353 = vpop.trf.xlu0
    %v354 = vpop.trf.xlu0
    %v355 = vpop.trf.xlu0
    %v356 = vpop.trf.xlu0
    %v357 = vpop.trf.xlu0
    %v358 = vpop.trf.xlu0
    %v359 = vpop.trf.xlu0
    %v360 = vpop.trf.xlu0
    %v361 = vpop.trf.xlu0
    %v362 = vpop.trf.xlu0
    %363 = vxpose.xlu0.b32.start [1/16] %v169, 128
    %364 = vxpose.xlu0.b32.cont [2/16] 0.0, 128
    %365 = vxpose.xlu0.b32.cont [3/16] 0.0, 128
    %366 = vxpose.xlu0.b32.cont [4/16] 0.0, 128
    %367 = vxpose.xlu0.b32.cont [5/16] 0.0, 128
    %368 = vxpose.xlu0.b32.cont [6/16] 0.0, 128
    %369 = vxpose.xlu0.b32.cont [7/16] 0.0, 128
    %370 = vxpose.xlu0.b32.cont [8/16] 0.0, 128
    %371 = vxpose.xlu0.b32.cont [9/16] 0.0, 128
    %372 = vxpose.xlu0.b32.cont [10/16] 0.0, 128
    %373 = vxpose.xlu0.b32.cont [11/16] 0.0, 128
    %374 = vxpose.xlu0.b32.cont [12/16] 0.0, 128
    %375 = vxpose.xlu0.b32.cont [13/16] 0.0, 128
    %376 = vxpose.xlu0.b32.cont [14/16] 0.0, 128
    %377 = vxpose.xlu0.b32.cont [15/16] 0.0, 128
    %378 = vxpose.xlu0.b32.end [16/16] 0.0, 128
    %v379 = vpop.trf.xlu0
    %v380 = vpop.trf.xlu0
    %v381 = vpop.trf.xlu0
    %v382 = vpop.trf.xlu0
    %v383 = vpop.trf.xlu0
    %v384 = vpop.trf.xlu0
    %v385 = vpop.trf.xlu0
    %v386 = vpop.trf.xlu0
    %v387 = vpop.trf.xlu0
    %v388 = vpop.trf.xlu0
    %v389 = vpop.trf.xlu0
    %v390 = vpop.trf.xlu0
    %v391 = vpop.trf.xlu0
    %v392 = vpop.trf.xlu0
    %v393 = vpop.trf.xlu0
    %v394 = vpop.trf.xlu0
    %395 = vxpose.xlu0.b32.start [1/16] %v170, 128
    %396 = vxpose.xlu0.b32.cont [2/16] 0.0, 128
    %397 = vxpose.xlu0.b32.cont [3/16] 0.0, 128
    %398 = vxpose.xlu0.b32.cont [4/16] 0.0, 128
    %399 = vxpose.xlu0.b32.cont [5/16] 0.0, 128
    %400 = vxpose.xlu0.b32.cont [6/16] 0.0, 128
    %401 = vxpose.xlu0.b32.cont [7/16] 0.0, 128
    %402 = vxpose.xlu0.b32.cont [8/16] 0.0, 128
    %403 = vxpose.xlu0.b32.cont [9/16] 0.0, 128
    %404 = vxpose.xlu0.b32.cont [10/16] 0.0, 128
    %405 = vxpose.xlu0.b32.cont [11/16] 0.0, 128
    %406 = vxpose.xlu0.b32.cont [12/16] 0.0, 128
    %407 = vxpose.xlu0.b32.cont [13/16] 0.0, 128
    %408 = vxpose.xlu0.b32.cont [14/16] 0.0, 128
    %409 = vxpose.xlu0.b32.cont [15/16] 0.0, 128
    %410 = vxpose.xlu0.b32.end [16/16] 0.0, 128
    %v411 = vpop.trf.xlu0
    %v412 = vpop.trf.xlu0
    %v413 = vpop.trf.xlu0
    %v414 = vpop.trf.xlu0
    %v415 = vpop.trf.xlu0
    %v416 = vpop.trf.xlu0
    %v417 = vpop.trf.xlu0
    %v418 = vpop.trf.xlu0
    %v419 = vpop.trf.xlu0
    %v420 = vpop.trf.xlu0
    %v421 = vpop.trf.xlu0
    %v422 = vpop.trf.xlu0
    %v423 = vpop.trf.xlu0
    %v424 = vpop.trf.xlu0
    %v425 = vpop.trf.xlu0
    %v426 = vpop.trf.xlu0
    %v427 = vrot.slane %v251, 4
    %v428 = vsel %vm123, %v427, %v187
    %v429 = vrot.slane %v187, 4
    %v430 = vsel %vm123, %v251, %v429
    %v432 = vunpack.c.l.s4 1983009808
    %v433 = vunpack.c.0.s8 %v432
    %v434 = vperm.slane %v428, %v433
    %v436 = vunpack.c.l.s4 1983009808
    %v437 = vunpack.c.0.s8 %v436
    %v438 = vperm.slane %v430, %v437
    %v439 = vrot.slane %v283, 4
    %v440 = vsel %vm123, %v439, %v219
    %v441 = vrot.slane %v219, 4
    %v442 = vsel %vm123, %v283, %v441
    %v444 = vunpack.c.l.s4 1983009808
    %v445 = vunpack.c.0.s8 %v444
    %v446 = vperm.slane %v440, %v445
    %v448 = vunpack.c.l.s4 1983009808
    %v449 = vunpack.c.0.s8 %v448
    %v450 = vperm.slane %v442, %v449
    %v451 = vrot.slane %v379, 4
    %v452 = vsel %vm123, %v451, %v315
    %v453 = vrot.slane %v315, 4
    %v454 = vsel %vm123, %v379, %v453
    %v456 = vunpack.c.l.s4 1983009808
    %v457 = vunpack.c.0.s8 %v456
    %v458 = vperm.slane %v452, %v457
    %v460 = vunpack.c.l.s4 1983009808
    %v461 = vunpack.c.0.s8 %v460
    %v462 = vperm.slane %v454, %v461
    %v463 = vrot.slane %v411, 4
    %v464 = vsel %vm123, %v463, %v347
    %v465 = vrot.slane %v347, 4
    %v466 = vsel %vm123, %v411, %v465
    %v468 = vunpack.c.l.s4 1983009808
    %v469 = vunpack.c.0.s8 %v468
    %v470 = vperm.slane %v464, %v469
    %v472 = vunpack.c.l.s4 1983009808
    %v473 = vunpack.c.0.s8 %v472
    %v474 = vperm.slane %v466, %v473
    %v475 = vrot.slane %v446, 4
    %v476 = vsel %vm123, %v475, %v434
    %v477 = vrot.slane %v434, 4
    %v478 = vsel %vm123, %v446, %v477
    %v480 = vunpack.c.l.s4 1934713408
    %v481 = vunpack.c.0.s8 %v480
    %v482 = vperm.slane %v476, %v481
    %v484 = vunpack.c.l.s4 1934713408
    %v485 = vunpack.c.0.s8 %v484
    %v486 = vperm.slane %v478, %v485
    %v487 = vrot.slane %v450, 4
    %v488 = vsel %vm123, %v487, %v438
    %v489 = vrot.slane %v438, 4
    %v490 = vsel %vm123, %v450, %v489
    %v492 = vunpack.c.l.s4 1934713408
    %v493 = vunpack.c.0.s8 %v492
    %v494 = vperm.slane %v488, %v493
    %v496 = vunpack.c.l.s4 1934713408
    %v497 = vunpack.c.0.s8 %v496
    %v498 = vperm.slane %v490, %v497
    %v499 = vrot.slane %v470, 4
    %v500 = vsel %vm123, %v499, %v458
    %v501 = vrot.slane %v458, 4
    %v502 = vsel %vm123, %v470, %v501
    %v504 = vunpack.c.l.s4 1934713408
    %v505 = vunpack.c.0.s8 %v504
    %v506 = vperm.slane %v500, %v505
    %v508 = vunpack.c.l.s4 1934713408
    %v509 = vunpack.c.0.s8 %v508
    %v510 = vperm.slane %v502, %v509
    %v511 = vrot.slane %v474, 4
    %v512 = vsel %vm123, %v511, %v462
    %v513 = vrot.slane %v462, 4
    %v514 = vsel %vm123, %v474, %v513
    %v516 = vunpack.c.l.s4 1934713408
    %v517 = vunpack.c.0.s8 %v516
    %v518 = vperm.slane %v512, %v517
    %v520 = vunpack.c.l.s4 1934713408
    %v521 = vunpack.c.0.s8 %v520
    %v522 = vperm.slane %v514, %v521
    %v523 = vrot.slane %v506, 4
    %v524 = vsel %vm123, %v523, %v482
    %v525 = vrot.slane %v482, 4
    %v526 = vsel %vm123, %v506, %v525
    %v527 = vrot.slane %v510, 4
    %v528 = vsel %vm123, %v527, %v486
    %v529 = vrot.slane %v486, 4
    %v530 = vsel %vm123, %v510, %v529
    %v531 = vrot.slane %v518, 4
    %v532 = vsel %vm123, %v531, %v494
    %v533 = vrot.slane %v494, 4
    %v534 = vsel %vm123, %v518, %v533
    %v535 = vrot.slane %v522, 4
    %v536 = vsel %vm123, %v535, %v498
    %v537 = vrot.slane %v498, 4
    %v538 = vsel %vm123, %v522, %v537
    %v539 = vrot.slane %v252, 4
    %v540 = vsel %vm123, %v539, %v188
    %v541 = vrot.slane %v188, 4
    %v542 = vsel %vm123, %v252, %v541
    %v544 = vunpack.c.l.s4 1983009808
    %v545 = vunpack.c.0.s8 %v544
    %v546 = vperm.slane %v540, %v545
    %v548 = vunpack.c.l.s4 1983009808
    %v549 = vunpack.c.0.s8 %v548
    %v550 = vperm.slane %v542, %v549
    %v551 = vrot.slane %v284, 4
    %v552 = vsel %vm123, %v551, %v220
    %v553 = vrot.slane %v220, 4
    %v554 = vsel %vm123, %v284, %v553
    %v556 = vunpack.c.l.s4 1983009808
    %v557 = vunpack.c.0.s8 %v556
    %v558 = vperm.slane %v552, %v557
    %v560 = vunpack.c.l.s4 1983009808
    %v561 = vunpack.c.0.s8 %v560
    %v562 = vperm.slane %v554, %v561
    %v563 = vrot.slane %v380, 4
    %v564 = vsel %vm123, %v563, %v316
    %v565 = vrot.slane %v316, 4
    %v566 = vsel %vm123, %v380, %v565
    %v568 = vunpack.c.l.s4 1983009808
    %v569 = vunpack.c.0.s8 %v568
    %v570 = vperm.slane %v564, %v569
    %v572 = vunpack.c.l.s4 1983009808
    %v573 = vunpack.c.0.s8 %v572
    %v574 = vperm.slane %v566, %v573
    %v575 = vrot.slane %v412, 4
    %v576 = vsel %vm123, %v575, %v348
    %v577 = vrot.slane %v348, 4
    %v578 = vsel %vm123, %v412, %v577
    %v580 = vunpack.c.l.s4 1983009808
    %v581 = vunpack.c.0.s8 %v580
    %v582 = vperm.slane %v576, %v581
    %v584 = vunpack.c.l.s4 1983009808
    %v585 = vunpack.c.0.s8 %v584
    %v586 = vperm.slane %v578, %v585
    %v587 = vrot.slane %v558, 4
    %v588 = vsel %vm123, %v587, %v546
    %v589 = vrot.slane %v546, 4
    %v590 = vsel %vm123, %v558, %v589
    %v592 = vunpack.c.l.s4 1934713408
    %v593 = vunpack.c.0.s8 %v592
    %v594 = vperm.slane %v588, %v593
    %v596 = vunpack.c.l.s4 1934713408
    %v597 = vunpack.c.0.s8 %v596
    %v598 = vperm.slane %v590, %v597
    %v599 = vrot.slane %v562, 4
    %v600 = vsel %vm123, %v599, %v550
    %v601 = vrot.slane %v550, 4
    %v602 = vsel %vm123, %v562, %v601
    %v604 = vunpack.c.l.s4 1934713408
    %v605 = vunpack.c.0.s8 %v604
    %v606 = vperm.slane %v600, %v605
    %v608 = vunpack.c.l.s4 1934713408
    %v609 = vunpack.c.0.s8 %v608
    %v610 = vperm.slane %v602, %v609
    %v611 = vrot.slane %v582, 4
    %v612 = vsel %vm123, %v611, %v570
    %v613 = vrot.slane %v570, 4
    %v614 = vsel %vm123, %v582, %v613
    %v616 = vunpack.c.l.s4 1934713408
    %v617 = vunpack.c.0.s8 %v616
    %v618 = vperm.slane %v612, %v617
    %v620 = vunpack.c.l.s4 1934713408
    %v621 = vunpack.c.0.s8 %v620
    %v622 = vperm.slane %v614, %v621
    %v623 = vrot.slane %v586, 4
    %v624 = vsel %vm123, %v623, %v574
    %v625 = vrot.slane %v574, 4
    %v626 = vsel %vm123, %v586, %v625
    %v628 = vunpack.c.l.s4 1934713408
    %v629 = vunpack.c.0.s8 %v628
    %v630 = vperm.slane %v624, %v629
    %v632 = vunpack.c.l.s4 1934713408
    %v633 = vunpack.c.0.s8 %v632
    %v634 = vperm.slane %v626, %v633
    %v635 = vrot.slane %v618, 4
    %v636 = vsel %vm123, %v635, %v594
    %v637 = vrot.slane %v594, 4
    %v638 = vsel %vm123, %v618, %v637
    %v639 = vrot.slane %v622, 4
    %v640 = vsel %vm123, %v639, %v598
    %v641 = vrot.slane %v598, 4
    %v642 = vsel %vm123, %v622, %v641
    %v643 = vrot.slane %v630, 4
    %v644 = vsel %vm123, %v643, %v606
    %v645 = vrot.slane %v606, 4
    %v646 = vsel %vm123, %v630, %v645
    %v647 = vrot.slane %v634, 4
    %v648 = vsel %vm123, %v647, %v610
    %v649 = vrot.slane %v610, 4
    %v650 = vsel %vm123, %v634, %v649
    %651 = vxpose.xlu0.b32.start [1/16] %v524, 128
    %652 = vxpose.xlu0.b32.cont [2/16] 0.0, 128
    %653 = vxpose.xlu0.b32.cont [3/16] 0.0, 128
    %654 = vxpose.xlu0.b32.cont [4/16] 0.0, 128
    %655 = vxpose.xlu0.b32.cont [5/16] 0.0, 128
    %656 = vxpose.xlu0.b32.cont [6/16] 0.0, 128
    %657 = vxpose.xlu0.b32.cont [7/16] 0.0, 128
    %658 = vxpose.xlu0.b32.cont [8/16] 0.0, 128
    %659 = vxpose.xlu0.b32.cont [9/16] 0.0, 128
    %660 = vxpose.xlu0.b32.cont [10/16] 0.0, 128
    %661 = vxpose.xlu0.b32.cont [11/16] 0.0, 128
    %662 = vxpose.xlu0.b32.cont [12/16] 0.0, 128
    %663 = vxpose.xlu0.b32.cont [13/16] 0.0, 128
    %664 = vxpose.xlu0.b32.cont [14/16] 0.0, 128
    %665 = vxpose.xlu0.b32.cont [15/16] 0.0, 128
    %666 = vxpose.xlu0.b32.end [16/16] 0.0, 128
    %v667 = vpop.trf.xlu0
    %v668 = vpop.trf.xlu0
    %v669 = vpop.trf.xlu0
    %v670 = vpop.trf.xlu0
    %v671 = vpop.trf.xlu0
    %v672 = vpop.trf.xlu0
    %v673 = vpop.trf.xlu0
    %v674 = vpop.trf.xlu0
    %v675 = vpop.trf.xlu0
    %v676 = vpop.trf.xlu0
    %v677 = vpop.trf.xlu0
    %v678 = vpop.trf.xlu0
    %v679 = vpop.trf.xlu0
    %v680 = vpop.trf.xlu0
    %v681 = vpop.trf.xlu0
    %v682 = vpop.trf.xlu0
    %683 = vxpose.xlu0.b32.start [1/16] %v526, 128
    %684 = vxpose.xlu0.b32.cont [2/16] 0.0, 128
    %685 = vxpose.xlu0.b32.cont [3/16] 0.0, 128
    %686 = vxpose.xlu0.b32.cont [4/16] 0.0, 128
    %687 = vxpose.xlu0.b32.cont [5/16] 0.0, 128
    %688 = vxpose.xlu0.b32.cont [6/16] 0.0, 128
    %689 = vxpose.xlu0.b32.cont [7/16] 0.0, 128
    %690 = vxpose.xlu0.b32.cont [8/16] 0.0, 128
    %691 = vxpose.xlu0.b32.cont [9/16] 0.0, 128
    %692 = vxpose.xlu0.b32.cont [10/16] 0.0, 128
    %693 = vxpose.xlu0.b32.cont [11/16] 0.0, 128
    %694 = vxpose.xlu0.b32.cont [12/16] 0.0, 128
    %695 = vxpose.xlu0.b32.cont [13/16] 0.0, 128
    %696 = vxpose.xlu0.b32.cont [14/16] 0.0, 128
    %697 = vxpose.xlu0.b32.cont [15/16] 0.0, 128
    %698 = vxpose.xlu0.b32.end [16/16] 0.0, 128
    %v699 = vpop.trf.xlu0
    %v700 = vpop.trf.xlu0
    %v701 = vpop.trf.xlu0
    %v702 = vpop.trf.xlu0
    %v703 = vpop.trf.xlu0
    %v704 = vpop.trf.xlu0
    %v705 = vpop.trf.xlu0
    %v706 = vpop.trf.xlu0
    %v707 = vpop.trf.xlu0
    %v708 = vpop.trf.xlu0
    %v709 = vpop.trf.xlu0
    %v710 = vpop.trf.xlu0
    %v711 = vpop.trf.xlu0
    %v712 = vpop.trf.xlu0
    %v713 = vpop.trf.xlu0
    %v714 = vpop.trf.xlu0
    %715 = vxpose.xlu0.b32.start [1/16] %v528, 128
    %716 = vxpose.xlu0.b32.cont [2/16] 0.0, 128
    %717 = vxpose.xlu0.b32.cont [3/16] 0.0, 128
    %718 = vxpose.xlu0.b32.cont [4/16] 0.0, 128
    %719 = vxpose.xlu0.b32.cont [5/16] 0.0, 128
    %720 = vxpose.xlu0.b32.cont [6/16] 0.0, 128
    %721 = vxpose.xlu0.b32.cont [7/16] 0.0, 128
    %722 = vxpose.xlu0.b32.cont [8/16] 0.0, 128
    %723 = vxpose.xlu0.b32.cont [9/16] 0.0, 128
    %724 = vxpose.xlu0.b32.cont [10/16] 0.0, 128
    %725 = vxpose.xlu0.b32.cont [11/16] 0.0, 128
    %726 = vxpose.xlu0.b32.cont [12/16] 0.0, 128
    %727 = vxpose.xlu0.b32.cont [13/16] 0.0, 128
    %728 = vxpose.xlu0.b32.cont [14/16] 0.0, 128
    %729 = vxpose.xlu0.b32.cont [15/16] 0.0, 128
    %730 = vxpose.xlu0.b32.end [16/16] 0.0, 128
    %v731 = vpop.trf.xlu0
    %v732 = vpop.trf.xlu0
    %v733 = vpop.trf.xlu0
    %v734 = vpop.trf.xlu0
    %v735 = vpop.trf.xlu0
    %v736 = vpop.trf.xlu0
    %v737 = vpop.trf.xlu0
    %v738 = vpop.trf.xlu0
    %v739 = vpop.trf.xlu0
    %v740 = vpop.trf.xlu0
    %v741 = vpop.trf.xlu0
    %v742 = vpop.trf.xlu0
    %v743 = vpop.trf.xlu0
    %v744 = vpop.trf.xlu0
    %v745 = vpop.trf.xlu0
    %v746 = vpop.trf.xlu0
    %747 = vxpose.xlu0.b32.start [1/16] %v530, 128
    %748 = vxpose.xlu0.b32.cont [2/16] 0.0, 128
    %749 = vxpose.xlu0.b32.cont [3/16] 0.0, 128
    %750 = vxpose.xlu0.b32.cont [4/16] 0.0, 128
    %751 = vxpose.xlu0.b32.cont [5/16] 0.0, 128
    %752 = vxpose.xlu0.b32.cont [6/16] 0.0, 128
    %753 = vxpose.xlu0.b32.cont [7/16] 0.0, 128
    %754 = vxpose.xlu0.b32.cont [8/16] 0.0, 128
    %755 = vxpose.xlu0.b32.cont [9/16] 0.0, 128
    %756 = vxpose.xlu0.b32.cont [10/16] 0.0, 128
    %757 = vxpose.xlu0.b32.cont [11/16] 0.0, 128
    %758 = vxpose.xlu0.b32.cont [12/16] 0.0, 128
    %759 = vxpose.xlu0.b32.cont [13/16] 0.0, 128
    %760 = vxpose.xlu0.b32.cont [14/16] 0.0, 128
    %761 = vxpose.xlu0.b32.cont [15/16] 0.0, 128
    %762 = vxpose.xlu0.b32.end [16/16] 0.0, 128
    %v763 = vpop.trf.xlu0
    %v764 = vpop.trf.xlu0
    %v765 = vpop.trf.xlu0
    %v766 = vpop.trf.xlu0
    %v767 = vpop.trf.xlu0
    %v768 = vpop.trf.xlu0
    %v769 = vpop.trf.xlu0
    %v770 = vpop.trf.xlu0
    %v771 = vpop.trf.xlu0
    %v772 = vpop.trf.xlu0
    %v773 = vpop.trf.xlu0
    %v774 = vpop.trf.xlu0
    %v775 = vpop.trf.xlu0
    %v776 = vpop.trf.xlu0
    %v777 = vpop.trf.xlu0
    %v778 = vpop.trf.xlu0
    %779 = vxpose.xlu0.b32.start [1/16] %v532, 128
    %780 = vxpose.xlu0.b32.cont [2/16] 0.0, 128
    %781 = vxpose.xlu0.b32.cont [3/16] 0.0, 128
    %782 = vxpose.xlu0.b32.cont [4/16] 0.0, 128
    %783 = vxpose.xlu0.b32.cont [5/16] 0.0, 128
    %784 = vxpose.xlu0.b32.cont [6/16] 0.0, 128
    %785 = vxpose.xlu0.b32.cont [7/16] 0.0, 128
    %786 = vxpose.xlu0.b32.cont [8/16] 0.0, 128
    %787 = vxpose.xlu0.b32.cont [9/16] 0.0, 128
    %788 = vxpose.xlu0.b32.cont [10/16] 0.0, 128
    %789 = vxpose.xlu0.b32.cont [11/16] 0.0, 128
    %790 = vxpose.xlu0.b32.cont [12/16] 0.0, 128
    %791 = vxpose.xlu0.b32.cont [13/16] 0.0, 128
    %792 = vxpose.xlu0.b32.cont [14/16] 0.0, 128
    %793 = vxpose.xlu0.b32.cont [15/16] 0.0, 128
    %794 = vxpose.xlu0.b32.end [16/16] 0.0, 128
    %v795 = vpop.trf.xlu0
    %v796 = vpop.trf.xlu0
    %v797 = vpop.trf.xlu0
    %v798 = vpop.trf.xlu0
    %v799 = vpop.trf.xlu0
    %v800 = vpop.trf.xlu0
    %v801 = vpop.trf.xlu0
    %v802 = vpop.trf.xlu0
    %v803 = vpop.trf.xlu0
    %v804 = vpop.trf.xlu0
    %v805 = vpop.trf.xlu0
    %v806 = vpop.trf.xlu0
    %v807 = vpop.trf.xlu0
    %v808 = vpop.trf.xlu0
    %v809 = vpop.trf.xlu0
    %v810 = vpop.trf.xlu0
    %811 = vxpose.xlu0.b32.start [1/16] %v534, 128
    %812 = vxpose.xlu0.b32.cont [2/16] 0.0, 128
    %813 = vxpose.xlu0.b32.cont [3/16] 0.0, 128
    %814 = vxpose.xlu0.b32.cont [4/16] 0.0, 128
    %815 = vxpose.xlu0.b32.cont [5/16] 0.0, 128
    %816 = vxpose.xlu0.b32.cont [6/16] 0.0, 128
    %817 = vxpose.xlu0.b32.cont [7/16] 0.0, 128
    %818 = vxpose.xlu0.b32.cont [8/16] 0.0, 128
    %819 = vxpose.xlu0.b32.cont [9/16] 0.0, 128
    %820 = vxpose.xlu0.b32.cont [10/16] 0.0, 128
    %821 = vxpose.xlu0.b32.cont [11/16] 0.0, 128
    %822 = vxpose.xlu0.b32.cont [12/16] 0.0, 128
    %823 = vxpose.xlu0.b32.cont [13/16] 0.0, 128
    %824 = vxpose.xlu0.b32.cont [14/16] 0.0, 128
    %825 = vxpose.xlu0.b32.cont [15/16] 0.0, 128
    %826 = vxpose.xlu0.b32.end [16/16] 0.0, 128
    %v827 = vpop.trf.xlu0
    %v828 = vpop.trf.xlu0
    %v829 = vpop.trf.xlu0
    %v830 = vpop.trf.xlu0
    %v831 = vpop.trf.xlu0
    %v832 = vpop.trf.xlu0
    %v833 = vpop.trf.xlu0
    %v834 = vpop.trf.xlu0
    %v835 = vpop.trf.xlu0
    %v836 = vpop.trf.xlu0
    %v837 = vpop.trf.xlu0
    %v838 = vpop.trf.xlu0
    %v839 = vpop.trf.xlu0
    %v840 = vpop.trf.xlu0
    %v841 = vpop.trf.xlu0
    %v842 = vpop.trf.xlu0
    %843 = vxpose.xlu0.b32.start [1/16] %v536, 128
    %844 = vxpose.xlu0.b32.cont [2/16] 0.0, 128
    %845 = vxpose.xlu0.b32.cont [3/16] 0.0, 128
    %846 = vxpose.xlu0.b32.cont [4/16] 0.0, 128
    %847 = vxpose.xlu0.b32.cont [5/16] 0.0, 128
    %848 = vxpose.xlu0.b32.cont [6/16] 0.0, 128
    %849 = vxpose.xlu0.b32.cont [7/16] 0.0, 128
    %850 = vxpose.xlu0.b32.cont [8/16] 0.0, 128
    %851 = vxpose.xlu0.b32.cont [9/16] 0.0, 128
    %852 = vxpose.xlu0.b32.cont [10/16] 0.0, 128
    %853 = vxpose.xlu0.b32.cont [11/16] 0.0, 128
    %854 = vxpose.xlu0.b32.cont [12/16] 0.0, 128
    %855 = vxpose.xlu0.b32.cont [13/16] 0.0, 128
    %856 = vxpose.xlu0.b32.cont [14/16] 0.0, 128
    %857 = vxpose.xlu0.b32.cont [15/16] 0.0, 128
    %858 = vxpose.xlu0.b32.end [16/16] 0.0, 128
    %v859 = vpop.trf.xlu0
    %v860 = vpop.trf.xlu0
    %v861 = vpop.trf.xlu0
    %v862 = vpop.trf.xlu0
    %v863 = vpop.trf.xlu0
    %v864 = vpop.trf.xlu0
    %v865 = vpop.trf.xlu0
    %v866 = vpop.trf.xlu0
    %v867 = vpop.trf.xlu0
    %v868 = vpop.trf.xlu0
    %v869 = vpop.trf.xlu0
    %v870 = vpop.trf.xlu0
    %v871 = vpop.trf.xlu0
    %v872 = vpop.trf.xlu0
    %v873 = vpop.trf.xlu0
    %v874 = vpop.trf.xlu0
    %875 = vxpose.xlu0.b32.start [1/16] %v538, 128
    %876 = vxpose.xlu0.b32.cont [2/16] 0.0, 128
    %877 = vxpose.xlu0.b32.cont [3/16] 0.0, 128
    %878 = vxpose.xlu0.b32.cont [4/16] 0.0, 128
    %879 = vxpose.xlu0.b32.cont [5/16] 0.0, 128
    %880 = vxpose.xlu0.b32.cont [6/16] 0.0, 128
    %881 = vxpose.xlu0.b32.cont [7/16] 0.0, 128
    %882 = vxpose.xlu0.b32.cont [8/16] 0.0, 128
    %883 = vxpose.xlu0.b32.cont [9/16] 0.0, 128
    %884 = vxpose.xlu0.b32.cont [10/16] 0.0, 128
    %885 = vxpose.xlu0.b32.cont [11/16] 0.0, 128
    %886 = vxpose.xlu0.b32.cont [12/16] 0.0, 128
    %887 = vxpose.xlu0.b32.cont [13/16] 0.0, 128
    %888 = vxpose.xlu0.b32.cont [14/16] 0.0, 128
    %889 = vxpose.xlu0.b32.cont [15/16] 0.0, 128
    %890 = vxpose.xlu0.b32.end [16/16] 0.0, 128
    %v891 = vpop.trf.xlu0
    %v892 = vpop.trf.xlu0
    %v893 = vpop.trf.xlu0
    %v894 = vpop.trf.xlu0
    %v895 = vpop.trf.xlu0
    %v896 = vpop.trf.xlu0
    %v897 = vpop.trf.xlu0
    %v898 = vpop.trf.xlu0
    %v899 = vpop.trf.xlu0
    %v900 = vpop.trf.xlu0
    %v901 = vpop.trf.xlu0
    %v902 = vpop.trf.xlu0
    %v903 = vpop.trf.xlu0
    %v904 = vpop.trf.xlu0
    %v905 = vpop.trf.xlu0
    %v906 = vpop.trf.xlu0
    %907 = vxpose.xlu0.b32.start [1/16] %v636, 128
    %908 = vxpose.xlu0.b32.cont [2/16] 0.0, 128
    %909 = vxpose.xlu0.b32.cont [3/16] 0.0, 128
    %910 = vxpose.xlu0.b32.cont [4/16] 0.0, 128
    %911 = vxpose.xlu0.b32.cont [5/16] 0.0, 128
    %912 = vxpose.xlu0.b32.cont [6/16] 0.0, 128
    %913 = vxpose.xlu0.b32.cont [7/16] 0.0, 128
    %914 = vxpose.xlu0.b32.cont [8/16] 0.0, 128
    %915 = vxpose.xlu0.b32.cont [9/16] 0.0, 128
    %916 = vxpose.xlu0.b32.cont [10/16] 0.0, 128
    %917 = vxpose.xlu0.b32.cont [11/16] 0.0, 128
    %918 = vxpose.xlu0.b32.cont [12/16] 0.0, 128
    %919 = vxpose.xlu0.b32.cont [13/16] 0.0, 128
    %920 = vxpose.xlu0.b32.cont [14/16] 0.0, 128
    %921 = vxpose.xlu0.b32.cont [15/16] 0.0, 128
    %922 = vxpose.xlu0.b32.end [16/16] 0.0, 128
    %v923 = vpop.trf.xlu0
    %v924 = vpop.trf.xlu0
    %v925 = vpop.trf.xlu0
    %v926 = vpop.trf.xlu0
    %v927 = vpop.trf.xlu0
    %v928 = vpop.trf.xlu0
    %v929 = vpop.trf.xlu0
    %v930 = vpop.trf.xlu0
    %v931 = vpop.trf.xlu0
    %v932 = vpop.trf.xlu0
    %v933 = vpop.trf.xlu0
    %v934 = vpop.trf.xlu0
    %v935 = vpop.trf.xlu0
    %v936 = vpop.trf.xlu0
    %v937 = vpop.trf.xlu0
    %v938 = vpop.trf.xlu0
    %939 = vxpose.xlu0.b32.start [1/16] %v638, 128
    %940 = vxpose.xlu0.b32.cont [2/16] 0.0, 128
    %941 = vxpose.xlu0.b32.cont [3/16] 0.0, 128
    %942 = vxpose.xlu0.b32.cont [4/16] 0.0, 128
    %943 = vxpose.xlu0.b32.cont [5/16] 0.0, 128
    %944 = vxpose.xlu0.b32.cont [6/16] 0.0, 128
    %945 = vxpose.xlu0.b32.cont [7/16] 0.0, 128
    %946 = vxpose.xlu0.b32.cont [8/16] 0.0, 128
    %947 = vxpose.xlu0.b32.cont [9/16] 0.0, 128
    %948 = vxpose.xlu0.b32.cont [10/16] 0.0, 128
    %949 = vxpose.xlu0.b32.cont [11/16] 0.0, 128
    %950 = vxpose.xlu0.b32.cont [12/16] 0.0, 128
    %951 = vxpose.xlu0.b32.cont [13/16] 0.0, 128
    %952 = vxpose.xlu0.b32.cont [14/16] 0.0, 128
    %953 = vxpose.xlu0.b32.cont [15/16] 0.0, 128
    %954 = vxpose.xlu0.b32.end [16/16] 0.0, 128
    %v955 = vpop.trf.xlu0
    %v956 = vpop.trf.xlu0
    %v957 = vpop.trf.xlu0
    %v958 = vpop.trf.xlu0
    %v959 = vpop.trf.xlu0
    %v960 = vpop.trf.xlu0
    %v961 = vpop.trf.xlu0
    %v962 = vpop.trf.xlu0
    %v963 = vpop.trf.xlu0
    %v964 = vpop.trf.xlu0
    %v965 = vpop.trf.xlu0
    %v966 = vpop.trf.xlu0
    %v967 = vpop.trf.xlu0
    %v968 = vpop.trf.xlu0
    %v969 = vpop.trf.xlu0
    %v970 = vpop.trf.xlu0
    %971 = vxpose.xlu0.b32.start [1/16] %v640, 128
    %972 = vxpose.xlu0.b32.cont [2/16] 0.0, 128
    %973 = vxpose.xlu0.b32.cont [3/16] 0.0, 128
    %974 = vxpose.xlu0.b32.cont [4/16] 0.0, 128
    %975 = vxpose.xlu0.b32.cont [5/16] 0.0, 128
    %976 = vxpose.xlu0.b32.cont [6/16] 0.0, 128
    %977 = vxpose.xlu0.b32.cont [7/16] 0.0, 128
    %978 = vxpose.xlu0.b32.cont [8/16] 0.0, 128
    %979 = vxpose.xlu0.b32.cont [9/16] 0.0, 128
    %980 = vxpose.xlu0.b32.cont [10/16] 0.0, 128
    %981 = vxpose.xlu0.b32.cont [11/16] 0.0, 128
    %982 = vxpose.xlu0.b32.cont [12/16] 0.0, 128
    %983 = vxpose.xlu0.b32.cont [13/16] 0.0, 128
    %984 = vxpose.xlu0.b32.cont [14/16] 0.0, 128
    %985 = vxpose.xlu0.b32.cont [15/16] 0.0, 128
    %986 = vxpose.xlu0.b32.end [16/16] 0.0, 128
    %v987 = vpop.trf.xlu0
    %v988 = vpop.trf.xlu0
    %v989 = vpop.trf.xlu0
    %v990 = vpop.trf.xlu0
    %v991 = vpop.trf.xlu0
    %v992 = vpop.trf.xlu0
    %v993 = vpop.trf.xlu0
    %v994 = vpop.trf.xlu0
    %v995 = vpop.trf.xlu0
    %v996 = vpop.trf.xlu0
    %v997 = vpop.trf.xlu0
    %v998 = vpop.trf.xlu0
    %v999 = vpop.trf.xlu0
    %v1000 = vpop.trf.xlu0
    %v1001 = vpop.trf.xlu0
    %v1002 = vpop.trf.xlu0
    %1003 = vxpose.xlu0.b32.start [1/16] %v642, 128
    %1004 = vxpose.xlu0.b32.cont [2/16] 0.0, 128
    %1005 = vxpose.xlu0.b32.cont [3/16] 0.0, 128
    %1006 = vxpose.xlu0.b32.cont [4/16] 0.0, 128
    %1007 = vxpose.xlu0.b32.cont [5/16] 0.0, 128
    %1008 = vxpose.xlu0.b32.cont [6/16] 0.0, 128
    %1009 = vxpose.xlu0.b32.cont [7/16] 0.0, 128
    %1010 = vxpose.xlu0.b32.cont [8/16] 0.0, 128
    %1011 = vxpose.xlu0.b32.cont [9/16] 0.0, 128
    %1012 = vxpose.xlu0.b32.cont [10/16] 0.0, 128
    %1013 = vxpose.xlu0.b32.cont [11/16] 0.0, 128
    %1014 = vxpose.xlu0.b32.cont [12/16] 0.0, 128
    %1015 = vxpose.xlu0.b32.cont [13/16] 0.0, 128
    %1016 = vxpose.xlu0.b32.cont [14/16] 0.0, 128
    %1017 = vxpose.xlu0.b32.cont [15/16] 0.0, 128
    %1018 = vxpose.xlu0.b32.end [16/16] 0.0, 128
    %v1019 = vpop.trf.xlu0
    %v1020 = vpop.trf.xlu0
    %v1021 = vpop.trf.xlu0
    %v1022 = vpop.trf.xlu0
    %v1023 = vpop.trf.xlu0
    %v1024 = vpop.trf.xlu0
    %v1025 = vpop.trf.xlu0
    %v1026 = vpop.trf.xlu0
    %v1027 = vpop.trf.xlu0
    %v1028 = vpop.trf.xlu0
    %v1029 = vpop.trf.xlu0
    %v1030 = vpop.trf.xlu0
    %v1031 = vpop.trf.xlu0
    %v1032 = vpop.trf.xlu0
    %v1033 = vpop.trf.xlu0
    %v1034 = vpop.trf.xlu0
    %1035 = vxpose.xlu0.b32.start [1/16] %v644, 128
    %1036 = vxpose.xlu0.b32.cont [2/16] 0.0, 128
    %1037 = vxpose.xlu0.b32.cont [3/16] 0.0, 128
    %1038 = vxpose.xlu0.b32.cont [4/16] 0.0, 128
    %1039 = vxpose.xlu0.b32.cont [5/16] 0.0, 128
    %1040 = vxpose.xlu0.b32.cont [6/16] 0.0, 128
    %1041 = vxpose.xlu0.b32.cont [7/16] 0.0, 128
    %1042 = vxpose.xlu0.b32.cont [8/16] 0.0, 128
    %1043 = vxpose.xlu0.b32.cont [9/16] 0.0, 128
    %1044 = vxpose.xlu0.b32.cont [10/16] 0.0, 128
    %1045 = vxpose.xlu0.b32.cont [11/16] 0.0, 128
    %1046 = vxpose.xlu0.b32.cont [12/16] 0.0, 128
    %1047 = vxpose.xlu0.b32.cont [13/16] 0.0, 128
    %1048 = vxpose.xlu0.b32.cont [14/16] 0.0, 128
    %1049 = vxpose.xlu0.b32.cont [15/16] 0.0, 128
    %1050 = vxpose.xlu0.b32.end [16/16] 0.0, 128
    %v1051 = vpop.trf.xlu0
    %v1052 = vpop.trf.xlu0
    %v1053 = vpop.trf.xlu0
    %v1054 = vpop.trf.xlu0
    %v1055 = vpop.trf.xlu0
    %v1056 = vpop.trf.xlu0
    %v1057 = vpop.trf.xlu0
    %v1058 = vpop.trf.xlu0
    %v1059 = vpop.trf.xlu0
    %v1060 = vpop.trf.xlu0
    %v1061 = vpop.trf.xlu0
    %v1062 = vpop.trf.xlu0
    %v1063 = vpop.trf.xlu0
    %v1064 = vpop.trf.xlu0
    %v1065 = vpop.trf.xlu0
    %v1066 = vpop.trf.xlu0
    %1067 = vxpose.xlu0.b32.start [1/16] %v646, 128
    %1068 = vxpose.xlu0.b32.cont [2/16] 0.0, 128
    %1069 = vxpose.xlu0.b32.cont [3/16] 0.0, 128
    %1070 = vxpose.xlu0.b32.cont [4/16] 0.0, 128
    %1071 = vxpose.xlu0.b32.cont [5/16] 0.0, 128
    %1072 = vxpose.xlu0.b32.cont [6/16] 0.0, 128
    %1073 = vxpose.xlu0.b32.cont [7/16] 0.0, 128
    %1074 = vxpose.xlu0.b32.cont [8/16] 0.0, 128
    %1075 = vxpose.xlu0.b32.cont [9/16] 0.0, 128
    %1076 = vxpose.xlu0.b32.cont [10/16] 0.0, 128
    %1077 = vxpose.xlu0.b32.cont [11/16] 0.0, 128
    %1078 = vxpose.xlu0.b32.cont [12/16] 0.0, 128
    %1079 = vxpose.xlu0.b32.cont [13/16] 0.0, 128
    %1080 = vxpose.xlu0.b32.cont [14/16] 0.0, 128
    %1081 = vxpose.xlu0.b32.cont [15/16] 0.0, 128
    %1082 = vxpose.xlu0.b32.end [16/16] 0.0, 128
    %v1083 = vpop.trf.xlu0
    %v1084 = vpop.trf.xlu0
    %v1085 = vpop.trf.xlu0
    %v1086 = vpop.trf.xlu0
    %v1087 = vpop.trf.xlu0
    %v1088 = vpop.trf.xlu0
    %v1089 = vpop.trf.xlu0
    %v1090 = vpop.trf.xlu0
    %v1091 = vpop.trf.xlu0
    %v1092 = vpop.trf.xlu0
    %v1093 = vpop.trf.xlu0
    %v1094 = vpop.trf.xlu0
    %v1095 = vpop.trf.xlu0
    %v1096 = vpop.trf.xlu0
    %v1097 = vpop.trf.xlu0
    %v1098 = vpop.trf.xlu0
    %1099 = vxpose.xlu0.b32.start [1/16] %v648, 128
    %1100 = vxpose.xlu0.b32.cont [2/16] 0.0, 128
    %1101 = vxpose.xlu0.b32.cont [3/16] 0.0, 128
    %1102 = vxpose.xlu0.b32.cont [4/16] 0.0, 128
    %1103 = vxpose.xlu0.b32.cont [5/16] 0.0, 128
    %1104 = vxpose.xlu0.b32.cont [6/16] 0.0, 128
    %1105 = vxpose.xlu0.b32.cont [7/16] 0.0, 128
    %1106 = vxpose.xlu0.b32.cont [8/16] 0.0, 128
    %1107 = vxpose.xlu0.b32.cont [9/16] 0.0, 128
    %1108 = vxpose.xlu0.b32.cont [10/16] 0.0, 128
    %1109 = vxpose.xlu0.b32.cont [11/16] 0.0, 128
    %1110 = vxpose.xlu0.b32.cont [12/16] 0.0, 128
    %1111 = vxpose.xlu0.b32.cont [13/16] 0.0, 128
    %1112 = vxpose.xlu0.b32.cont [14/16] 0.0, 128
    %1113 = vxpose.xlu0.b32.cont [15/16] 0.0, 128
    %1114 = vxpose.xlu0.b32.end [16/16] 0.0, 128
    %v1115 = vpop.trf.xlu0
    %v1116 = vpop.trf.xlu0
    %v1117 = vpop.trf.xlu0
    %v1118 = vpop.trf.xlu0
    %v1119 = vpop.trf.xlu0
    %v1120 = vpop.trf.xlu0
    %v1121 = vpop.trf.xlu0
    %v1122 = vpop.trf.xlu0
    %v1123 = vpop.trf.xlu0
    %v1124 = vpop.trf.xlu0
    %v1125 = vpop.trf.xlu0
    %v1126 = vpop.trf.xlu0
    %v1127 = vpop.trf.xlu0
    %v1128 = vpop.trf.xlu0
    %v1129 = vpop.trf.xlu0
    %v1130 = vpop.trf.xlu0
    %1131 = vxpose.xlu0.b32.start [1/16] %v650, 128
    %1132 = vxpose.xlu0.b32.cont [2/16] 0.0, 128
    %1133 = vxpose.xlu0.b32.cont [3/16] 0.0, 128
    %1134 = vxpose.xlu0.b32.cont [4/16] 0.0, 128
    %1135 = vxpose.xlu0.b32.cont [5/16] 0.0, 128
    %1136 = vxpose.xlu0.b32.cont [6/16] 0.0, 128
    %1137 = vxpose.xlu0.b32.cont [7/16] 0.0, 128
    %1138 = vxpose.xlu0.b32.cont [8/16] 0.0, 128
    %1139 = vxpose.xlu0.b32.cont [9/16] 0.0, 128
    %1140 = vxpose.xlu0.b32.cont [10/16] 0.0, 128
    %1141 = vxpose.xlu0.b32.cont [11/16] 0.0, 128
    %1142 = vxpose.xlu0.b32.cont [12/16] 0.0, 128
    %1143 = vxpose.xlu0.b32.cont [13/16] 0.0, 128
    %1144 = vxpose.xlu0.b32.cont [14/16] 0.0, 128
    %1145 = vxpose.xlu0.b32.cont [15/16] 0.0, 128
    %1146 = vxpose.xlu0.b32.end [16/16] 0.0, 128
    %v1147 = vpop.trf.xlu0
    %v1148 = vpop.trf.xlu0
    %v1149 = vpop.trf.xlu0
    %v1150 = vpop.trf.xlu0
    %v1151 = vpop.trf.xlu0
    %v1152 = vpop.trf.xlu0
    %v1153 = vpop.trf.xlu0
    %v1154 = vpop.trf.xlu0
    %v1155 = vpop.trf.xlu0
    %v1156 = vpop.trf.xlu0
    %v1157 = vpop.trf.xlu0
    %v1158 = vpop.trf.xlu0
    %v1159 = vpop.trf.xlu0
    %v1160 = vpop.trf.xlu0
    %v1161 = vpop.trf.xlu0
    %v1162 = vpop.trf.xlu0
    %v1163 = vrot.slane %v731, 4
    %v1164 = vsel %vm123, %v1163, %v667
    %v1166 = vunpack.c.l.s4 1983009808
    %v1167 = vunpack.c.0.s8 %v1166
    %v1168 = vperm.slane %v1164, %v1167
    %v1169 = vrot.slane %v763, 4
    %v1170 = vsel %vm123, %v1169, %v699
    %v1172 = vunpack.c.l.s4 1983009808
    %v1173 = vunpack.c.0.s8 %v1172
    %v1174 = vperm.slane %v1170, %v1173
    %v1175 = vrot.slane %v859, 4
    %v1176 = vsel %vm123, %v1175, %v795
    %v1178 = vunpack.c.l.s4 1983009808
    %v1179 = vunpack.c.0.s8 %v1178
    %v1180 = vperm.slane %v1176, %v1179
    %v1181 = vrot.slane %v891, 4
    %v1182 = vsel %vm123, %v1181, %v827
    %v1184 = vunpack.c.l.s4 1983009808
    %v1185 = vunpack.c.0.s8 %v1184
    %v1186 = vperm.slane %v1182, %v1185
    %v1187 = vrot.slane %v1174, 4
    %v1188 = vsel %vm123, %v1187, %v1168
    %v1190 = vunpack.c.l.s4 1934713408
    %v1191 = vunpack.c.0.s8 %v1190
    %v1192 = vperm.slane %v1188, %v1191
    %v1193 = vrot.slane %v1186, 4
    %v1194 = vsel %vm123, %v1193, %v1180
    %v1196 = vunpack.c.l.s4 1934713408
    %v1197 = vunpack.c.0.s8 %v1196
    %v1198 = vperm.slane %v1194, %v1197
    %v1199 = vrot.slane %v1198, 4
    %v1200 = vsel %vm123, %v1199, %v1192
    %v1201 = vrot.slane %v1192, 4
    %v1202 = vsel %vm123, %v1198, %v1201
    %v1203 = vrot.slane %v987, 4
    %v1204 = vsel %vm123, %v1203, %v923
    %v1206 = vunpack.c.l.s4 1983009808
    %v1207 = vunpack.c.0.s8 %v1206
    %v1208 = vperm.slane %v1204, %v1207
    %v1209 = vrot.slane %v1019, 4
    %v1210 = vsel %vm123, %v1209, %v955
    %v1212 = vunpack.c.l.s4 1983009808
    %v1213 = vunpack.c.0.s8 %v1212
    %v1214 = vperm.slane %v1210, %v1213
    %v1215 = vrot.slane %v1115, 4
    %v1216 = vsel %vm123, %v1215, %v1051
    %v1218 = vunpack.c.l.s4 1983009808
    %v1219 = vunpack.c.0.s8 %v1218
    %v1220 = vperm.slane %v1216, %v1219
    %v1221 = vrot.slane %v1147, 4
    %v1222 = vsel %vm123, %v1221, %v1083
    %v1224 = vunpack.c.l.s4 1983009808
    %v1225 = vunpack.c.0.s8 %v1224
    %v1226 = vperm.slane %v1222, %v1225
    %v1227 = vrot.slane %v1214, 4
    %v1228 = vsel %vm123, %v1227, %v1208
    %v1230 = vunpack.c.l.s4 1934713408
    %v1231 = vunpack.c.0.s8 %v1230
    %v1232 = vperm.slane %v1228, %v1231
    %v1233 = vrot.slane %v1226, 4
    %v1234 = vsel %vm123, %v1233, %v1220
    %v1236 = vunpack.c.l.s4 1934713408
    %v1237 = vunpack.c.0.s8 %v1236
    %v1238 = vperm.slane %v1234, %v1237
    %v1239 = vrot.slane %v1238, 4
    %v1240 = vsel %vm123, %v1239, %v1232
    %v1241 = vrot.slane %v1232, 4
    %v1242 = vsel %vm123, %v1238, %v1241
    %v1243 = vld [vmem:[#allocation2] sm:$0xff]
    %v1244 = vld [vmem:[%s6] sm:$0x1]
    %v1246 = vperm.slane %v1244, 0
    %vm1248 = vcmask 64512
    %v1250 = vsel %vm1248, %v1200, 0
    %v1253 = vsel %vm1248, %v1240, 0
    %v1256 = vsel %vm1248, %v1202, 0
    %v1259 = vsel %vm1248, %v1242, 0
    %1261 = vmatpush.msra.mxu0 0.0
    %1262 = vmatpush.msra.mxu0 0.0
    %1263 = vmatpush.msra.mxu0 0.0
    %1264 = vmatpush.msra.mxu0 0.0
    %1265 = vmatpush.msra.mxu0 0.0
    %1266 = vmatpush.msra.mxu0 0.0
    %1267 = vmatpush.msra.mxu0 0.0
    %1268 = vmatpush.msra.mxu0 0.0
    %1269 = vmatpush.msra.mxu0 0.0
    %1270 = vmatpush.msra.mxu0 0.0
    %1271 = vmatpush.msra.mxu0 0.0
    %1272 = vmatpush.msra.mxu0 0.0
    %1273 = vmatpush.msra.mxu0 0.0
    %1274 = vmatpush.msra.mxu0 0.0
    %1275 = vmatpush.msra.mxu0 0.0
    %1276 = vmatpush.msra.mxu0 %v1243
    %1277 = vmatmul.f32.gmra.mxu0 %v1250
    %v1278 = vpop.f32.mrf.mxu0
    %v1279 = vadd.f32 %v1246, %v1278
    %1280 = vmatmul.f32.gmra.mxu0 %v1253
    %v1281 = vpop.f32.mrf.mxu0
    %v1282 = vadd.f32 %v1246, %v1281
    %1283 = vmatmul.f32.gmra.mxu0 %v1256
    %v1284 = vpop.f32.mrf.mxu0
    %v1285 = vadd.f32 %v1246, %v1284
    %1286 = vmatmul.f32.gmra.mxu0 %v1259
    %v1287 = vpop.f32.mrf.mxu0
    %v1288 = vadd.f32 %v1246, %v1287
    %1289 = vdwg.mxu0
    %v1291 = vsel %vm1248, %v1279, 0
    %v1294 = vsel %vm1248, %v1282, 0
    %1296 = vmatpush.msra.mxu0 0.0
    %1297 = vmatpush.msra.mxu0 0.0
    %1298 = vmatpush.msra.mxu0 0.0
    %1299 = vmatpush.msra.mxu0 0.0
    %1300 = vmatpush.msra.mxu0 0.0
    %1301 = vmatpush.msra.mxu0 0.0
    %1302 = vmatpush.msra.mxu0 0.0
    %1303 = vmatpush.msra.mxu0 0.0
    %1304 = vmatpush.msra.mxu0 0.0
    %1305 = vmatpush.msra.mxu0 0.0
    %1306 = vmatpush.msra.mxu0 0.0
    %1307 = vmatpush.msra.mxu0 0.0
    %1308 = vmatpush.msra.mxu0 0.0
    %1309 = vmatpush.msra.mxu0 0.0
    %1310 = vmatpush.msra.mxu0 0.0
    %1311 = vmatpush.msra.mxu0 %v160
    %1312 = vmatmul.f32.gmra.mxu0 %v1291
    %v1313 = vpop.f32.mrf.mxu0
    %v1314 = vadd.f32 0.0, %v1313
    %1315 = vmatmul.f32.gmra.mxu0 %v1294
    %v1316 = vpop.f32.mrf.mxu0
    %v1317 = vadd.f32 0.0, %v1316
    %1318 = vdwg.mxu0
    %v1320 = vsel %vm1248, %v1285, 0
    %v1323 = vsel %vm1248, %v1288, 0
    %1325 = vmatpush.msra.mxu0 0.0
    %1326 = vmatpush.msra.mxu0 0.0
    %1327 = vmatpush.msra.mxu0 0.0
    %1328 = vmatpush.msra.mxu0 0.0
    %1329 = vmatpush.msra.mxu0 0.0
    %1330 = vmatpush.msra.mxu0 0.0
    %1331 = vmatpush.msra.mxu0 0.0
    %1332 = vmatpush.msra.mxu0 0.0
    %1333 = vmatpush.msra.mxu0 0.0
    %1334 = vmatpush.msra.mxu0 0.0
    %1335 = vmatpush.msra.mxu0 0.0
    %1336 = vmatpush.msra.mxu0 0.0
    %1337 = vmatpush.msra.mxu0 0.0
    %1338 = vmatpush.msra.mxu0 0.0
    %1339 = vmatpush.msra.mxu0 0.0
    %1340 = vmatpush.msra.mxu0 %v162
    %1341 = vmatmul.f32.gmra.mxu0 %v1320
    %v1342 = vpop.f32.mrf.mxu0
    %v1343 = vadd.f32 0.0, %v1342
    %1344 = vmatmul.f32.gmra.mxu0 %v1323
    %v1345 = vpop.f32.mrf.mxu0
    %v1346 = vadd.f32 0.0, %v1345
    %1347 = vdwg.mxu0
    %v1348 = vtanh.pop %v1314
    %v1349 = vtanh.pop %v1317
    %v1350 = vtanh.pop %v1343
    %v1351 = vtanh.pop %v1346
    %v1352 = vld [vmem:[#allocation7] sm:$0xff]
    %v1353 = vld [vmem:[#allocation8] sm:$0xff]
    %v1354 = vld [vmem:[#allocation8 + $0x8] sm:$0xff]
    %vm1355 = vcmask 130048
    %v1357 = vsel %vm1355, %v1348, 0
    %v1360 = vsel %vm1355, %v1349, 0
    %v1363 = vsel %vm1355, %v1350, 0
    %v1366 = vsel %vm1355, %v1351, 0
    %1368 = vmatpush.msra.mxu0 0.0
    %1369 = vmatpush.msra.mxu0 0.0
    %1370 = vmatpush.msra.mxu0 0.0
    %1371 = vmatpush.msra.mxu0 0.0
    %1372 = vmatpush.msra.mxu0 0.0
    %1373 = vmatpush.msra.mxu0 0.0
    %1374 = vmatpush.msra.mxu0 0.0
    %1375 = vmatpush.msra.mxu0 0.0
    %1376 = vmatpush.msra.mxu0 0.0
    %1377 = vmatpush.msra.mxu0 0.0
    %1378 = vmatpush.msra.mxu0 0.0
    %1379 = vmatpush.msra.mxu0 0.0
    %1380 = vmatpush.msra.mxu0 0.0
    %1381 = vmatpush.msra.mxu0 0.0
    %1382 = vmatpush.msra.mxu0 %v1354
    %1383 = vmatpush.msra.mxu0 %v1353
    %1384 = vmatmul.f32.gmra.mxu0 %v1357
    %v1385 = vpop.f32.mrf.mxu0
    %v1386 = vadd.f32 0.0, %v1385
    %1387 = vmatmul.f32.gmra.mxu0 %v1360
    %v1388 = vpop.f32.mrf.mxu0
    %v1389 = vadd.f32 0.0, %v1388
    %1390 = vmatmul.f32.gmra.mxu0 %v1363
    %v1391 = vpop.f32.mrf.mxu0
    %v1392 = vadd.f32 0.0, %v1391
    %1393 = vmatmul.f32.gmra.mxu0 %v1366
    %v1394 = vpop.f32.mrf.mxu0
    %v1395 = vadd.f32 0.0, %v1394
    %1396 = vdwg.mxu0
    %1397 = vmatpush.msra.mxu0 0.0
    %1398 = vmatpush.msra.mxu0 0.0
    %1399 = vmatpush.msra.mxu0 0.0
    %1400 = vmatpush.msra.mxu0 0.0
    %1401 = vmatpush.msra.mxu0 0.0
    %1402 = vmatpush.msra.mxu0 0.0
    %1403 = vmatpush.msra.mxu0 0.0
    %1404 = vmatpush.msra.mxu0 0.0
    %1405 = vmatpush.msra.mxu0 0.0
    %1406 = vmatpush.msra.mxu0 0.0
    %1407 = vmatpush.msra.mxu0 0.0
    %1408 = vmatpush.msra.mxu0 0.0
    %1409 = vmatpush.msra.mxu0 0.0
    %1410 = vmatpush.msra.mxu0 0.0
    %1411 = vmatpush.msra.mxu0 0.0
    %1412 = vmatpush.msra.mxu0 %v1352
    %1413 = vmatmul.f32.gmra.mxu0 %v1250
    %v1414 = vpop.f32.mrf.mxu0
    %v1415 = vadd.f32 %v1386, %v1414
    %1416 = vmatmul.f32.gmra.mxu0 %v1253
    %v1417 = vpop.f32.mrf.mxu0
    %v1418 = vadd.f32 %v1389, %v1417
    %1419 = vmatmul.f32.gmra.mxu0 %v1256
    %v1420 = vpop.f32.mrf.mxu0
    %v1421 = vadd.f32 %v1392, %v1420
    %1422 = vmatmul.f32.gmra.mxu0 %v1259
    %v1423 = vpop.f32.mrf.mxu0
    %v1424 = vadd.f32 %v1395, %v1423
    %1425 = vdwg.mxu0
    %v1426 = vld [vmem:[%s12] sm:$0x1]
    %v1428 = vperm.slane %v1426, 0
    %v1430 = vadd.f32 %v1415, %v1428
    %v1431 = vadd.f32 %v1418, %v1428
    %v1432 = vadd.f32 %v1421, %v1428
    %v1433 = vadd.f32 %v1424, %v1428
    %v1434 = vmax.f32 %v1430, 0.0
    %v1435 = vmax.f32 %v1431, 0.0
    %v1436 = vmax.f32 %v1432, 0.0
    %v1437 = vmax.f32 %v1433, 0.0
    %v1438 = vld [vmem:[%s15] sm:$0xff]
    %v1439 = vld [vmem:[%s15 + $0x8] sm:$0xff]
    %v1440 = vld [vmem:[%s15 + $0x10] sm:$0xff]
    %v1441 = vld [vmem:[%s15 + $0x18] sm:$0xff]
    %vm1442 = vcmask 261120
    %v1444 = vsel %vm1442, %v1434, 0
    %v1447 = vsel %vm1442, %v1435, 0
    %v1450 = vsel %vm1442, %v1436, 0
    %v1453 = vsel %vm1442, %v1437, 0
    %1455 = vmatpush.msra.mxu0 0.0
    %1456 = vmatpush.msra.mxu0 0.0
    %1457 = vmatpush.msra.mxu0 0.0
    %1458 = vmatpush.msra.mxu0 0.0
    %1459 = vmatpush.msra.mxu0 0.0
    %1460 = vmatpush.msra.mxu0 0.0
    %1461 = vmatpush.msra.mxu0 0.0
    %1462 = vmatpush.msra.mxu0 0.0
    %1463 = vmatpush.msra.mxu0 0.0
    %1464 = vmatpush.msra.mxu0 0.0
    %1465 = vmatpush.msra.mxu0 0.0
    %1466 = vmatpush.msra.mxu0 0.0
    %1467 = vmatpush.msra.mxu0 %v1441
    %1468 = vmatpush.msra.mxu0 %v1440
    %1469 = vmatpush.msra.mxu0 %v1439
    %1470 = vmatpush.msra.mxu0 %v1438
    %1471 = vmatmul.f32.gmra.mxu0 %v1444
    %v1472 = vpop.f32.mrf.mxu0
    %v1473 = vadd.f32 0.0, %v1472
    %1474 = vmatmul.f32.gmra.mxu0 %v1447
    %v1475 = vpop.f32.mrf.mxu0
    %v1476 = vadd.f32 0.0, %v1475
    %1477 = vmatmul.f32.gmra.mxu0 %v1450
    %v1478 = vpop.f32.mrf.mxu0
    %v1479 = vadd.f32 0.0, %v1478
    %1480 = vmatmul.f32.gmra.mxu0 %v1453
    %v1481 = vpop.f32.mrf.mxu0
    %v1482 = vadd.f32 0.0, %v1481
    %1483 = vdwg.mxu0
    %v1484 = vadd.f32 %v1200, %v1473
    %v1485 = vadd.f32 %v1240, %v1476
    %v1486 = vadd.f32 %v1202, %v1479
    %v1487 = vadd.f32 %v1242, %v1482
    %v1488 = vld [vmem:[%s16] sm:$0x1]
    %v1490 = vperm.slane %v1488, 0
    %v1492 = vadd.f32 %v1484, %v1490
    %v1493 = vadd.f32 %v1485, %v1490
    %v1494 = vadd.f32 %v1486, %v1490
    %v1495 = vadd.f32 %v1487, %v1490
    %1496 = vxpose.xlu0.b32.start [1/16] %v1492, 128
    %1497 = vxpose.xlu0.b32.cont [2/16] %v1493, 128
    %1498 = vxpose.xlu0.b32.cont [3/16] 0.0, 128
    %1499 = vxpose.xlu0.b32.cont [4/16] 0.0, 128
    %1500 = vxpose.xlu0.b32.cont [5/16] 0.0, 128
    %1501 = vxpose.xlu0.b32.cont [6/16] 0.0, 128
    %1502 = vxpose.xlu0.b32.cont [7/16] 0.0, 128
    %1503 = vxpose.xlu0.b32.cont [8/16] 0.0, 128
    %1504 = vxpose.xlu0.b32.cont [9/16] 0.0, 128
    %1505 = vxpose.xlu0.b32.cont [10/16] 0.0, 128
    %1506 = vxpose.xlu0.b32.cont [11/16] 0.0, 128
    %1507 = vxpose.xlu0.b32.cont [12/16] 0.0, 128
    %1508 = vxpose.xlu0.b32.cont [13/16] 0.0, 128
    %1509 = vxpose.xlu0.b32.cont [14/16] 0.0, 128
    %1510 = vxpose.xlu0.b32.cont [15/16] 0.0, 128
    %1511 = vxpose.xlu0.b32.end [16/16] 0.0, 128
    %v1512 = vpop.trf.xlu0
    %v1513 = vpop.trf.xlu0
    %v1514 = vpop.trf.xlu0
    %v1515 = vpop.trf.xlu0
    %v1516 = vpop.trf.xlu0
    %v1517 = vpop.trf.xlu0
    %v1518 = vpop.trf.xlu0
    %v1519 = vpop.trf.xlu0
    %v1520 = vpop.trf.xlu0
    %v1521 = vpop.trf.xlu0
    %v1522 = vpop.trf.xlu0
    %v1523 = vpop.trf.xlu0
    %v1524 = vpop.trf.xlu0
    %v1525 = vpop.trf.xlu0
    %v1526 = vpop.trf.xlu0
    %v1527 = vpop.trf.xlu0
    %1528 = vxpose.xlu0.b32.start [1/16] %v1494, 128
    %1529 = vxpose.xlu0.b32.cont [2/16] %v1495, 128
    %1530 = vxpose.xlu0.b32.cont [3/16] 0.0, 128
    %1531 = vxpose.xlu0.b32.cont [4/16] 0.0, 128
    %1532 = vxpose.xlu0.b32.cont [5/16] 0.0, 128
    %1533 = vxpose.xlu0.b32.cont [6/16] 0.0, 128
    %1534 = vxpose.xlu0.b32.cont [7/16] 0.0, 128
    %1535 = vxpose.xlu0.b32.cont [8/16] 0.0, 128
    %1536 = vxpose.xlu0.b32.cont [9/16] 0.0, 128
    %1537 = vxpose.xlu0.b32.cont [10/16] 0.0, 128
    %1538 = vxpose.xlu0.b32.cont [11/16] 0.0, 128
    %1539 = vxpose.xlu0.b32.cont [12/16] 0.0, 128
    %1540 = vxpose.xlu0.b32.cont [13/16] 0.0, 128
    %1541 = vxpose.xlu0.b32.cont [14/16] 0.0, 128
    %1542 = vxpose.xlu0.b32.cont [15/16] 0.0, 128
    %1543 = vxpose.xlu0.b32.end [16/16] 0.0, 128
    %v1544 = vpop.trf.xlu0
    %v1545 = vpop.trf.xlu0
    %v1546 = vpop.trf.xlu0
    %v1547 = vpop.trf.xlu0
    %v1548 = vpop.trf.xlu0
    %v1549 = vpop.trf.xlu0
    %v1550 = vpop.trf.xlu0
    %v1551 = vpop.trf.xlu0
    %v1552 = vpop.trf.xlu0
    %v1553 = vpop.trf.xlu0
    %v1554 = vpop.trf.xlu0
    %v1555 = vpop.trf.xlu0
    %v1556 = vpop.trf.xlu0
    %v1557 = vpop.trf.xlu0
    %v1558 = vpop.trf.xlu0
    %v1559 = vpop.trf.xlu0
    %v1560 = vrot.slane %v1512, 4
    %v1561 = vsel %vm123, 0.0, %v1560
    %v1563 = vunpack.c.l.s4 1983009808
    %v1564 = vunpack.c.0.s8 %v1563
    %v1565 = vperm.slane %v1512, %v1564
    %v1567 = vunpack.c.l.s4 1983009808
    %v1568 = vunpack.c.0.s8 %v1567
    %v1569 = vperm.slane %v1561, %v1568
    %v1570 = vrot.slane %v1544, 4
    %v1571 = vsel %vm123, 0.0, %v1570
    %v1573 = vunpack.c.l.s4 1983009808
    %v1574 = vunpack.c.0.s8 %v1573
    %v1575 = vperm.slane %v1544, %v1574
    %v1577 = vunpack.c.l.s4 1983009808
    %v1578 = vunpack.c.0.s8 %v1577
    %v1579 = vperm.slane %v1571, %v1578
    %v1580 = vrot.slane %v1575, 4
    %v1581 = vsel %vm123, %v1580, %v1565
    %v1582 = vrot.slane %v1565, 4
    %v1583 = vsel %vm123, %v1575, %v1582
    %v1585 = vunpack.c.l.s4 1934713408
    %v1586 = vunpack.c.0.s8 %v1585
    %v1587 = vperm.slane %v1581, %v1586
    %v1589 = vunpack.c.l.s4 1934713408
    %v1590 = vunpack.c.0.s8 %v1589
    %v1591 = vperm.slane %v1583, %v1590
    %v1592 = vrot.slane %v1579, 4
    %v1593 = vsel %vm123, %v1592, %v1569
    %v1594 = vrot.slane %v1569, 4
    %v1595 = vsel %vm123, %v1579, %v1594
    %v1597 = vunpack.c.l.s4 1934713408
    %v1598 = vunpack.c.0.s8 %v1597
    %v1599 = vperm.slane %v1593, %v1598
    %v1601 = vunpack.c.l.s4 1934713408
    %v1602 = vunpack.c.0.s8 %v1601
    %v1603 = vperm.slane %v1595, %v1602
    %v1604 = vrot.slane %v1587, 4
    %v1605 = vsel %vm123, 0.0, %v1604
    %v1606 = vrot.slane %v1591, 4
    %v1607 = vsel %vm123, 0.0, %v1606
    %v1608 = vrot.slane %v1599, 4
    %v1609 = vsel %vm123, 0.0, %v1608
    %v1610 = vrot.slane %v1603, 4
    %v1611 = vsel %vm123, 0.0, %v1610
    %vm1612 = vcmask 123904
    %1613 = vst.msk [vmem:[#allocation10] sm:$0x3] %vm1612, %v1587
    %1614 = vst.msk [vmem:[#allocation10 + $0x2] sm:$0x3] %vm1612, %v1605
    %1615 = vst.msk [vmem:[#allocation10 + $0x4] sm:$0x3] %vm1612, %v1591
    %1616 = vst.msk [vmem:[#allocation10 + $0x6] sm:$0x3] %vm1612, %v1607
    %1617 = vst.msk [vmem:[#allocation10 + $0x8] sm:$0x3] %vm1612, %v1599
    %1618 = vst.msk [vmem:[#allocation10 + $0xa] sm:$0x3] %vm1612, %v1609
    %1619 = vst.msk [vmem:[#allocation10 + $0xc] sm:$0x3] %vm1612, %v1603
    %1620 = vst.msk [vmem:[#allocation10 + $0xe] sm:$0x3] %vm1612, %v1611
    %v1621 = vld [vmem:[%s2] sm:$0x3]
    %v1622 = vld [vmem:[%s2 + $0x2] sm:$0x3]
    %v1623 = vld [vmem:[%s2 + $0x4] sm:$0x3]
    %v1624 = vld [vmem:[%s2 + $0x6] sm:$0x3]
    %v1625 = vld [vmem:[%s2 + $0x8] sm:$0x3]
    %v1626 = vld [vmem:[%s2 + $0xa] sm:$0x3]
    %v1627 = vld [vmem:[%s2 + $0xc] sm:$0x3]
    %v1628 = vld [vmem:[%s2 + $0xe] sm:$0x3]
    %1629 = vxpose.xlu0.b32.start [1/16] %v1621, 128
    %1630 = vxpose.xlu0.b32.cont [2/16] 0.0, 128
    %1631 = vxpose.xlu0.b32.cont [3/16] 0.0, 128
    %1632 = vxpose.xlu0.b32.cont [4/16] 0.0, 128
    %1633 = vxpose.xlu0.b32.cont [5/16] 0.0, 128
    %1634 = vxpose.xlu0.b32.cont [6/16] 0.0, 128
    %1635 = vxpose.xlu0.b32.cont [7/16] 0.0, 128
    %1636 = vxpose.xlu0.b32.cont [8/16] 0.0, 128
    %1637 = vxpose.xlu0.b32.cont [9/16] 0.0, 128
    %1638 = vxpose.xlu0.b32.cont [10/16] 0.0, 128
    %1639 = vxpose.xlu0.b32.cont [11/16] 0.0, 128
    %1640 = vxpose.xlu0.b32.cont [12/16] 0.0, 128
    %1641 = vxpose.xlu0.b32.cont [13/16] 0.0, 128
    %1642 = vxpose.xlu0.b32.cont [14/16] 0.0, 128
    %1643 = vxpose.xlu0.b32.cont [15/16] 0.0, 128
    %1644 = vxpose.xlu0.b32.end [16/16] 0.0, 128
    %v1645 = vpop.trf.xlu0
    %v1646 = vpop.trf.xlu0
    %v1647 = vpop.trf.xlu0
    %v1648 = vpop.trf.xlu0
    %v1649 = vpop.trf.xlu0
    %v1650 = vpop.trf.xlu0
    %v1651 = vpop.trf.xlu0
    %v1652 = vpop.trf.xlu0
    %v1653 = vpop.trf.xlu0
    %v1654 = vpop.trf.xlu0
    %v1655 = vpop.trf.xlu0
    %v1656 = vpop.trf.xlu0
    %v1657 = vpop.trf.xlu0
    %v1658 = vpop.trf.xlu0
    %v1659 = vpop.trf.xlu0
    %v1660 = vpop.trf.xlu0
    %1661 = vxpose.xlu0.b32.start [1/16] %v1622, 128
    %1662 = vxpose.xlu0.b32.cont [2/16] 0.0, 128
    %1663 = vxpose.xlu0.b32.cont [3/16] 0.0, 128
    %1664 = vxpose.xlu0.b32.cont [4/16] 0.0, 128
    %1665 = vxpose.xlu0.b32.cont [5/16] 0.0, 128
    %1666 = vxpose.xlu0.b32.cont [6/16] 0.0, 128
    %1667 = vxpose.xlu0.b32.cont [7/16] 0.0, 128
    %1668 = vxpose.xlu0.b32.cont [8/16] 0.0, 128
    %1669 = vxpose.xlu0.b32.cont [9/16] 0.0, 128
    %1670 = vxpose.xlu0.b32.cont [10/16] 0.0, 128
    %1671 = vxpose.xlu0.b32.cont [11/16] 0.0, 128
    %1672 = vxpose.xlu0.b32.cont [12/16] 0.0, 128
    %1673 = vxpose.xlu0.b32.cont [13/16] 0.0, 128
    %1674 = vxpose.xlu0.b32.cont [14/16] 0.0, 128
    %1675 = vxpose.xlu0.b32.cont [15/16] 0.0, 128
    %1676 = vxpose.xlu0.b32.end [16/16] 0.0, 128
    %v1677 = vpop.trf.xlu0
    %v1678 = vpop.trf.xlu0
    %v1679 = vpop.trf.xlu0
    %v1680 = vpop.trf.xlu0
    %v1681 = vpop.trf.xlu0
    %v1682 = vpop.trf.xlu0
    %v1683 = vpop.trf.xlu0
    %v1684 = vpop.trf.xlu0
    %v1685 = vpop.trf.xlu0
    %v1686 = vpop.trf.xlu0
    %v1687 = vpop.trf.xlu0
    %v1688 = vpop.trf.xlu0
    %v1689 = vpop.trf.xlu0
    %v1690 = vpop.trf.xlu0
    %v1691 = vpop.trf.xlu0
    %v1692 = vpop.trf.xlu0
    %1693 = vxpose.xlu0.b32.start [1/16] %v1623, 128
    %1694 = vxpose.xlu0.b32.cont [2/16] 0.0, 128
    %1695 = vxpose.xlu0.b32.cont [3/16] 0.0, 128
    %1696 = vxpose.xlu0.b32.cont [4/16] 0.0, 128
    %1697 = vxpose.xlu0.b32.cont [5/16] 0.0, 128
    %1698 = vxpose.xlu0.b32.cont [6/16] 0.0, 128
    %1699 = vxpose.xlu0.b32.cont [7/16] 0.0, 128
    %1700 = vxpose.xlu0.b32.cont [8/16] 0.0, 128
    %1701 = vxpose.xlu0.b32.cont [9/16] 0.0, 128
    %1702 = vxpose.xlu0.b32.cont [10/16] 0.0, 128
    %1703 = vxpose.xlu0.b32.cont [11/16] 0.0, 128
    %1704 = vxpose.xlu0.b32.cont [12/16] 0.0, 128
    %1705 = vxpose.xlu0.b32.cont [13/16] 0.0, 128
    %1706 = vxpose.xlu0.b32.cont [14/16] 0.0, 128
    %1707 = vxpose.xlu0.b32.cont [15/16] 0.0, 128
    %1708 = vxpose.xlu0.b32.end [16/16] 0.0, 128
    %v1709 = vpop.trf.xlu0
    %v1710 = vpop.trf.xlu0
    %v1711 = vpop.trf.xlu0
    %v1712 = vpop.trf.xlu0
    %v1713 = vpop.trf.xlu0
    %v1714 = vpop.trf.xlu0
    %v1715 = vpop.trf.xlu0
    %v1716 = vpop.trf.xlu0
    %v1717 = vpop.trf.xlu0
    %v1718 = vpop.trf.xlu0
    %v1719 = vpop.trf.xlu0
    %v1720 = vpop.trf.xlu0
    %v1721 = vpop.trf.xlu0
    %v1722 = vpop.trf.xlu0
    %v1723 = vpop.trf.xlu0
    %v1724 = vpop.trf.xlu0
    %1725 = vxpose.xlu0.b32.start [1/16] %v1624, 128
    %1726 = vxpose.xlu0.b32.cont [2/16] 0.0, 128
    %1727 = vxpose.xlu0.b32.cont [3/16] 0.0, 128
    %1728 = vxpose.xlu0.b32.cont [4/16] 0.0, 128
    %1729 = vxpose.xlu0.b32.cont [5/16] 0.0, 128
    %1730 = vxpose.xlu0.b32.cont [6/16] 0.0, 128
    %1731 = vxpose.xlu0.b32.cont [7/16] 0.0, 128
    %1732 = vxpose.xlu0.b32.cont [8/16] 0.0, 128
    %1733 = vxpose.xlu0.b32.cont [9/16] 0.0, 128
    %1734 = vxpose.xlu0.b32.cont [10/16] 0.0, 128
    %1735 = vxpose.xlu0.b32.cont [11/16] 0.0, 128
    %1736 = vxpose.xlu0.b32.cont [12/16] 0.0, 128
    %1737 = vxpose.xlu0.b32.cont [13/16] 0.0, 128
    %1738 = vxpose.xlu0.b32.cont [14/16] 0.0, 128
    %1739 = vxpose.xlu0.b32.cont [15/16] 0.0, 128
    %1740 = vxpose.xlu0.b32.end [16/16] 0.0, 128
    %v1741 = vpop.trf.xlu0
    %v1742 = vpop.trf.xlu0
    %v1743 = vpop.trf.xlu0
    %v1744 = vpop.trf.xlu0
    %v1745 = vpop.trf.xlu0
    %v1746 = vpop.trf.xlu0
    %v1747 = vpop.trf.xlu0
    %v1748 = vpop.trf.xlu0
    %v1749 = vpop.trf.xlu0
    %v1750 = vpop.trf.xlu0
    %v1751 = vpop.trf.xlu0
    %v1752 = vpop.trf.xlu0
    %v1753 = vpop.trf.xlu0
    %v1754 = vpop.trf.xlu0
    %v1755 = vpop.trf.xlu0
    %v1756 = vpop.trf.xlu0
    %1757 = vxpose.xlu0.b32.start [1/16] %v1625, 128
    %1758 = vxpose.xlu0.b32.cont [2/16] 0.0, 128
    %1759 = vxpose.xlu0.b32.cont [3/16] 0.0, 128
    %1760 = vxpose.xlu0.b32.cont [4/16] 0.0, 128
    %1761 = vxpose.xlu0.b32.cont [5/16] 0.0, 128
    %1762 = vxpose.xlu0.b32.cont [6/16] 0.0, 128
    %1763 = vxpose.xlu0.b32.cont [7/16] 0.0, 128
    %1764 = vxpose.xlu0.b32.cont [8/16] 0.0, 128
    %1765 = vxpose.xlu0.b32.cont [9/16] 0.0, 128
    %1766 = vxpose.xlu0.b32.cont [10/16] 0.0, 128
    %1767 = vxpose.xlu0.b32.cont [11/16] 0.0, 128
    %1768 = vxpose.xlu0.b32.cont [12/16] 0.0, 128
    %1769 = vxpose.xlu0.b32.cont [13/16] 0.0, 128
    %1770 = vxpose.xlu0.b32.cont [14/16] 0.0, 128
    %1771 = vxpose.xlu0.b32.cont [15/16] 0.0, 128
    %1772 = vxpose.xlu0.b32.end [16/16] 0.0, 128
    %v1773 = vpop.trf.xlu0
    %v1774 = vpop.trf.xlu0
    %v1775 = vpop.trf.xlu0
    %v1776 = vpop.trf.xlu0
    %v1777 = vpop.trf.xlu0
    %v1778 = vpop.trf.xlu0
    %v1779 = vpop.trf.xlu0
    %v1780 = vpop.trf.xlu0
    %v1781 = vpop.trf.xlu0
    %v1782 = vpop.trf.xlu0
    %v1783 = vpop.trf.xlu0
    %v1784 = vpop.trf.xlu0
    %v1785 = vpop.trf.xlu0
    %v1786 = vpop.trf.xlu0
    %v1787 = vpop.trf.xlu0
    %v1788 = vpop.trf.xlu0
    %1789 = vxpose.xlu0.b32.start [1/16] %v1626, 128
    %1790 = vxpose.xlu0.b32.cont [2/16] 0.0, 128
    %1791 = vxpose.xlu0.b32.cont [3/16] 0.0, 128
    %1792 = vxpose.xlu0.b32.cont [4/16] 0.0, 128
    %1793 = vxpose.xlu0.b32.cont [5/16] 0.0, 128
    %1794 = vxpose.xlu0.b32.cont [6/16] 0.0, 128
    %1795 = vxpose.xlu0.b32.cont [7/16] 0.0, 128
    %1796 = vxpose.xlu0.b32.cont [8/16] 0.0, 128
    %1797 = vxpose.xlu0.b32.cont [9/16] 0.0, 128
    %1798 = vxpose.xlu0.b32.cont [10/16] 0.0, 128
    %1799 = vxpose.xlu0.b32.cont [11/16] 0.0, 128
    %1800 = vxpose.xlu0.b32.cont [12/16] 0.0, 128
    %1801 = vxpose.xlu0.b32.cont [13/16] 0.0, 128
    %1802 = vxpose.xlu0.b32.cont [14/16] 0.0, 128
    %1803 = vxpose.xlu0.b32.cont [15/16] 0.0, 128
    %1804 = vxpose.xlu0.b32.end [16/16] 0.0, 128
    %v1805 = vpop.trf.xlu0
    %v1806 = vpop.trf.xlu0
    %v1807 = vpop.trf.xlu0
    %v1808 = vpop.trf.xlu0
    %v1809 = vpop.trf.xlu0
    %v1810 = vpop.trf.xlu0
    %v1811 = vpop.trf.xlu0
    %v1812 = vpop.trf.xlu0
    %v1813 = vpop.trf.xlu0
    %v1814 = vpop.trf.xlu0
    %v1815 = vpop.trf.xlu0
    %v1816 = vpop.trf.xlu0
    %v1817 = vpop.trf.xlu0
    %v1818 = vpop.trf.xlu0
    %v1819 = vpop.trf.xlu0
    %v1820 = vpop.trf.xlu0
    %1821 = vxpose.xlu0.b32.start [1/16] %v1627, 128
    %1822 = vxpose.xlu0.b32.cont [2/16] 0.0, 128
    %1823 = vxpose.xlu0.b32.cont [3/16] 0.0, 128
    %1824 = vxpose.xlu0.b32.cont [4/16] 0.0, 128
    %1825 = vxpose.xlu0.b32.cont [5/16] 0.0, 128
    %1826 = vxpose.xlu0.b32.cont [6/16] 0.0, 128
    %1827 = vxpose.xlu0.b32.cont [7/16] 0.0, 128
    %1828 = vxpose.xlu0.b32.cont [8/16] 0.0, 128
    %1829 = vxpose.xlu0.b32.cont [9/16] 0.0, 128
    %1830 = vxpose.xlu0.b32.cont [10/16] 0.0, 128
    %1831 = vxpose.xlu0.b32.cont [11/16] 0.0, 128
    %1832 = vxpose.xlu0.b32.cont [12/16] 0.0, 128
    %1833 = vxpose.xlu0.b32.cont [13/16] 0.0, 128
    %1834 = vxpose.xlu0.b32.cont [14/16] 0.0, 128
    %1835 = vxpose.xlu0.b32.cont [15/16] 0.0, 128
    %1836 = vxpose.xlu0.b32.end [16/16] 0.0, 128
    %v1837 = vpop.trf.xlu0
    %v1838 = vpop.trf.xlu0
    %v1839 = vpop.trf.xlu0
    %v1840 = vpop.trf.xlu0
    %v1841 = vpop.trf.xlu0
    %v1842 = vpop.trf.xlu0
    %v1843 = vpop.trf.xlu0
    %v1844 = vpop.trf.xlu0
    %v1845 = vpop.trf.xlu0
    %v1846 = vpop.trf.xlu0
    %v1847 = vpop.trf.xlu0
    %v1848 = vpop.trf.xlu0
    %v1849 = vpop.trf.xlu0
    %v1850 = vpop.trf.xlu0
    %v1851 = vpop.trf.xlu0
    %v1852 = vpop.trf.xlu0
    %1853 = vxpose.xlu0.b32.start [1/16] %v1628, 128
    %1854 = vxpose.xlu0.b32.cont [2/16] 0.0, 128
    %1855 = vxpose.xlu0.b32.cont [3/16] 0.0, 128
    %1856 = vxpose.xlu0.b32.cont [4/16] 0.0, 128
    %1857 = vxpose.xlu0.b32.cont [5/16] 0.0, 128
    %1858 = vxpose.xlu0.b32.cont [6/16] 0.0, 128
    %1859 = vxpose.xlu0.b32.cont [7/16] 0.0, 128
    %1860 = vxpose.xlu0.b32.cont [8/16] 0.0, 128
    %1861 = vxpose.xlu0.b32.cont [9/16] 0.0, 128
    %1862 = vxpose.xlu0.b32.cont [10/16] 0.0, 128
    %1863 = vxpose.xlu0.b32.cont [11/16] 0.0, 128
    %1864 = vxpose.xlu0.b32.cont [12/16] 0.0, 128
    %1865 = vxpose.xlu0.b32.cont [13/16] 0.0, 128
    %1866 = vxpose.xlu0.b32.cont [14/16] 0.0, 128
    %1867 = vxpose.xlu0.b32.cont [15/16] 0.0, 128
    %1868 = vxpose.xlu0.b32.end [16/16] 0.0, 128
    %v1869 = vpop.trf.xlu0
    %v1870 = vpop.trf.xlu0
    %v1871 = vpop.trf.xlu0
    %v1872 = vpop.trf.xlu0
    %v1873 = vpop.trf.xlu0
    %v1874 = vpop.trf.xlu0
    %v1875 = vpop.trf.xlu0
    %v1876 = vpop.trf.xlu0
    %v1877 = vpop.trf.xlu0
    %v1878 = vpop.trf.xlu0
    %v1879 = vpop.trf.xlu0
    %v1880 = vpop.trf.xlu0
    %v1881 = vpop.trf.xlu0
    %v1882 = vpop.trf.xlu0
    %v1883 = vpop.trf.xlu0
    %v1884 = vpop.trf.xlu0
    %v1885 = vrot.slane %v1709, 4
    %v1886 = vsel %vm123, %v1885, %v1645
    %v1887 = vrot.slane %v1645, 4
    %v1888 = vsel %vm123, %v1709, %v1887
    %v1890 = vunpack.c.l.s4 1983009808
    %v1891 = vunpack.c.0.s8 %v1890
    %v1892 = vperm.slane %v1886, %v1891
    %v1894 = vunpack.c.l.s4 1983009808
    %v1895 = vunpack.c.0.s8 %v1894
    %v1896 = vperm.slane %v1888, %v1895
    %v1897 = vrot.slane %v1741, 4
    %v1898 = vsel %vm123, %v1897, %v1677
    %v1899 = vrot.slane %v1677, 4
    %v1900 = vsel %vm123, %v1741, %v1899
    %v1902 = vunpack.c.l.s4 1983009808
    %v1903 = vunpack.c.0.s8 %v1902
    %v1904 = vperm.slane %v1898, %v1903
    %v1906 = vunpack.c.l.s4 1983009808
    %v1907 = vunpack.c.0.s8 %v1906
    %v1908 = vperm.slane %v1900, %v1907
    %v1909 = vrot.slane %v1837, 4
    %v1910 = vsel %vm123, %v1909, %v1773
    %v1911 = vrot.slane %v1773, 4
    %v1912 = vsel %vm123, %v1837, %v1911
    %v1914 = vunpack.c.l.s4 1983009808
    %v1915 = vunpack.c.0.s8 %v1914
    %v1916 = vperm.slane %v1910, %v1915
    %v1918 = vunpack.c.l.s4 1983009808
    %v1919 = vunpack.c.0.s8 %v1918
    %v1920 = vperm.slane %v1912, %v1919
    %v1921 = vrot.slane %v1869, 4
    %v1922 = vsel %vm123, %v1921, %v1805
    %v1923 = vrot.slane %v1805, 4
    %v1924 = vsel %vm123, %v1869, %v1923
    %v1926 = vunpack.c.l.s4 1983009808
    %v1927 = vunpack.c.0.s8 %v1926
    %v1928 = vperm.slane %v1922, %v1927
    %v1930 = vunpack.c.l.s4 1983009808
    %v1931 = vunpack.c.0.s8 %v1930
    %v1932 = vperm.slane %v1924, %v1931
    %v1933 = vrot.slane %v1904, 4
    %v1934 = vsel %vm123, %v1933, %v1892
    %v1935 = vrot.slane %v1892, 4
    %v1936 = vsel %vm123, %v1904, %v1935
    %v1938 = vunpack.c.l.s4 1934713408
    %v1939 = vunpack.c.0.s8 %v1938
    %v1940 = vperm.slane %v1934, %v1939
    %v1942 = vunpack.c.l.s4 1934713408
    %v1943 = vunpack.c.0.s8 %v1942
    %v1944 = vperm.slane %v1936, %v1943
    %v1945 = vrot.slane %v1908, 4
    %v1946 = vsel %vm123, %v1945, %v1896
    %v1947 = vrot.slane %v1896, 4
    %v1948 = vsel %vm123, %v1908, %v1947
    %v1950 = vunpack.c.l.s4 1934713408
    %v1951 = vunpack.c.0.s8 %v1950
    %v1952 = vperm.slane %v1946, %v1951
    %v1954 = vunpack.c.l.s4 1934713408
    %v1955 = vunpack.c.0.s8 %v1954
    %v1956 = vperm.slane %v1948, %v1955
    %v1957 = vrot.slane %v1928, 4
    %v1958 = vsel %vm123, %v1957, %v1916
    %v1959 = vrot.slane %v1916, 4
    %v1960 = vsel %vm123, %v1928, %v1959
    %v1962 = vunpack.c.l.s4 1934713408
    %v1963 = vunpack.c.0.s8 %v1962
    %v1964 = vperm.slane %v1958, %v1963
    %v1966 = vunpack.c.l.s4 1934713408
    %v1967 = vunpack.c.0.s8 %v1966
    %v1968 = vperm.slane %v1960, %v1967
    %v1969 = vrot.slane %v1932, 4
    %v1970 = vsel %vm123, %v1969, %v1920
    %v1971 = vrot.slane %v1920, 4
    %v1972 = vsel %vm123, %v1932, %v1971
    %v1974 = vunpack.c.l.s4 1934713408
    %v1975 = vunpack.c.0.s8 %v1974
    %v1976 = vperm.slane %v1970, %v1975
    %v1978 = vunpack.c.l.s4 1934713408
    %v1979 = vunpack.c.0.s8 %v1978
    %v1980 = vperm.slane %v1972, %v1979
    %v1981 = vrot.slane %v1964, 4
    %v1982 = vsel %vm123, %v1981, %v1940
    %v1983 = vrot.slane %v1940, 4
    %v1984 = vsel %vm123, %v1964, %v1983
    %v1985 = vrot.slane %v1968, 4
    %v1986 = vsel %vm123, %v1985, %v1944
    %v1987 = vrot.slane %v1944, 4
    %v1988 = vsel %vm123, %v1968, %v1987
    %v1989 = vrot.slane %v1976, 4
    %v1990 = vsel %vm123, %v1989, %v1952
    %v1991 = vrot.slane %v1952, 4
    %v1992 = vsel %vm123, %v1976, %v1991
    %v1993 = vrot.slane %v1980, 4
    %v1994 = vsel %vm123, %v1993, %v1956
    %v1995 = vrot.slane %v1956, 4
    %v1996 = vsel %vm123, %v1980, %v1995
    %v1997 = vrot.slane %v1710, 4
    %v1998 = vsel %vm123, %v1997, %v1646
    %v1999 = vrot.slane %v1646, 4
    %v2000 = vsel %vm123, %v1710, %v1999
    %v2002 = vunpack.c.l.s4 1983009808
    %v2003 = vunpack.c.0.s8 %v2002
    %v2004 = vperm.slane %v1998, %v2003
    %v2006 = vunpack.c.l.s4 1983009808
    %v2007 = vunpack.c.0.s8 %v2006
    %v2008 = vperm.slane %v2000, %v2007
    %v2009 = vrot.slane %v1742, 4
    %v2010 = vsel %vm123, %v2009, %v1678
    %v2011 = vrot.slane %v1678, 4
    %v2012 = vsel %vm123, %v1742, %v2011
    %v2014 = vunpack.c.l.s4 1983009808
    %v2015 = vunpack.c.0.s8 %v2014
    %v2016 = vperm.slane %v2010, %v2015
    %v2018 = vunpack.c.l.s4 1983009808
    %v2019 = vunpack.c.0.s8 %v2018
    %v2020 = vperm.slane %v2012, %v2019
    %v2021 = vrot.slane %v1838, 4
    %v2022 = vsel %vm123, %v2021, %v1774
    %v2023 = vrot.slane %v1774, 4
    %v2024 = vsel %vm123, %v1838, %v2023
    %v2026 = vunpack.c.l.s4 1983009808
    %v2027 = vunpack.c.0.s8 %v2026
    %v2028 = vperm.slane %v2022, %v2027
    %v2030 = vunpack.c.l.s4 1983009808
    %v2031 = vunpack.c.0.s8 %v2030
    %v2032 = vperm.slane %v2024, %v2031
    %v2033 = vrot.slane %v1870, 4
    %v2034 = vsel %vm123, %v2033, %v1806
    %v2035 = vrot.slane %v1806, 4
    %v2036 = vsel %vm123, %v1870, %v2035
    %v2038 = vunpack.c.l.s4 1983009808
    %v2039 = vunpack.c.0.s8 %v2038
    %v2040 = vperm.slane %v2034, %v2039
    %v2042 = vunpack.c.l.s4 1983009808
    %v2043 = vunpack.c.0.s8 %v2042
    %v2044 = vperm.slane %v2036, %v2043
    %v2045 = vrot.slane %v2016, 4
    %v2046 = vsel %vm123, %v2045, %v2004
    %v2047 = vrot.slane %v2004, 4
    %v2048 = vsel %vm123, %v2016, %v2047
    %v2050 = vunpack.c.l.s4 1934713408
    %v2051 = vunpack.c.0.s8 %v2050
    %v2052 = vperm.slane %v2046, %v2051
    %v2054 = vunpack.c.l.s4 1934713408
    %v2055 = vunpack.c.0.s8 %v2054
    %v2056 = vperm.slane %v2048, %v2055
    %v2057 = vrot.slane %v2020, 4
    %v2058 = vsel %vm123, %v2057, %v2008
    %v2059 = vrot.slane %v2008, 4
    %v2060 = vsel %vm123, %v2020, %v2059
    %v2062 = vunpack.c.l.s4 1934713408
    %v2063 = vunpack.c.0.s8 %v2062
    %v2064 = vperm.slane %v2058, %v2063
    %v2066 = vunpack.c.l.s4 1934713408
    %v2067 = vunpack.c.0.s8 %v2066
    %v2068 = vperm.slane %v2060, %v2067
    %v2069 = vrot.slane %v2040, 4
    %v2070 = vsel %vm123, %v2069, %v2028
    %v2071 = vrot.slane %v2028, 4
    %v2072 = vsel %vm123, %v2040, %v2071
    %v2074 = vunpack.c.l.s4 1934713408
    %v2075 = vunpack.c.0.s8 %v2074
    %v2076 = vperm.slane %v2070, %v2075
    %v2078 = vunpack.c.l.s4 1934713408
    %v2079 = vunpack.c.0.s8 %v2078
    %v2080 = vperm.slane %v2072, %v2079
    %v2081 = vrot.slane %v2044, 4
    %v2082 = vsel %vm123, %v2081, %v2032
    %v2083 = vrot.slane %v2032, 4
    %v2084 = vsel %vm123, %v2044, %v2083
    %v2086 = vunpack.c.l.s4 1934713408
    %v2087 = vunpack.c.0.s8 %v2086
    %v2088 = vperm.slane %v2082, %v2087
    %v2090 = vunpack.c.l.s4 1934713408
    %v2091 = vunpack.c.0.s8 %v2090
    %v2092 = vperm.slane %v2084, %v2091
    %v2093 = vrot.slane %v2076, 4
    %v2094 = vsel %vm123, %v2093, %v2052
    %v2095 = vrot.slane %v2052, 4
    %v2096 = vsel %vm123, %v2076, %v2095
    %v2097 = vrot.slane %v2080, 4
    %v2098 = vsel %vm123, %v2097, %v2056
    %v2099 = vrot.slane %v2056, 4
    %v2100 = vsel %vm123, %v2080, %v2099
    %v2101 = vrot.slane %v2088, 4
    %v2102 = vsel %vm123, %v2101, %v2064
    %v2103 = vrot.slane %v2064, 4
    %v2104 = vsel %vm123, %v2088, %v2103
    %v2105 = vrot.slane %v2092, 4
    %v2106 = vsel %vm123, %v2105, %v2068
    %v2107 = vrot.slane %v2068, 4
    %v2108 = vsel %vm123, %v2092, %v2107
    %2109 = vxpose.xlu0.b32.start [1/16] %v1982, 128
    %2110 = vxpose.xlu0.b32.cont [2/16] 0.0, 128
    %2111 = vxpose.xlu0.b32.cont [3/16] 0.0, 128
    %2112 = vxpose.xlu0.b32.cont [4/16] 0.0, 128
    %2113 = vxpose.xlu0.b32.cont [5/16] 0.0, 128
    %2114 = vxpose.xlu0.b32.cont [6/16] 0.0, 128
    %2115 = vxpose.xlu0.b32.cont [7/16] 0.0, 128
    %2116 = vxpose.xlu0.b32.cont [8/16] 0.0, 128
    %2117 = vxpose.xlu0.b32.cont [9/16] 0.0, 128
    %2118 = vxpose.xlu0.b32.cont [10/16] 0.0, 128
    %2119 = vxpose.xlu0.b32.cont [11/16] 0.0, 128
    %2120 = vxpose.xlu0.b32.cont [12/16] 0.0, 128
    %2121 = vxpose.xlu0.b32.cont [13/16] 0.0, 128
    %2122 = vxpose.xlu0.b32.cont [14/16] 0.0, 128
    %2123 = vxpose.xlu0.b32.cont [15/16] 0.0, 128
    %2124 = vxpose.xlu0.b32.end [16/16] 0.0, 128
    %v2125 = vpop.trf.xlu0
    %v2126 = vpop.trf.xlu0
    %v2127 = vpop.trf.xlu0
    %v2128 = vpop.trf.xlu0
    %v2129 = vpop.trf.xlu0
    %v2130 = vpop.trf.xlu0
    %v2131 = vpop.trf.xlu0
    %v2132 = vpop.trf.xlu0
    %v2133 = vpop.trf.xlu0
    %v2134 = vpop.trf.xlu0
    %v2135 = vpop.trf.xlu0
    %v2136 = vpop.trf.xlu0
    %v2137 = vpop.trf.xlu0
    %v2138 = vpop.trf.xlu0
    %v2139 = vpop.trf.xlu0
    %v2140 = vpop.trf.xlu0
    %2141 = vxpose.xlu0.b32.start [1/16] %v1984, 128
    %2142 = vxpose.xlu0.b32.cont [2/16] 0.0, 128
    %2143 = vxpose.xlu0.b32.cont [3/16] 0.0, 128
    %2144 = vxpose.xlu0.b32.cont [4/16] 0.0, 128
    %2145 = vxpose.xlu0.b32.cont [5/16] 0.0, 128
    %2146 = vxpose.xlu0.b32.cont [6/16] 0.0, 128
    %2147 = vxpose.xlu0.b32.cont [7/16] 0.0, 128
    %2148 = vxpose.xlu0.b32.cont [8/16] 0.0, 128
    %2149 = vxpose.xlu0.b32.cont [9/16] 0.0, 128
    %2150 = vxpose.xlu0.b32.cont [10/16] 0.0, 128
    %2151 = vxpose.xlu0.b32.cont [11/16] 0.0, 128
    %2152 = vxpose.xlu0.b32.cont [12/16] 0.0, 128
    %2153 = vxpose.xlu0.b32.cont [13/16] 0.0, 128
    %2154 = vxpose.xlu0.b32.cont [14/16] 0.0, 128
    %2155 = vxpose.xlu0.b32.cont [15/16] 0.0, 128
    %2156 = vxpose.xlu0.b32.end [16/16] 0.0, 128
    %v2157 = vpop.trf.xlu0
    %v2158 = vpop.trf.xlu0
    %v2159 = vpop.trf.xlu0
    %v2160 = vpop.trf.xlu0
    %v2161 = vpop.trf.xlu0
    %v2162 = vpop.trf.xlu0
    %v2163 = vpop.trf.xlu0
    %v2164 = vpop.trf.xlu0
    %v2165 = vpop.trf.xlu0
    %v2166 = vpop.trf.xlu0
    %v2167 = vpop.trf.xlu0
    %v2168 = vpop.trf.xlu0
    %v2169 = vpop.trf.xlu0
    %v2170 = vpop.trf.xlu0
    %v2171 = vpop.trf.xlu0
    %v2172 = vpop.trf.xlu0
    %2173 = vxpose.xlu0.b32.start [1/16] %v1986, 128
    %2174 = vxpose.xlu0.b32.cont [2/16] 0.0, 128
    %2175 = vxpose.xlu0.b32.cont [3/16] 0.0, 128
    %2176 = vxpose.xlu0.b32.cont [4/16] 0.0, 128
    %2177 = vxpose.xlu0.b32.cont [5/16] 0.0, 128
    %2178 = vxpose.xlu0.b32.cont [6/16] 0.0, 128
    %2179 = vxpose.xlu0.b32.cont [7/16] 0.0, 128
    %2180 = vxpose.xlu0.b32.cont [8/16] 0.0, 128
    %2181 = vxpose.xlu0.b32.cont [9/16] 0.0, 128
    %2182 = vxpose.xlu0.b32.cont [10/16] 0.0, 128
    %2183 = vxpose.xlu0.b32.cont [11/16] 0.0, 128
    %2184 = vxpose.xlu0.b32.cont [12/16] 0.0, 128
    %2185 = vxpose.xlu0.b32.cont [13/16] 0.0, 128
    %2186 = vxpose.xlu0.b32.cont [14/16] 0.0, 128
    %2187 = vxpose.xlu0.b32.cont [15/16] 0.0, 128
    %2188 = vxpose.xlu0.b32.end [16/16] 0.0, 128
    %v2189 = vpop.trf.xlu0
    %v2190 = vpop.trf.xlu0
    %v2191 = vpop.trf.xlu0
    %v2192 = vpop.trf.xlu0
    %v2193 = vpop.trf.xlu0
    %v2194 = vpop.trf.xlu0
    %v2195 = vpop.trf.xlu0
    %v2196 = vpop.trf.xlu0
    %v2197 = vpop.trf.xlu0
    %v2198 = vpop.trf.xlu0
    %v2199 = vpop.trf.xlu0
    %v2200 = vpop.trf.xlu0
    %v2201 = vpop.trf.xlu0
    %v2202 = vpop.trf.xlu0
    %v2203 = vpop.trf.xlu0
    %v2204 = vpop.trf.xlu0
    %2205 = vxpose.xlu0.b32.start [1/16] %v1988, 128
    %2206 = vxpose.xlu0.b32.cont [2/16] 0.0, 128
    %2207 = vxpose.xlu0.b32.cont [3/16] 0.0, 128
    %2208 = vxpose.xlu0.b32.cont [4/16] 0.0, 128
    %2209 = vxpose.xlu0.b32.cont [5/16] 0.0, 128
    %2210 = vxpose.xlu0.b32.cont [6/16] 0.0, 128
    %2211 = vxpose.xlu0.b32.cont [7/16] 0.0, 128
    %2212 = vxpose.xlu0.b32.cont [8/16] 0.0, 128
    %2213 = vxpose.xlu0.b32.cont [9/16] 0.0, 128
    %2214 = vxpose.xlu0.b32.cont [10/16] 0.0, 128
    %2215 = vxpose.xlu0.b32.cont [11/16] 0.0, 128
    %2216 = vxpose.xlu0.b32.cont [12/16] 0.0, 128
    %2217 = vxpose.xlu0.b32.cont [13/16] 0.0, 128
    %2218 = vxpose.xlu0.b32.cont [14/16] 0.0, 128
    %2219 = vxpose.xlu0.b32.cont [15/16] 0.0, 128
    %2220 = vxpose.xlu0.b32.end [16/16] 0.0, 128
    %v2221 = vpop.trf.xlu0
    %v2222 = vpop.trf.xlu0
    %v2223 = vpop.trf.xlu0
    %v2224 = vpop.trf.xlu0
    %v2225 = vpop.trf.xlu0
    %v2226 = vpop.trf.xlu0
    %v2227 = vpop.trf.xlu0
    %v2228 = vpop.trf.xlu0
    %v2229 = vpop.trf.xlu0
    %v2230 = vpop.trf.xlu0
    %v2231 = vpop.trf.xlu0
    %v2232 = vpop.trf.xlu0
    %v2233 = vpop.trf.xlu0
    %v2234 = vpop.trf.xlu0
    %v2235 = vpop.trf.xlu0
    %v2236 = vpop.trf.xlu0
    %2237 = vxpose.xlu0.b32.start [1/16] %v1990, 128
    %2238 = vxpose.xlu0.b32.cont [2/16] 0.0, 128
    %2239 = vxpose.xlu0.b32.cont [3/16] 0.0, 128
    %2240 = vxpose.xlu0.b32.cont [4/16] 0.0, 128
    %2241 = vxpose.xlu0.b32.cont [5/16] 0.0, 128
    %2242 = vxpose.xlu0.b32.cont [6/16] 0.0, 128
    %2243 = vxpose.xlu0.b32.cont [7/16] 0.0, 128
    %2244 = vxpose.xlu0.b32.cont [8/16] 0.0, 128
    %2245 = vxpose.xlu0.b32.cont [9/16] 0.0, 128
    %2246 = vxpose.xlu0.b32.cont [10/16] 0.0, 128
    %2247 = vxpose.xlu0.b32.cont [11/16] 0.0, 128
    %2248 = vxpose.xlu0.b32.cont [12/16] 0.0, 128
    %2249 = vxpose.xlu0.b32.cont [13/16] 0.0, 128
    %2250 = vxpose.xlu0.b32.cont [14/16] 0.0, 128
    %2251 = vxpose.xlu0.b32.cont [15/16] 0.0, 128
    %2252 = vxpose.xlu0.b32.end [16/16] 0.0, 128
    %v2253 = vpop.trf.xlu0
    %v2254 = vpop.trf.xlu0
    %v2255 = vpop.trf.xlu0
    %v2256 = vpop.trf.xlu0
    %v2257 = vpop.trf.xlu0
    %v2258 = vpop.trf.xlu0
    %v2259 = vpop.trf.xlu0
    %v2260 = vpop.trf.xlu0
    %v2261 = vpop.trf.xlu0
    %v2262 = vpop.trf.xlu0
    %v2263 = vpop.trf.xlu0
    %v2264 = vpop.trf.xlu0
    %v2265 = vpop.trf.xlu0
    %v2266 = vpop.trf.xlu0
    %v2267 = vpop.trf.xlu0
    %v2268 = vpop.trf.xlu0
    %2269 = vxpose.xlu0.b32.start [1/16] %v1992, 128
    %2270 = vxpose.xlu0.b32.cont [2/16] 0.0, 128
    %2271 = vxpose.xlu0.b32.cont [3/16] 0.0, 128
    %2272 = vxpose.xlu0.b32.cont [4/16] 0.0, 128
    %2273 = vxpose.xlu0.b32.cont [5/16] 0.0, 128
    %2274 = vxpose.xlu0.b32.cont [6/16] 0.0, 128
    %2275 = vxpose.xlu0.b32.cont [7/16] 0.0, 128
    %2276 = vxpose.xlu0.b32.cont [8/16] 0.0, 128
    %2277 = vxpose.xlu0.b32.cont [9/16] 0.0, 128
    %2278 = vxpose.xlu0.b32.cont [10/16] 0.0, 128
    %2279 = vxpose.xlu0.b32.cont [11/16] 0.0, 128
    %2280 = vxpose.xlu0.b32.cont [12/16] 0.0, 128
    %2281 = vxpose.xlu0.b32.cont [13/16] 0.0, 128
    %2282 = vxpose.xlu0.b32.cont [14/16] 0.0, 128
    %2283 = vxpose.xlu0.b32.cont [15/16] 0.0, 128
    %2284 = vxpose.xlu0.b32.end [16/16] 0.0, 128
    %v2285 = vpop.trf.xlu0
    %v2286 = vpop.trf.xlu0
    %v2287 = vpop.trf.xlu0
    %v2288 = vpop.trf.xlu0
    %v2289 = vpop.trf.xlu0
    %v2290 = vpop.trf.xlu0
    %v2291 = vpop.trf.xlu0
    %v2292 = vpop.trf.xlu0
    %v2293 = vpop.trf.xlu0
    %v2294 = vpop.trf.xlu0
    %v2295 = vpop.trf.xlu0
    %v2296 = vpop.trf.xlu0
    %v2297 = vpop.trf.xlu0
    %v2298 = vpop.trf.xlu0
    %v2299 = vpop.trf.xlu0
    %v2300 = vpop.trf.xlu0
    %2301 = vxpose.xlu0.b32.start [1/16] %v1994, 128
    %2302 = vxpose.xlu0.b32.cont [2/16] 0.0, 128
    %2303 = vxpose.xlu0.b32.cont [3/16] 0.0, 128
    %2304 = vxpose.xlu0.b32.cont [4/16] 0.0, 128
    %2305 = vxpose.xlu0.b32.cont [5/16] 0.0, 128
    %2306 = vxpose.xlu0.b32.cont [6/16] 0.0, 128
    %2307 = vxpose.xlu0.b32.cont [7/16] 0.0, 128
    %2308 = vxpose.xlu0.b32.cont [8/16] 0.0, 128
    %2309 = vxpose.xlu0.b32.cont [9/16] 0.0, 128
    %2310 = vxpose.xlu0.b32.cont [10/16] 0.0, 128
    %2311 = vxpose.xlu0.b32.cont [11/16] 0.0, 128
    %2312 = vxpose.xlu0.b32.cont [12/16] 0.0, 128
    %2313 = vxpose.xlu0.b32.cont [13/16] 0.0, 128
    %2314 = vxpose.xlu0.b32.cont [14/16] 0.0, 128
    %2315 = vxpose.xlu0.b32.cont [15/16] 0.0, 128
    %2316 = vxpose.xlu0.b32.end [16/16] 0.0, 128
    %v2317 = vpop.trf.xlu0
    %v2318 = vpop.trf.xlu0
    %v2319 = vpop.trf.xlu0
    %v2320 = vpop.trf.xlu0
    %v2321 = vpop.trf.xlu0
    %v2322 = vpop.trf.xlu0
    %v2323 = vpop.trf.xlu0
    %v2324 = vpop.trf.xlu0
    %v2325 = vpop.trf.xlu0
    %v2326 = vpop.trf.xlu0
    %v2327 = vpop.trf.xlu0
    %v2328 = vpop.trf.xlu0
    %v2329 = vpop.trf.xlu0
    %v2330 = vpop.trf.xlu0
    %v2331 = vpop.trf.xlu0
    %v2332 = vpop.trf.xlu0
    %2333 = vxpose.xlu0.b32.start [1/16] %v1996, 128
    %2334 = vxpose.xlu0.b32.cont [2/16] 0.0, 128
    %2335 = vxpose.xlu0.b32.cont [3/16] 0.0, 128
    %2336 = vxpose.xlu0.b32.cont [4/16] 0.0, 128
    %2337 = vxpose.xlu0.b32.cont [5/16] 0.0, 128
    %2338 = vxpose.xlu0.b32.cont [6/16] 0.0, 128
    %2339 = vxpose.xlu0.b32.cont [7/16] 0.0, 128
    %2340 = vxpose.xlu0.b32.cont [8/16] 0.0, 128
    %2341 = vxpose.xlu0.b32.cont [9/16] 0.0, 128
    %2342 = vxpose.xlu0.b32.cont [10/16] 0.0, 128
    %2343 = vxpose.xlu0.b32.cont [11/16] 0.0, 128
    %2344 = vxpose.xlu0.b32.cont [12/16] 0.0, 128
    %2345 = vxpose.xlu0.b32.cont [13/16] 0.0, 128
    %2346 = vxpose.xlu0.b32.cont [14/16] 0.0, 128
    %2347 = vxpose.xlu0.b32.cont [15/16] 0.0, 128
    %2348 = vxpose.xlu0.b32.end [16/16] 0.0, 128
    %v2349 = vpop.trf.xlu0
    %v2350 = vpop.trf.xlu0
    %v2351 = vpop.trf.xlu0
    %v2352 = vpop.trf.xlu0
    %v2353 = vpop.trf.xlu0
    %v2354 = vpop.trf.xlu0
    %v2355 = vpop.trf.xlu0
    %v2356 = vpop.trf.xlu0
    %v2357 = vpop.trf.xlu0
    %v2358 = vpop.trf.xlu0
    %v2359 = vpop.trf.xlu0
    %v2360 = vpop.trf.xlu0
    %v2361 = vpop.trf.xlu0
    %v2362 = vpop.trf.xlu0
    %v2363 = vpop.trf.xlu0
    %v2364 = vpop.trf.xlu0
    %2365 = vxpose.xlu0.b32.start [1/16] %v2094, 128
    %2366 = vxpose.xlu0.b32.cont [2/16] 0.0, 128
    %2367 = vxpose.xlu0.b32.cont [3/16] 0.0, 128
    %2368 = vxpose.xlu0.b32.cont [4/16] 0.0, 128
    %2369 = vxpose.xlu0.b32.cont [5/16] 0.0, 128
    %2370 = vxpose.xlu0.b32.cont [6/16] 0.0, 128
    %2371 = vxpose.xlu0.b32.cont [7/16] 0.0, 128
    %2372 = vxpose.xlu0.b32.cont [8/16] 0.0, 128
    %2373 = vxpose.xlu0.b32.cont [9/16] 0.0, 128
    %2374 = vxpose.xlu0.b32.cont [10/16] 0.0, 128
    %2375 = vxpose.xlu0.b32.cont [11/16] 0.0, 128
    %2376 = vxpose.xlu0.b32.cont [12/16] 0.0, 128
    %2377 = vxpose.xlu0.b32.cont [13/16] 0.0, 128
    %2378 = vxpose.xlu0.b32.cont [14/16] 0.0, 128
    %2379 = vxpose.xlu0.b32.cont [15/16] 0.0, 128
    %2380 = vxpose.xlu0.b32.end [16/16] 0.0, 128
    %v2381 = vpop.trf.xlu0
    %v2382 = vpop.trf.xlu0
    %v2383 = vpop.trf.xlu0
    %v2384 = vpop.trf.xlu0
    %v2385 = vpop.trf.xlu0
    %v2386 = vpop.trf.xlu0
    %v2387 = vpop.trf.xlu0
    %v2388 = vpop.trf.xlu0
    %v2389 = vpop.trf.xlu0
    %v2390 = vpop.trf.xlu0
    %v2391 = vpop.trf.xlu0
    %v2392 = vpop.trf.xlu0
    %v2393 = vpop.trf.xlu0
    %v2394 = vpop.trf.xlu0
    %v2395 = vpop.trf.xlu0
    %v2396 = vpop.trf.xlu0
    %2397 = vxpose.xlu0.b32.start [1/16] %v2096, 128
    %2398 = vxpose.xlu0.b32.cont [2/16] 0.0, 128
    %2399 = vxpose.xlu0.b32.cont [3/16] 0.0, 128
    %2400 = vxpose.xlu0.b32.cont [4/16] 0.0, 128
    %2401 = vxpose.xlu0.b32.cont [5/16] 0.0, 128
    %2402 = vxpose.xlu0.b32.cont [6/16] 0.0, 128
    %2403 = vxpose.xlu0.b32.cont [7/16] 0.0, 128
    %2404 = vxpose.xlu0.b32.cont [8/16] 0.0, 128
    %2405 = vxpose.xlu0.b32.cont [9/16] 0.0, 128
    %2406 = vxpose.xlu0.b32.cont [10/16] 0.0, 128
    %2407 = vxpose.xlu0.b32.cont [11/16] 0.0, 128
    %2408 = vxpose.xlu0.b32.cont [12/16] 0.0, 128
    %2409 = vxpose.xlu0.b32.cont [13/16] 0.0, 128
    %2410 = vxpose.xlu0.b32.cont [14/16] 0.0, 128
    %2411 = vxpose.xlu0.b32.cont [15/16] 0.0, 128
    %2412 = vxpose.xlu0.b32.end [16/16] 0.0, 128
    %v2413 = vpop.trf.xlu0
    %v2414 = vpop.trf.xlu0
    %v2415 = vpop.trf.xlu0
    %v2416 = vpop.trf.xlu0
    %v2417 = vpop.trf.xlu0
    %v2418 = vpop.trf.xlu0
    %v2419 = vpop.trf.xlu0
    %v2420 = vpop.trf.xlu0
    %v2421 = vpop.trf.xlu0
    %v2422 = vpop.trf.xlu0
    %v2423 = vpop.trf.xlu0
    %v2424 = vpop.trf.xlu0
    %v2425 = vpop.trf.xlu0
    %v2426 = vpop.trf.xlu0
    %v2427 = vpop.trf.xlu0
    %v2428 = vpop.trf.xlu0
    %2429 = vxpose.xlu0.b32.start [1/16] %v2098, 128
    %2430 = vxpose.xlu0.b32.cont [2/16] 0.0, 128
    %2431 = vxpose.xlu0.b32.cont [3/16] 0.0, 128
    %2432 = vxpose.xlu0.b32.cont [4/16] 0.0, 128
    %2433 = vxpose.xlu0.b32.cont [5/16] 0.0, 128
    %2434 = vxpose.xlu0.b32.cont [6/16] 0.0, 128
    %2435 = vxpose.xlu0.b32.cont [7/16] 0.0, 128
    %2436 = vxpose.xlu0.b32.cont [8/16] 0.0, 128
    %2437 = vxpose.xlu0.b32.cont [9/16] 0.0, 128
    %2438 = vxpose.xlu0.b32.cont [10/16] 0.0, 128
    %2439 = vxpose.xlu0.b32.cont [11/16] 0.0, 128
    %2440 = vxpose.xlu0.b32.cont [12/16] 0.0, 128
    %2441 = vxpose.xlu0.b32.cont [13/16] 0.0, 128
    %2442 = vxpose.xlu0.b32.cont [14/16] 0.0, 128
    %2443 = vxpose.xlu0.b32.cont [15/16] 0.0, 128
    %2444 = vxpose.xlu0.b32.end [16/16] 0.0, 128
    %v2445 = vpop.trf.xlu0
    %v2446 = vpop.trf.xlu0
    %v2447 = vpop.trf.xlu0
    %v2448 = vpop.trf.xlu0
    %v2449 = vpop.trf.xlu0
    %v2450 = vpop.trf.xlu0
    %v2451 = vpop.trf.xlu0
    %v2452 = vpop.trf.xlu0
    %v2453 = vpop.trf.xlu0
    %v2454 = vpop.trf.xlu0
    %v2455 = vpop.trf.xlu0
    %v2456 = vpop.trf.xlu0
    %v2457 = vpop.trf.xlu0
    %v2458 = vpop.trf.xlu0
    %v2459 = vpop.trf.xlu0
    %v2460 = vpop.trf.xlu0
    %2461 = vxpose.xlu0.b32.start [1/16] %v2100, 128
    %2462 = vxpose.xlu0.b32.cont [2/16] 0.0, 128
    %2463 = vxpose.xlu0.b32.cont [3/16] 0.0, 128
    %2464 = vxpose.xlu0.b32.cont [4/16] 0.0, 128
    %2465 = vxpose.xlu0.b32.cont [5/16] 0.0, 128
    %2466 = vxpose.xlu0.b32.cont [6/16] 0.0, 128
    %2467 = vxpose.xlu0.b32.cont [7/16] 0.0, 128
    %2468 = vxpose.xlu0.b32.cont [8/16] 0.0, 128
    %2469 = vxpose.xlu0.b32.cont [9/16] 0.0, 128
    %2470 = vxpose.xlu0.b32.cont [10/16] 0.0, 128
    %2471 = vxpose.xlu0.b32.cont [11/16] 0.0, 128
    %2472 = vxpose.xlu0.b32.cont [12/16] 0.0, 128
    %2473 = vxpose.xlu0.b32.cont [13/16] 0.0, 128
    %2474 = vxpose.xlu0.b32.cont [14/16] 0.0, 128
    %2475 = vxpose.xlu0.b32.cont [15/16] 0.0, 128
    %2476 = vxpose.xlu0.b32.end [16/16] 0.0, 128
    %v2477 = vpop.trf.xlu0
    %v2478 = vpop.trf.xlu0
    %v2479 = vpop.trf.xlu0
    %v2480 = vpop.trf.xlu0
    %v2481 = vpop.trf.xlu0
    %v2482 = vpop.trf.xlu0
    %v2483 = vpop.trf.xlu0
    %v2484 = vpop.trf.xlu0
    %v2485 = vpop.trf.xlu0
    %v2486 = vpop.trf.xlu0
    %v2487 = vpop.trf.xlu0
    %v2488 = vpop.trf.xlu0
    %v2489 = vpop.trf.xlu0
    %v2490 = vpop.trf.xlu0
    %v2491 = vpop.trf.xlu0
    %v2492 = vpop.trf.xlu0
    %2493 = vxpose.xlu0.b32.start [1/16] %v2102, 128
    %2494 = vxpose.xlu0.b32.cont [2/16] 0.0, 128
    %2495 = vxpose.xlu0.b32.cont [3/16] 0.0, 128
    %2496 = vxpose.xlu0.b32.cont [4/16] 0.0, 128
    %2497 = vxpose.xlu0.b32.cont [5/16] 0.0, 128
    %2498 = vxpose.xlu0.b32.cont [6/16] 0.0, 128
    %2499 = vxpose.xlu0.b32.cont [7/16] 0.0, 128
    %2500 = vxpose.xlu0.b32.cont [8/16] 0.0, 128
    %2501 = vxpose.xlu0.b32.cont [9/16] 0.0, 128
    %2502 = vxpose.xlu0.b32.cont [10/16] 0.0, 128
    %2503 = vxpose.xlu0.b32.cont [11/16] 0.0, 128
    %2504 = vxpose.xlu0.b32.cont [12/16] 0.0, 128
    %2505 = vxpose.xlu0.b32.cont [13/16] 0.0, 128
    %2506 = vxpose.xlu0.b32.cont [14/16] 0.0, 128
    %2507 = vxpose.xlu0.b32.cont [15/16] 0.0, 128
    %2508 = vxpose.xlu0.b32.end [16/16] 0.0, 128
    %v2509 = vpop.trf.xlu0
    %v2510 = vpop.trf.xlu0
    %v2511 = vpop.trf.xlu0
    %v2512 = vpop.trf.xlu0
    %v2513 = vpop.trf.xlu0
    %v2514 = vpop.trf.xlu0
    %v2515 = vpop.trf.xlu0
    %v2516 = vpop.trf.xlu0
    %v2517 = vpop.trf.xlu0
    %v2518 = vpop.trf.xlu0
    %v2519 = vpop.trf.xlu0
    %v2520 = vpop.trf.xlu0
    %v2521 = vpop.trf.xlu0
    %v2522 = vpop.trf.xlu0
    %v2523 = vpop.trf.xlu0
    %v2524 = vpop.trf.xlu0
    %2525 = vxpose.xlu0.b32.start [1/16] %v2104, 128
    %2526 = vxpose.xlu0.b32.cont [2/16] 0.0, 128
    %2527 = vxpose.xlu0.b32.cont [3/16] 0.0, 128
    %2528 = vxpose.xlu0.b32.cont [4/16] 0.0, 128
    %2529 = vxpose.xlu0.b32.cont [5/16] 0.0, 128
    %2530 = vxpose.xlu0.b32.cont [6/16] 0.0, 128
    %2531 = vxpose.xlu0.b32.cont [7/16] 0.0, 128
    %2532 = vxpose.xlu0.b32.cont [8/16] 0.0, 128
    %2533 = vxpose.xlu0.b32.cont [9/16] 0.0, 128
    %2534 = vxpose.xlu0.b32.cont [10/16] 0.0, 128
    %2535 = vxpose.xlu0.b32.cont [11/16] 0.0, 128
    %2536 = vxpose.xlu0.b32.cont [12/16] 0.0, 128
    %2537 = vxpose.xlu0.b32.cont [13/16] 0.0, 128
    %2538 = vxpose.xlu0.b32.cont [14/16] 0.0, 128
    %2539 = vxpose.xlu0.b32.cont [15/16] 0.0, 128
    %2540 = vxpose.xlu0.b32.end [16/16] 0.0, 128
    %v2541 = vpop.trf.xlu0
    %v2542 = vpop.trf.xlu0
    %v2543 = vpop.trf.xlu0
    %v2544 = vpop.trf.xlu0
    %v2545 = vpop.trf.xlu0
    %v2546 = vpop.trf.xlu0
    %v2547 = vpop.trf.xlu0
    %v2548 = vpop.trf.xlu0
    %v2549 = vpop.trf.xlu0
    %v2550 = vpop.trf.xlu0
    %v2551 = vpop.trf.xlu0
    %v2552 = vpop.trf.xlu0
    %v2553 = vpop.trf.xlu0
    %v2554 = vpop.trf.xlu0
    %v2555 = vpop.trf.xlu0
    %v2556 = vpop.trf.xlu0
    %2557 = vxpose.xlu0.b32.start [1/16] %v2106, 128
    %2558 = vxpose.xlu0.b32.cont [2/16] 0.0, 128
    %2559 = vxpose.xlu0.b32.cont [3/16] 0.0, 128
    %2560 = vxpose.xlu0.b32.cont [4/16] 0.0, 128
    %2561 = vxpose.xlu0.b32.cont [5/16] 0.0, 128
    %2562 = vxpose.xlu0.b32.cont [6/16] 0.0, 128
    %2563 = vxpose.xlu0.b32.cont [7/16] 0.0, 128
    %2564 = vxpose.xlu0.b32.cont [8/16] 0.0, 128
    %2565 = vxpose.xlu0.b32.cont [9/16] 0.0, 128
    %2566 = vxpose.xlu0.b32.cont [10/16] 0.0, 128
    %2567 = vxpose.xlu0.b32.cont [11/16] 0.0, 128
    %2568 = vxpose.xlu0.b32.cont [12/16] 0.0, 128
    %2569 = vxpose.xlu0.b32.cont [13/16] 0.0, 128
    %2570 = vxpose.xlu0.b32.cont [14/16] 0.0, 128
    %2571 = vxpose.xlu0.b32.cont [15/16] 0.0, 128
    %2572 = vxpose.xlu0.b32.end [16/16] 0.0, 128
    %v2573 = vpop.trf.xlu0
    %v2574 = vpop.trf.xlu0
    %v2575 = vpop.trf.xlu0
    %v2576 = vpop.trf.xlu0
    %v2577 = vpop.trf.xlu0
    %v2578 = vpop.trf.xlu0
    %v2579 = vpop.trf.xlu0
    %v2580 = vpop.trf.xlu0
    %v2581 = vpop.trf.xlu0
    %v2582 = vpop.trf.xlu0
    %v2583 = vpop.trf.xlu0
    %v2584 = vpop.trf.xlu0
    %v2585 = vpop.trf.xlu0
    %v2586 = vpop.trf.xlu0
    %v2587 = vpop.trf.xlu0
    %v2588 = vpop.trf.xlu0
    %2589 = vxpose.xlu0.b32.start [1/16] %v2108, 128
    %2590 = vxpose.xlu0.b32.cont [2/16] 0.0, 128
    %2591 = vxpose.xlu0.b32.cont [3/16] 0.0, 128
    %2592 = vxpose.xlu0.b32.cont [4/16] 0.0, 128
    %2593 = vxpose.xlu0.b32.cont [5/16] 0.0, 128
    %2594 = vxpose.xlu0.b32.cont [6/16] 0.0, 128
    %2595 = vxpose.xlu0.b32.cont [7/16] 0.0, 128
    %2596 = vxpose.xlu0.b32.cont [8/16] 0.0, 128
    %2597 = vxpose.xlu0.b32.cont [9/16] 0.0, 128
    %2598 = vxpose.xlu0.b32.cont [10/16] 0.0, 128
    %2599 = vxpose.xlu0.b32.cont [11/16] 0.0, 128
    %2600 = vxpose.xlu0.b32.cont [12/16] 0.0, 128
    %2601 = vxpose.xlu0.b32.cont [13/16] 0.0, 128
    %2602 = vxpose.xlu0.b32.cont [14/16] 0.0, 128
    %2603 = vxpose.xlu0.b32.cont [15/16] 0.0, 128
    %2604 = vxpose.xlu0.b32.end [16/16] 0.0, 128
    %v2605 = vpop.trf.xlu0
    %v2606 = vpop.trf.xlu0
    %v2607 = vpop.trf.xlu0
    %v2608 = vpop.trf.xlu0
    %v2609 = vpop.trf.xlu0
    %v2610 = vpop.trf.xlu0
    %v2611 = vpop.trf.xlu0
    %v2612 = vpop.trf.xlu0
    %v2613 = vpop.trf.xlu0
    %v2614 = vpop.trf.xlu0
    %v2615 = vpop.trf.xlu0
    %v2616 = vpop.trf.xlu0
    %v2617 = vpop.trf.xlu0
    %v2618 = vpop.trf.xlu0
    %v2619 = vpop.trf.xlu0
    %v2620 = vpop.trf.xlu0
    %v2621 = vrot.slane %v2189, 4
    %v2622 = vsel %vm123, %v2621, %v2125
    %v2624 = vunpack.c.l.s4 1983009808
    %v2625 = vunpack.c.0.s8 %v2624
    %v2626 = vperm.slane %v2622, %v2625
    %v2627 = vrot.slane %v2221, 4
    %v2628 = vsel %vm123, %v2627, %v2157
    %v2630 = vunpack.c.l.s4 1983009808
    %v2631 = vunpack.c.0.s8 %v2630
    %v2632 = vperm.slane %v2628, %v2631
    %v2633 = vrot.slane %v2317, 4
    %v2634 = vsel %vm123, %v2633, %v2253
    %v2636 = vunpack.c.l.s4 1983009808
    %v2637 = vunpack.c.0.s8 %v2636
    %v2638 = vperm.slane %v2634, %v2637
    %v2639 = vrot.slane %v2349, 4
    %v2640 = vsel %vm123, %v2639, %v2285
    %v2642 = vunpack.c.l.s4 1983009808
    %v2643 = vunpack.c.0.s8 %v2642
    %v2644 = vperm.slane %v2640, %v2643
    %v2645 = vrot.slane %v2632, 4
    %v2646 = vsel %vm123, %v2645, %v2626
    %v2648 = vunpack.c.l.s4 1934713408
    %v2649 = vunpack.c.0.s8 %v2648
    %v2650 = vperm.slane %v2646, %v2649
    %v2651 = vrot.slane %v2644, 4
    %v2652 = vsel %vm123, %v2651, %v2638
    %v2654 = vunpack.c.l.s4 1934713408
    %v2655 = vunpack.c.0.s8 %v2654
    %v2656 = vperm.slane %v2652, %v2655
    %v2657 = vrot.slane %v2656, 4
    %v2658 = vsel %vm123, %v2657, %v2650
    %v2659 = vrot.slane %v2650, 4
    %v2660 = vsel %vm123, %v2656, %v2659
    %v2661 = vrot.slane %v2445, 4
    %v2662 = vsel %vm123, %v2661, %v2381
    %v2664 = vunpack.c.l.s4 1983009808
    %v2665 = vunpack.c.0.s8 %v2664
    %v2666 = vperm.slane %v2662, %v2665
    %v2667 = vrot.slane %v2477, 4
    %v2668 = vsel %vm123, %v2667, %v2413
    %v2670 = vunpack.c.l.s4 1983009808
    %v2671 = vunpack.c.0.s8 %v2670
    %v2672 = vperm.slane %v2668, %v2671
    %v2673 = vrot.slane %v2573, 4
    %v2674 = vsel %vm123, %v2673, %v2509
    %v2676 = vunpack.c.l.s4 1983009808
    %v2677 = vunpack.c.0.s8 %v2676
    %v2678 = vperm.slane %v2674, %v2677
    %v2679 = vrot.slane %v2605, 4
    %v2680 = vsel %vm123, %v2679, %v2541
    %v2682 = vunpack.c.l.s4 1983009808
    %v2683 = vunpack.c.0.s8 %v2682
    %v2684 = vperm.slane %v2680, %v2683
    %v2685 = vrot.slane %v2672, 4
    %v2686 = vsel %vm123, %v2685, %v2666
    %v2688 = vunpack.c.l.s4 1934713408
    %v2689 = vunpack.c.0.s8 %v2688
    %v2690 = vperm.slane %v2686, %v2689
    %v2691 = vrot.slane %v2684, 4
    %v2692 = vsel %vm123, %v2691, %v2678
    %v2694 = vunpack.c.l.s4 1934713408
    %v2695 = vunpack.c.0.s8 %v2694
    %v2696 = vperm.slane %v2692, %v2695
    %v2697 = vrot.slane %v2696, 4
    %v2698 = vsel %vm123, %v2697, %v2690
    %v2699 = vrot.slane %v2690, 4
    %v2700 = vsel %vm123, %v2696, %v2699
    %v2701 = vld [vmem:[%s3] sm:$0xff]
    %v2702 = vld [vmem:[%s4] sm:$0x1]
    %v2704 = vperm.slane %v2702, 0
    %v2707 = vsel %vm1248, %v2658, 0
    %v2710 = vsel %vm1248, %v2698, 0
    %v2713 = vsel %vm1248, %v2660, 0
    %v2716 = vsel %vm1248, %v2700, 0
    %2718 = vmatpush.msra.mxu0 0.0
    %2719 = vmatpush.msra.mxu0 0.0
    %2720 = vmatpush.msra.mxu0 0.0
    %2721 = vmatpush.msra.mxu0 0.0
    %2722 = vmatpush.msra.mxu0 0.0
    %2723 = vmatpush.msra.mxu0 0.0
    %2724 = vmatpush.msra.mxu0 0.0
    %2725 = vmatpush.msra.mxu0 0.0
    %2726 = vmatpush.msra.mxu0 0.0
    %2727 = vmatpush.msra.mxu0 0.0
    %2728 = vmatpush.msra.mxu0 0.0
    %2729 = vmatpush.msra.mxu0 0.0
    %2730 = vmatpush.msra.mxu0 0.0
    %2731 = vmatpush.msra.mxu0 0.0
    %2732 = vmatpush.msra.mxu0 0.0
    %2733 = vmatpush.msra.mxu0 %v2701
    %2734 = vmatmul.f32.gmra.mxu0 %v2707
    %v2735 = vpop.f32.mrf.mxu0
    %v2736 = vadd.f32 %v2704, %v2735
    %2737 = vmatmul.f32.gmra.mxu0 %v2710
    %v2738 = vpop.f32.mrf.mxu0
    %v2739 = vadd.f32 %v2704, %v2738
    %2740 = vmatmul.f32.gmra.mxu0 %v2713
    %v2741 = vpop.f32.mrf.mxu0
    %v2742 = vadd.f32 %v2704, %v2741
    %2743 = vmatmul.f32.gmra.mxu0 %v2716
    %v2744 = vpop.f32.mrf.mxu0
    %v2745 = vadd.f32 %v2704, %v2744
    %2746 = vdwg.mxu0
    %v2748 = vsel %vm1248, %v2736, 0
    %v2751 = vsel %vm1248, %v2739, 0
    %2753 = vmatpush.msra.mxu0 0.0
    %2754 = vmatpush.msra.mxu0 0.0
    %2755 = vmatpush.msra.mxu0 0.0
    %2756 = vmatpush.msra.mxu0 0.0
    %2757 = vmatpush.msra.mxu0 0.0
    %2758 = vmatpush.msra.mxu0 0.0
    %2759 = vmatpush.msra.mxu0 0.0
    %2760 = vmatpush.msra.mxu0 0.0
    %2761 = vmatpush.msra.mxu0 0.0
    %2762 = vmatpush.msra.mxu0 0.0
    %2763 = vmatpush.msra.mxu0 0.0
    %2764 = vmatpush.msra.mxu0 0.0
    %2765 = vmatpush.msra.mxu0 0.0
    %2766 = vmatpush.msra.mxu0 0.0
    %2767 = vmatpush.msra.mxu0 0.0
    %2768 = vmatpush.msra.mxu0 %v160
    %2769 = vmatmul.f32.gmra.mxu0 %v2748
    %v2770 = vpop.f32.mrf.mxu0
    %v2771 = vadd.f32 0.0, %v2770
    %2772 = vmatmul.f32.gmra.mxu0 %v2751
    %v2773 = vpop.f32.mrf.mxu0
    %v2774 = vadd.f32 0.0, %v2773
    %2775 = vdwg.mxu0
    %v2777 = vsel %vm1248, %v2742, 0
    %v2780 = vsel %vm1248, %v2745, 0
    %2782 = vmatpush.msra.mxu0 0.0
    %2783 = vmatpush.msra.mxu0 0.0
    %2784 = vmatpush.msra.mxu0 0.0
    %2785 = vmatpush.msra.mxu0 0.0
    %2786 = vmatpush.msra.mxu0 0.0
    %2787 = vmatpush.msra.mxu0 0.0
    %2788 = vmatpush.msra.mxu0 0.0
    %2789 = vmatpush.msra.mxu0 0.0
    %2790 = vmatpush.msra.mxu0 0.0
    %2791 = vmatpush.msra.mxu0 0.0
    %2792 = vmatpush.msra.mxu0 0.0
    %2793 = vmatpush.msra.mxu0 0.0
    %2794 = vmatpush.msra.mxu0 0.0
    %2795 = vmatpush.msra.mxu0 0.0
    %2796 = vmatpush.msra.mxu0 0.0
    %2797 = vmatpush.msra.mxu0 %v162
    %2798 = vmatmul.f32.gmra.mxu0 %v2777
    %v2799 = vpop.f32.mrf.mxu0
    %v2800 = vadd.f32 0.0, %v2799
    %2801 = vmatmul.f32.gmra.mxu0 %v2780
    %v2802 = vpop.f32.mrf.mxu0
    %v2803 = vadd.f32 0.0, %v2802
    %2804 = vdwg.mxu0
    %v2805 = vtanh.pop %v2771
    %v2806 = vtanh.pop %v2774
    %v2807 = vtanh.pop %v2800
    %v2808 = vtanh.pop %v2803
    %v2809 = vld [vmem:[#allocation5] sm:$0xff]
    %v2810 = vld [vmem:[%s8] sm:$0xff]
    %v2811 = vld [vmem:[%s8 + $0x8] sm:$0xff]
    %v2813 = vsel %vm1355, %v2805, 0
    %v2816 = vsel %vm1355, %v2806, 0
    %v2819 = vsel %vm1355, %v2807, 0
    %v2822 = vsel %vm1355, %v2808, 0
    %2824 = vmatpush.msra.mxu0 0.0
    %2825 = vmatpush.msra.mxu0 0.0
    %2826 = vmatpush.msra.mxu0 0.0
    %2827 = vmatpush.msra.mxu0 0.0
    %2828 = vmatpush.msra.mxu0 0.0
    %2829 = vmatpush.msra.mxu0 0.0
    %2830 = vmatpush.msra.mxu0 0.0
    %2831 = vmatpush.msra.mxu0 0.0
    %2832 = vmatpush.msra.mxu0 0.0
    %2833 = vmatpush.msra.mxu0 0.0
    %2834 = vmatpush.msra.mxu0 0.0
    %2835 = vmatpush.msra.mxu0 0.0
    %2836 = vmatpush.msra.mxu0 0.0
    %2837 = vmatpush.msra.mxu0 0.0
    %2838 = vmatpush.msra.mxu0 %v2811
    %2839 = vmatpush.msra.mxu0 %v2810
    %2840 = vmatmul.f32.gmra.mxu0 %v2813
    %v2841 = vpop.f32.mrf.mxu0
    %v2842 = vadd.f32 0.0, %v2841
    %2843 = vmatmul.f32.gmra.mxu0 %v2816
    %v2844 = vpop.f32.mrf.mxu0
    %v2845 = vadd.f32 0.0, %v2844
    %2846 = vmatmul.f32.gmra.mxu0 %v2819
    %v2847 = vpop.f32.mrf.mxu0
    %v2848 = vadd.f32 0.0, %v2847
    %2849 = vmatmul.f32.gmra.mxu0 %v2822
    %v2850 = vpop.f32.mrf.mxu0
    %v2851 = vadd.f32 0.0, %v2850
    %2852 = vdwg.mxu0
    %2853 = vmatpush.msra.mxu0 0.0
    %2854 = vmatpush.msra.mxu0 0.0
    %2855 = vmatpush.msra.mxu0 0.0
    %2856 = vmatpush.msra.mxu0 0.0
    %2857 = vmatpush.msra.mxu0 0.0
    %2858 = vmatpush.msra.mxu0 0.0
    %2859 = vmatpush.msra.mxu0 0.0
    %2860 = vmatpush.msra.mxu0 0.0
    %2861 = vmatpush.msra.mxu0 0.0
    %2862 = vmatpush.msra.mxu0 0.0
    %2863 = vmatpush.msra.mxu0 0.0
    %2864 = vmatpush.msra.mxu0 0.0
    %2865 = vmatpush.msra.mxu0 0.0
    %2866 = vmatpush.msra.mxu0 0.0
    %2867 = vmatpush.msra.mxu0 0.0
    %2868 = vmatpush.msra.mxu0 %v2809
    %2869 = vmatmul.f32.gmra.mxu0 %v2707
    %v2870 = vpop.f32.mrf.mxu0
    %v2871 = vadd.f32 %v2842, %v2870
    %2872 = vmatmul.f32.gmra.mxu0 %v2710
    %v2873 = vpop.f32.mrf.mxu0
    %v2874 = vadd.f32 %v2845, %v2873
    %2875 = vmatmul.f32.gmra.mxu0 %v2713
    %v2876 = vpop.f32.mrf.mxu0
    %v2877 = vadd.f32 %v2848, %v2876
    %2878 = vmatmul.f32.gmra.mxu0 %v2716
    %v2879 = vpop.f32.mrf.mxu0
    %v2880 = vadd.f32 %v2851, %v2879
    %2881 = vdwg.mxu0
    %v2882 = vld [vmem:[%s9] sm:$0x1]
    %v2884 = vperm.slane %v2882, 0
    %v2886 = vadd.f32 %v2871, %v2884
    %v2887 = vadd.f32 %v2874, %v2884
    %v2888 = vadd.f32 %v2877, %v2884
    %v2889 = vadd.f32 %v2880, %v2884
    %v2890 = vmax.f32 %v2886, 0.0
    %v2891 = vmax.f32 %v2887, 0.0
    %v2892 = vmax.f32 %v2888, 0.0
    %v2893 = vmax.f32 %v2889, 0.0
    %v2894 = vld [vmem:[%s13] sm:$0xff]
    %v2895 = vld [vmem:[%s13 + $0x8] sm:$0xff]
    %v2896 = vld [vmem:[%s13 + $0x10] sm:$0xff]
    %v2897 = vld [vmem:[%s13 + $0x18] sm:$0xff]
    %v2899 = vsel %vm1442, %v2890, 0
    %v2902 = vsel %vm1442, %v2891, 0
    %v2905 = vsel %vm1442, %v2892, 0
    %v2908 = vsel %vm1442, %v2893, 0
    %2910 = vmatpush.msra.mxu0 0.0
    %2911 = vmatpush.msra.mxu0 0.0
    %2912 = vmatpush.msra.mxu0 0.0
    %2913 = vmatpush.msra.mxu0 0.0
    %2914 = vmatpush.msra.mxu0 0.0
    %2915 = vmatpush.msra.mxu0 0.0
    %2916 = vmatpush.msra.mxu0 0.0
    %2917 = vmatpush.msra.mxu0 0.0
    %2918 = vmatpush.msra.mxu0 0.0
    %2919 = vmatpush.msra.mxu0 0.0
    %2920 = vmatpush.msra.mxu0 0.0
    %2921 = vmatpush.msra.mxu0 0.0
    %2922 = vmatpush.msra.mxu0 %v2897
    %2923 = vmatpush.msra.mxu0 %v2896
    %2924 = vmatpush.msra.mxu0 %v2895
    %2925 = vmatpush.msra.mxu0 %v2894
    %2926 = vmatmul.f32.gmra.mxu0 %v2899
    %v2927 = vpop.f32.mrf.mxu0
    %v2928 = vadd.f32 0.0, %v2927
    %2929 = vmatmul.f32.gmra.mxu0 %v2902
    %v2930 = vpop.f32.mrf.mxu0
    %v2931 = vadd.f32 0.0, %v2930
    %2932 = vmatmul.f32.gmra.mxu0 %v2905
    %v2933 = vpop.f32.mrf.mxu0
    %v2934 = vadd.f32 0.0, %v2933
    %2935 = vmatmul.f32.gmra.mxu0 %v2908
    %v2936 = vpop.f32.mrf.mxu0
    %v2937 = vadd.f32 0.0, %v2936
    %2938 = vdwg.mxu0
    %v2939 = vadd.f32 %v2658, %v2928
    %v2940 = vadd.f32 %v2698, %v2931
    %v2941 = vadd.f32 %v2660, %v2934
    %v2942 = vadd.f32 %v2700, %v2937
    %v2943 = vld [vmem:[%s14] sm:$0x1]
    %v2945 = vperm.slane %v2943, 0
    %v2947 = vadd.f32 %v2939, %v2945
    %v2948 = vadd.f32 %v2940, %v2945
    %v2949 = vadd.f32 %v2941, %v2945
    %v2950 = vadd.f32 %v2942, %v2945
    %2951 = vxpose.xlu0.b32.start [1/16] %v2947, 128
    %2952 = vxpose.xlu0.b32.cont [2/16] %v2948, 128
    %2953 = vxpose.xlu0.b32.cont [3/16] 0.0, 128
    %2954 = vxpose.xlu0.b32.cont [4/16] 0.0, 128
    %2955 = vxpose.xlu0.b32.cont [5/16] 0.0, 128
    %2956 = vxpose.xlu0.b32.cont [6/16] 0.0, 128
    %2957 = vxpose.xlu0.b32.cont [7/16] 0.0, 128
    %2958 = vxpose.xlu0.b32.cont [8/16] 0.0, 128
    %2959 = vxpose.xlu0.b32.cont [9/16] 0.0, 128
    %2960 = vxpose.xlu0.b32.cont [10/16] 0.0, 128
    %2961 = vxpose.xlu0.b32.cont [11/16] 0.0, 128
    %2962 = vxpose.xlu0.b32.cont [12/16] 0.0, 128
    %2963 = vxpose.xlu0.b32.cont [13/16] 0.0, 128
    %2964 = vxpose.xlu0.b32.cont [14/16] 0.0, 128
    %2965 = vxpose.xlu0.b32.cont [15/16] 0.0, 128
    %2966 = vxpose.xlu0.b32.end [16/16] 0.0, 128
    %v2967 = vpop.trf.xlu0
    %v2968 = vpop.trf.xlu0
    %v2969 = vpop.trf.xlu0
    %v2970 = vpop.trf.xlu0
    %v2971 = vpop.trf.xlu0
    %v2972 = vpop.trf.xlu0
    %v2973 = vpop.trf.xlu0
    %v2974 = vpop.trf.xlu0
    %v2975 = vpop.trf.xlu0
    %v2976 = vpop.trf.xlu0
    %v2977 = vpop.trf.xlu0
    %v2978 = vpop.trf.xlu0
    %v2979 = vpop.trf.xlu0
    %v2980 = vpop.trf.xlu0
    %v2981 = vpop.trf.xlu0
    %v2982 = vpop.trf.xlu0
    %2983 = vxpose.xlu0.b32.start [1/16] %v2949, 128
    %2984 = vxpose.xlu0.b32.cont [2/16] %v2950, 128
    %2985 = vxpose.xlu0.b32.cont [3/16] 0.0, 128
    %2986 = vxpose.xlu0.b32.cont [4/16] 0.0, 128
    %2987 = vxpose.xlu0.b32.cont [5/16] 0.0, 128
    %2988 = vxpose.xlu0.b32.cont [6/16] 0.0, 128
    %2989 = vxpose.xlu0.b32.cont [7/16] 0.0, 128
    %2990 = vxpose.xlu0.b32.cont [8/16] 0.0, 128
    %2991 = vxpose.xlu0.b32.cont [9/16] 0.0, 128
    %2992 = vxpose.xlu0.b32.cont [10/16] 0.0, 128
    %2993 = vxpose.xlu0.b32.cont [11/16] 0.0, 128
    %2994 = vxpose.xlu0.b32.cont [12/16] 0.0, 128
    %2995 = vxpose.xlu0.b32.cont [13/16] 0.0, 128
    %2996 = vxpose.xlu0.b32.cont [14/16] 0.0, 128
    %2997 = vxpose.xlu0.b32.cont [15/16] 0.0, 128
    %2998 = vxpose.xlu0.b32.end [16/16] 0.0, 128
    %v2999 = vpop.trf.xlu0
    %v3000 = vpop.trf.xlu0
    %v3001 = vpop.trf.xlu0
    %v3002 = vpop.trf.xlu0
    %v3003 = vpop.trf.xlu0
    %v3004 = vpop.trf.xlu0
    %v3005 = vpop.trf.xlu0
    %v3006 = vpop.trf.xlu0
    %v3007 = vpop.trf.xlu0
    %v3008 = vpop.trf.xlu0
    %v3009 = vpop.trf.xlu0
    %v3010 = vpop.trf.xlu0
    %v3011 = vpop.trf.xlu0
    %v3012 = vpop.trf.xlu0
    %v3013 = vpop.trf.xlu0
    %v3014 = vpop.trf.xlu0
    %v3015 = vrot.slane %v2967, 4
    %v3016 = vsel %vm123, 0.0, %v3015
    %v3018 = vunpack.c.l.s4 1983009808
    %v3019 = vunpack.c.0.s8 %v3018
    %v3020 = vperm.slane %v2967, %v3019
    %v3022 = vunpack.c.l.s4 1983009808
    %v3023 = vunpack.c.0.s8 %v3022
    %v3024 = vperm.slane %v3016, %v3023
    %v3025 = vrot.slane %v2999, 4
    %v3026 = vsel %vm123, 0.0, %v3025
    %v3028 = vunpack.c.l.s4 1983009808
    %v3029 = vunpack.c.0.s8 %v3028
    %v3030 = vperm.slane %v2999, %v3029
    %v3032 = vunpack.c.l.s4 1983009808
    %v3033 = vunpack.c.0.s8 %v3032
    %v3034 = vperm.slane %v3026, %v3033
    %v3035 = vrot.slane %v3030, 4
    %v3036 = vsel %vm123, %v3035, %v3020
    %v3037 = vrot.slane %v3020, 4
    %v3038 = vsel %vm123, %v3030, %v3037
    %v3040 = vunpack.c.l.s4 1934713408
    %v3041 = vunpack.c.0.s8 %v3040
    %v3042 = vperm.slane %v3036, %v3041
    %v3044 = vunpack.c.l.s4 1934713408
    %v3045 = vunpack.c.0.s8 %v3044
    %v3046 = vperm.slane %v3038, %v3045
    %v3047 = vrot.slane %v3034, 4
    %v3048 = vsel %vm123, %v3047, %v3024
    %v3049 = vrot.slane %v3024, 4
    %v3050 = vsel %vm123, %v3034, %v3049
    %v3052 = vunpack.c.l.s4 1934713408
    %v3053 = vunpack.c.0.s8 %v3052
    %v3054 = vperm.slane %v3048, %v3053
    %v3056 = vunpack.c.l.s4 1934713408
    %v3057 = vunpack.c.0.s8 %v3056
    %v3058 = vperm.slane %v3050, %v3057
    %v3059 = vrot.slane %v3042, 4
    %v3060 = vsel %vm123, 0.0, %v3059
    %v3061 = vrot.slane %v3046, 4
    %v3062 = vsel %vm123, 0.0, %v3061
    %v3063 = vrot.slane %v3054, 4
    %v3064 = vsel %vm123, 0.0, %v3063
    %v3065 = vrot.slane %v3058, 4
    %v3066 = vsel %vm123, 0.0, %v3065
    %3075 = vrot.lane.b32.xlu0 %v3042, 16
    %v3076 = vpop.permute.xlu0 %3075
    %3077 = vrot.lane.b32.xlu0 %v3060, 16
    %v3078 = vpop.permute.xlu0 %3077
    %3079 = vrot.lane.b32.xlu0 %v3046, 16
    %v3080 = vpop.permute.xlu0 %3079
    %3081 = vrot.lane.b32.xlu0 %v3062, 16
    %v3082 = vpop.permute.xlu0 %3081
    %3083 = vrot.lane.b32.xlu0 %v3054, 16
    %v3084 = vpop.permute.xlu0 %3083
    %3085 = vrot.lane.b32.xlu0 %v3064, 16
    %v3086 = vpop.permute.xlu0 %3085
    %3087 = vrot.lane.b32.xlu0 %v3058, 16
    %v3088 = vpop.permute.xlu0 %3087
    %3089 = vrot.lane.b32.xlu0 %v3066, 16
    %v3090 = vpop.permute.xlu0 %3089
    %vm3099 = vcmask 255104
    %3100 = vst.msk [vmem:[#allocation10] sm:$0x3] %vm3099, %v3076
    %3101 = vst.msk [vmem:[#allocation10 + $0x2] sm:$0x3] %vm3099, %v3078
    %3102 = vst.msk [vmem:[#allocation10 + $0x4] sm:$0x3] %vm3099, %v3080
    %3103 = vst.msk [vmem:[#allocation10 + $0x6] sm:$0x3] %vm3099, %v3082
    %3104 = vst.msk [vmem:[#allocation10 + $0x8] sm:$0x3] %vm3099, %v3084
    %3105 = vst.msk [vmem:[#allocation10 + $0xa] sm:$0x3] %vm3099, %v3086
    %3106 = vst.msk [vmem:[#allocation10 + $0xc] sm:$0x3] %vm3099, %v3088
    %3107 = vst.msk [vmem:[#allocation10 + $0xe] sm:$0x3] %vm3099, %v3090
    // Predicated region
    $region86: #{tpu_custom_call.1} parent=1 // pred_check
      _
    $region87: #{tpu_custom_call.1} parent=1 // pred_check_branch
      %3109 = sbr.rel (0) target = $region89
    $region88: #{tpu_custom_call.1} parent=1 // pred_region
      %3111 = vsyncadd [#allocation4], 0
      %s3112 = sshll.u32 [#allocation10], 4
      %s3113 = int_to_ptr.vmem [resolvable:$true] %s3112
      %s3114 = sshll.u32 %s17, 4
      %s3115 = int_to_ptr.hbm [resolvable:$true] %s3114
      %3120 = dma.vmem_to_hbm [thread:$0]  %s3113, 256, %s3115, [#allocation4], 32, 32, 2
    $region89: #{tpu_custom_call.1} parent=1 // pred_fallthru
      _
    // Predicated region
    $region90: #{tpu_custom_call.1} parent=1 // pred_check
      _
    $region91: #{tpu_custom_call.1} parent=1 // pred_check_branch
      %3122 = sbr.rel (0) target = $region93
    $region92: #{tpu_custom_call.1} parent=1 // pred_region
      %3124 = dma.done [#allocation4], 256
    $region93: #{tpu_custom_call.1} parent=1 // pred_fallthru
      _
    %3125 = vsyncpa [#allocation3], 1
    %3126 = vsyncpa [#allocation6], 1
    %3127 = vsyncpa [#allocation9], 1
    %3128 = vsyncpa [#allocation4], 1

</llo_original>
